<compile_context>
chip_gen: v7x
topology: tpu7x:2x2x1
jax: 0.10.0
libtpu: 0.0.40
codegen_flags: <defaults>
</compile_context>

<pallas_src>
import functools

import jax
import jax.numpy as jnp
from jax.experimental import pallas as pl
from jax.experimental.pallas import tpu as pltpu


def _sernn_chunk_kernel(x_ref, h0_ref, win_ref, b_ref, whh_ref, out_ref, h_scr):
    """One grid step == CT RNN timesteps for one batch group.

    x_ref:   (CT, BT, I)  input chunk (pipelined)
    h0_ref:  (BT, H)      initial hidden state for this batch group
    win_ref: (I, H)       pre-transposed input weights (VMEM-resident)
    b_ref:   (1, H)       folded bias b_in + bias (f32, VMEM-resident)
    whh_ref: (H, H)       pre-transposed recurrent weights (VMEM-resident)
    out_ref: (CT, BT, H)  hidden states for this chunk (pipelined)
    h_scr:   (BT, H) f32  hidden-state carry across chunks
    """
    # First chunk of a batch group: (re)load the initial hidden state.
    @pl.when(pl.program_id(1) == 0)
    def _():
        h_scr[...] = h0_ref[...].astype(jnp.float32)

    ct = x_ref.shape[0]
    win = win_ref[...]          # resident operands: load once per chunk
    whh = whh_ref[...]
    b = b_ref[...]              # (1, H) f32, broadcasts over the BT rows

    def step(t, h):
        xt = x_ref[t].astype(win.dtype)                            # (BT, I)
        # Both matmuls on the MXU with f32 accumulation; bias-add + tanh in f32.
        pre = (jnp.dot(xt, win, preferred_element_type=jnp.float32)
               + jnp.dot(h.astype(whh.dtype), whh,
                         preferred_element_type=jnp.float32)
               + b)
        h_new = jnp.tanh(pre)
        out_ref[t] = h_new.astype(out_ref.dtype)
        return h_new

    h_scr[...] = jax.lax.fori_loop(0, ct, step, h_scr[...], unroll=True)


def prepare_params(W_in, b_in, W_hh, bias, mxu_dtype=jnp.float32):
    """One-time parameter prep: transpose weights, fold the two biases."""
    W_in_t = jnp.asarray(W_in).T.astype(mxu_dtype)                    # (I, H)
    W_hh_t = jnp.asarray(W_hh).T.astype(mxu_dtype)                    # (H, H)
    b_fold = (jnp.asarray(b_in, jnp.float32)
              + jnp.asarray(bias, jnp.float32)).reshape(1, -1)        # (1, H) f32
    return W_in_t, b_fold, W_hh_t


@functools.partial(jax.jit, static_argnames=("ct", "bt", "single_buffer"))
def _sernn_seq_impl(x_seq, h0, W_in_t, b_fold, W_hh_t, *, ct, bt, single_buffer):
    T, B, I = x_seq.shape
    H = W_hh_t.shape[1]
    bt = B if bt is None else bt
    assert B % bt == 0, "bt must divide B"
    nb = B // bt

    ct = max(1, min(ct, T))
    n_chunks = pl.cdiv(T, ct)
    tp = n_chunks * ct
    if tp != T:
        # Zero-pad the tail chunk; the padded outputs are sliced off below.
        x_seq = jnp.pad(x_seq, ((0, tp - T), (0, 0), (0, 0)))

    def resident(shape):
        # Grid-invariant operand: block index is constant, so single-buffer it.
        idx = lambda bg, c, _n=len(shape): (0,) * _n
        if single_buffer:
            return pl.BlockSpec(shape, idx, pipeline_mode=pl.Buffered(1))
        return pl.BlockSpec(shape, idx)

    grid_spec = pltpu.PrefetchScalarGridSpec(
        num_scalar_prefetch=0,
        grid=(nb, n_chunks),
        in_specs=[
            pl.BlockSpec((ct, bt, I), lambda bg, c: (c, bg, 0)),   # x chunk
            pl.BlockSpec((bt, H), lambda bg, c: (bg, 0)),          # h0 slice
            resident((I, H)),                                      # W_in_t
            resident((1, H)),                                      # b_fold
            resident((H, H)),                                      # W_hh_t
        ],
        out_specs=pl.BlockSpec((ct, bt, H), lambda bg, c: (c, bg, 0)),
        scratch_shapes=[pltpu.VMEM((bt, H), jnp.float32)],          # hidden carry
    )

    h_all = pl.pallas_call(
        _sernn_chunk_kernel,
        out_shape=jax.ShapeDtypeStruct((tp, B, H), jnp.float32),
        grid_spec=grid_spec,
        compiler_params=pltpu.CompilerParams(
            # Batch groups are independent (lets v7x's 2nd TC help when nb > 1);
            # the time/chunk axis is inherently serial.
            dimension_semantics=("parallel", "arbitrary")),
    )(x_seq, h0.astype(jnp.float32), W_in_t, b_fold, W_hh_t)

    return h_all[:T]


# pipeline_mode=pl.Buffered(1) on the resident weights is a newer Pallas
# feature; if this JAX rejects it we fall back to default double buffering
# (same semantics, just 2x resident-weight VMEM).
_SINGLE_BUFFER_RESIDENTS = True


def sernn_sequence_forward(x_seq, h0, W_in_t, b_fold, W_hh_t, *, ct=8, bt=None):
    """Run T fused seRNNCell steps.

    Args:
      x_seq:  (T, B, I) inputs.
      h0:     (B, H) initial hidden state.
      W_in_t: (I, H) pre-transposed input weights.
      b_fold: (1, H) b_in + bias (f32).
      W_hh_t: (H, H) pre-transposed recurrent weights.
      ct:     timesteps per grid step (chunk); T is padded up to a multiple.
      bt:     batch rows per grid step (must divide B; default: all of B).
    Returns:
      h_all: (T, B, H) f32, h_all[t] = hidden state after step t.
    """
    global _SINGLE_BUFFER_RESIDENTS
    if _SINGLE_BUFFER_RESIDENTS:
        try:
            return _sernn_seq_impl(x_seq, h0, W_in_t, b_fold, W_hh_t,
                                   ct=ct, bt=bt, single_buffer=True)
        except Exception:
            _SINGLE_BUFFER_RESIDENTS = False
    return _sernn_seq_impl(x_seq, h0, W_in_t, b_fold, W_hh_t,
                           ct=ct, bt=bt, single_buffer=False)


def sernn_cell_forward(x, h_prev, W_in_t, b_fold, W_hh_t):
    """Single-step forward, same semantics as the PyTorch seRNNCell.forward."""
    return sernn_sequence_forward(x[None], h_prev, W_in_t, b_fold, W_hh_t, ct=1)[0]


def _init_params(key, input_size, hidden_size):
    """Deterministic init mimicking nn.Linear uniform(-1/sqrt(fan_in), ...)."""
    k1, k2, k3 = jax.random.split(key, 3)
    lim_in = 1.0 / jnp.sqrt(jnp.float32(input_size))
    lim_hh = 1.0 / jnp.sqrt(jnp.float32(hidden_size))
    W_in = jax.random.uniform(k1, (hidden_size, input_size), jnp.float32, -lim_in, lim_in)
    b_in = jax.random.uniform(k2, (hidden_size,), jnp.float32, -lim_in, lim_in)
    W_hh = jax.random.uniform(k3, (hidden_size, hidden_size), jnp.float32, -lim_hh, lim_hh)
    bias = jnp.zeros((hidden_size,), jnp.float32)   # nn.Parameter(torch.zeros(hidden_size))
    return W_in, b_in, W_hh, bias


def _ref_sequence(x_seq, h0, W_in, b_in, W_hh, bias):
    """Pure-JAX reference: apply the PyTorch cell formula T times."""
    h = h0
    outs = []
    for t in range(x_seq.shape[0]):
        h = jnp.tanh(x_seq[t] @ W_in.T + b_in + h @ W_hh.T + bias)
        outs.append(h)
    return jnp.stack(outs)


if __name__ == "__main__":
    key = jax.random.PRNGKey(0)
    T, B, input_size, hidden_size = 8, 8, 32, 128

    kx, kh, kp = jax.random.split(key, 3)
    x_seq = jax.random.normal(kx, (T, B, input_size), jnp.float32)
    h0 = jax.random.normal(kh, (B, hidden_size), jnp.float32)
    W_in, b_in, W_hh, bias = _init_params(kp, input_size, hidden_size)

    ref = _ref_sequence(x_seq, h0, W_in, b_in, W_hh, bias)

    # --- f32 path, whole sequence in one chunk: exact-semantics check ---
    W_in_t, b_fold, W_hh_t = prepare_params(W_in, b_in, W_hh, bias, jnp.float32)
    h_all = jax.block_until_ready(
        sernn_sequence_forward(x_seq, h0, W_in_t, b_fold, W_hh_t, ct=8))
    assert h_all.shape == (T, B, hidden_size)
    assert jnp.allclose(h_all, ref, atol=1e-4, rtol=1e-4), "f32 mismatch vs reference"

    # --- ragged chunking (CT does not divide T -> zero-padded tail chunk) ---
    h_rag = jax.block_until_ready(
        sernn_sequence_forward(x_seq, h0, W_in_t, b_fold, W_hh_t, ct=5))
    assert jnp.allclose(h_rag, ref, atol=1e-4, rtol=1e-4), "ragged-chunk mismatch"

    # --- single-step cell API (== seRNNCell.forward) ---
    h1 = jax.block_until_ready(
        sernn_cell_forward(x_seq[0], h0, W_in_t, b_fold, W_hh_t))
    assert jnp.allclose(h1, ref[0], atol=1e-4, rtol=1e-4), "cell-step mismatch"

    # --- bf16 MXU-operand path (f32 accumulate + f32 epilogue), for v6e/v7x ---
    W_in_b, b_fold_b, W_hh_b = prepare_params(W_in, b_in, W_hh, bias, jnp.bfloat16)
    h_bf16 = jax.block_until_ready(
        sernn_sequence_forward(x_seq, h0, W_in_b, b_fold_b, W_hh_b, ct=8))
    assert jnp.allclose(h_bf16, ref, atol=1e-1), "bf16 path diverged from reference"

    print("KERNEL_OK")
</pallas_src>

<mosaic_0001>
module attributes {stable_mosaic.version = 11 : i64} {
  func.func @_sernn_chunk_kernel(%arg0: i32, %arg1: i32, %arg2: memref<8x8x32xf32, #tpu.memory_space<vmem>>, %arg3: memref<8x128xf32, #tpu.memory_space<vmem>>, %arg4: memref<32x128xf32, #tpu.memory_space<vmem>>, %arg5: memref<1x128xf32, #tpu.memory_space<vmem>>, %arg6: memref<128x128xf32, #tpu.memory_space<vmem>>, %arg7: memref<8x8x128xf32, #tpu.memory_space<vmem>>, %arg8: memref<8x128xf32, #tpu.memory_space<vmem>>) attributes {dimension_semantics = [#tpu.dimension_semantics<parallel>, #tpu.dimension_semantics<arbitrary>], iteration_bounds = array<i64: 1, 1>, scalar_prefetch = 0 : i64, scratch_operands = 1 : i64, tpu.core_type = #tpu.core_type<tc>, window_params = [{transform_indices = @transform_0, window_bounds = array<i64: 8, 8, 32>}, {transform_indices = @transform_1, window_bounds = array<i64: 8, 128>}, {pipeline_mode = #tpu.pipeline_mode<synchronous>, transform_indices = @transform_2, window_bounds = array<i64: 32, 128>}, {pipeline_mode = #tpu.pipeline_mode<synchronous>, transform_indices = @transform_3, window_bounds = array<i64: 1, 128>}, {pipeline_mode = #tpu.pipeline_mode<synchronous>, transform_indices = @transform_4, window_bounds = array<i64: 128, 128>}, {transform_indices = @transform_5, window_bounds = array<i64: 8, 8, 128>}]} {
    %c0_i32 = arith.constant 0 : i32
    %0 = arith.cmpi eq, %arg1, %c0_i32 : i32
    %1 = arith.extui %0 : i1 to i32
    %c0_i32_0 = arith.constant 0 : i32
    %2 = arith.cmpi ne, %1, %c0_i32_0 : i32
    scf.if %2 {
      %c0_58 = arith.constant 0 : index
      %c0_59 = arith.constant 0 : index
      %112 = vector.load %arg3[%c0_58, %c0_59] : memref<8x128xf32, #tpu.memory_space<vmem>>, vector<8x128xf32>
      %c0_60 = arith.constant 0 : index
      %c0_61 = arith.constant 0 : index
      %113 = vector.load %arg8[%c0_60, %c0_61] : memref<8x128xf32, #tpu.memory_space<vmem>>, vector<8x128xf32>
      tpu.vector_store %arg8[%c0_60, %c0_61], %112 {strides = array<i32>} : memref<8x128xf32, #tpu.memory_space<vmem>>, vector<8x128xf32>,
    } else {
    }
    %c0 = arith.constant 0 : index
    %c0_1 = arith.constant 0 : index
    %3 = vector.load %arg4[%c0, %c0_1] : memref<32x128xf32, #tpu.memory_space<vmem>>, vector<32x128xf32>
    %c0_2 = arith.constant 0 : index
    %c0_3 = arith.constant 0 : index
    %4 = vector.load %arg6[%c0_2, %c0_3] : memref<128x128xf32, #tpu.memory_space<vmem>>, vector<128x128xf32>
    %c0_4 = arith.constant 0 : index
    %c0_5 = arith.constant 0 : index
    %5 = vector.load %arg5[%c0_4, %c0_5] : memref<1x128xf32, #tpu.memory_space<vmem>>, vector<1x128xf32>
    %c0_6 = arith.constant 0 : index
    %c0_7 = arith.constant 0 : index
    %6 = vector.load %arg8[%c0_6, %c0_7] : memref<8x128xf32, #tpu.memory_space<vmem>>, vector<8x128xf32>
    %c0_i32_8 = arith.constant 0 : i32
    %7 = arith.index_cast %c0_i32_8 : i32 to index
    %c0_9 = arith.constant 0 : index
    %c0_10 = arith.constant 0 : index
    %8 = vector.load %arg2[%7, %c0_9, %c0_10] : memref<8x8x32xf32, #tpu.memory_space<vmem>>, vector<1x8x32xf32>
    %9 = vector.shape_cast %8 : vector<1x8x32xf32> to vector<8x32xf32>
    %cst = arith.constant dense<0.000000e+00> : vector<8x128xf32>
    %10 = tpu.matmul %9, %3, %cst {dimension_numbers = #tpu.dot_dimension_numbers<[1], [0], [0], [1], [0, 0, 1, 1], [], []>} : vector<8x32xf32>, vector<32x128xf32>, vector<8x128xf32> -> vector<8x128xf32>
    %cst_11 = arith.constant dense<0.000000e+00> : vector<8x128xf32>
    %11 = tpu.matmul %6, %4, %cst_11 {dimension_numbers = #tpu.dot_dimension_numbers<[1], [0], [0], [1], [0, 0, 1, 1], [], []>} : vector<8x128xf32>, vector<128x128xf32>, vector<8x128xf32> -> vector<8x128xf32>
    %12 = arith.addf %10, %11 : vector<8x128xf32>
    %13 = vector.broadcast %5 : vector<1x128xf32> to vector<8x128xf32>
    %14 = arith.addf %12, %13 : vector<8x128xf32>
    %15 = math.tanh %14 : vector<8x128xf32>
    %16 = arith.index_cast %c0_i32_8 : i32 to index
    %c0_12 = arith.constant 0 : index
    %c0_13 = arith.constant 0 : index
    %17 = vector.load %arg7[%16, %c0_12, %c0_13] : memref<8x8x128xf32, #tpu.memory_space<vmem>>, vector<1x8x128xf32>
    %18 = vector.shape_cast %17 : vector<1x8x128xf32> to vector<8x128xf32>
    %19 = vector.shape_cast %15 : vector<8x128xf32> to vector<1x8x128xf32>
    tpu.vector_store %arg7[%16, %c0_12, %c0_13], %19 {strides = array<i32>} : memref<8x8x128xf32, #tpu.memory_space<vmem>>, vector<1x8x128xf32>,
    %c1_i32 = arith.constant 1 : i32
    %20 = arith.index_cast %c1_i32 : i32 to index
    %c0_14 = arith.constant 0 : index
    %c0_15 = arith.constant 0 : index
    %21 = vector.load %arg2[%20, %c0_14, %c0_15] : memref<8x8x32xf32, #tpu.memory_space<vmem>>, vector<1x8x32xf32>
    %22 = vector.shape_cast %21 : vector<1x8x32xf32> to vector<8x32xf32>
    %cst_16 = arith.constant dense<0.000000e+00> : vector<8x128xf32>
    %23 = tpu.matmul %22, %3, %cst_16 {dimension_numbers = #tpu.dot_dimension_numbers<[1], [0], [0], [1], [0, 0, 1, 1], [], []>} : vector<8x32xf32>, vector<32x128xf32>, vector<8x128xf32> -> vector<8x128xf32>
    %cst_17 = arith.constant dense<0.000000e+00> : vector<8x128xf32>
    %24 = tpu.matmul %15, %4, %cst_17 {dimension_numbers = #tpu.dot_dimension_numbers<[1], [0], [0], [1], [0, 0, 1, 1], [], []>} : vector<8x128xf32>, vector<128x128xf32>, vector<8x128xf32> -> vector<8x128xf32>
    %25 = arith.addf %23, %24 : vector<8x128xf32>
    %26 = vector.broadcast %5 : vector<1x128xf32> to vector<8x128xf32>
    %27 = arith.addf %25, %26 : vector<8x128xf32>
    %28 = math.tanh %27 : vector<8x128xf32>
    %29 = arith.index_cast %c1_i32 : i32 to index
    %c0_18 = arith.constant 0 : index
    %c0_19 = arith.constant 0 : index
    %30 = vector.load %arg7[%29, %c0_18, %c0_19] : memref<8x8x128xf32, #tpu.memory_space<vmem>>, vector<1x8x128xf32>
    %31 = vector.shape_cast %30 : vector<1x8x128xf32> to vector<8x128xf32>
    %32 = vector.shape_cast %28 : vector<8x128xf32> to vector<1x8x128xf32>
    tpu.vector_store %arg7[%29, %c0_18, %c0_19], %32 {strides = array<i32>} : memref<8x8x128xf32, #tpu.memory_space<vmem>>, vector<1x8x128xf32>,
    %c2_i32 = arith.constant 2 : i32
    %33 = arith.index_cast %c2_i32 : i32 to index
    %c0_20 = arith.constant 0 : index
    %c0_21 = arith.constant 0 : index
    %34 = vector.load %arg2[%33, %c0_20, %c0_21] : memref<8x8x32xf32, #tpu.memory_space<vmem>>, vector<1x8x32xf32>
    %35 = vector.shape_cast %34 : vector<1x8x32xf32> to vector<8x32xf32>
    %cst_22 = arith.constant dense<0.000000e+00> : vector<8x128xf32>
    %36 = tpu.matmul %35, %3, %cst_22 {dimension_numbers = #tpu.dot_dimension_numbers<[1], [0], [0], [1], [0, 0, 1, 1], [], []>} : vector<8x32xf32>, vector<32x128xf32>, vector<8x128xf32> -> vector<8x128xf32>
    %cst_23 = arith.constant dense<0.000000e+00> : vector<8x128xf32>
    %37 = tpu.matmul %28, %4, %cst_23 {dimension_numbers = #tpu.dot_dimension_numbers<[1], [0], [0], [1], [0, 0, 1, 1], [], []>} : vector<8x128xf32>, vector<128x128xf32>, vector<8x128xf32> -> vector<8x128xf32>
    %38 = arith.addf %36, %37 : vector<8x128xf32>
    %39 = vector.broadcast %5 : vector<1x128xf32> to vector<8x128xf32>
    %40 = arith.addf %38, %39 : vector<8x128xf32>
    %41 = math.tanh %40 : vector<8x128xf32>
    %42 = arith.index_cast %c2_i32 : i32 to index
    %c0_24 = arith.constant 0 : index
    %c0_25 = arith.constant 0 : index
    %43 = vector.load %arg7[%42, %c0_24, %c0_25] : memref<8x8x128xf32, #tpu.memory_space<vmem>>, vector<1x8x128xf32>
    %44 = vector.shape_cast %43 : vector<1x8x128xf32> to vector<8x128xf32>
    %45 = vector.shape_cast %41 : vector<8x128xf32> to vector<1x8x128xf32>
    tpu.vector_store %arg7[%42, %c0_24, %c0_25], %45 {strides = array<i32>} : memref<8x8x128xf32, #tpu.memory_space<vmem>>, vector<1x8x128xf32>,
    %c3_i32 = arith.constant 3 : i32
    %46 = arith.index_cast %c3_i32 : i32 to index
    %c0_26 = arith.constant 0 : index
    %c0_27 = arith.constant 0 : index
    %47 = vector.load %arg2[%46, %c0_26, %c0_27] : memref<8x8x32xf32, #tpu.memory_space<vmem>>, vector<1x8x32xf32>
    %48 = vector.shape_cast %47 : vector<1x8x32xf32> to vector<8x32xf32>
    %cst_28 = arith.constant dense<0.000000e+00> : vector<8x128xf32>
    %49 = tpu.matmul %48, %3, %cst_28 {dimension_numbers = #tpu.dot_dimension_numbers<[1], [0], [0], [1], [0, 0, 1, 1], [], []>} : vector<8x32xf32>, vector<32x128xf32>, vector<8x128xf32> -> vector<8x128xf32>
    %cst_29 = arith.constant dense<0.000000e+00> : vector<8x128xf32>
    %50 = tpu.matmul %41, %4, %cst_29 {dimension_numbers = #tpu.dot_dimension_numbers<[1], [0], [0], [1], [0, 0, 1, 1], [], []>} : vector<8x128xf32>, vector<128x128xf32>, vector<8x128xf32> -> vector<8x128xf32>
    %51 = arith.addf %49, %50 : vector<8x128xf32>
    %52 = vector.broadcast %5 : vector<1x128xf32> to vector<8x128xf32>
    %53 = arith.addf %51, %52 : vector<8x128xf32>
    %54 = math.tanh %53 : vector<8x128xf32>
    %55 = arith.index_cast %c3_i32 : i32 to index
    %c0_30 = arith.constant 0 : index
    %c0_31 = arith.constant 0 : index
    %56 = vector.load %arg7[%55, %c0_30, %c0_31] : memref<8x8x128xf32, #tpu.memory_space<vmem>>, vector<1x8x128xf32>
    %57 = vector.shape_cast %56 : vector<1x8x128xf32> to vector<8x128xf32>
    %58 = vector.shape_cast %54 : vector<8x128xf32> to vector<1x8x128xf32>
    tpu.vector_store %arg7[%55, %c0_30, %c0_31], %58 {strides = array<i32>} : memref<8x8x128xf32, #tpu.memory_space<vmem>>, vector<1x8x128xf32>,
    %c4_i32 = arith.constant 4 : i32
    %59 = arith.index_cast %c4_i32 : i32 to index
    %c0_32 = arith.constant 0 : index
    %c0_33 = arith.constant 0 : index
    %60 = vector.load %arg2[%59, %c0_32, %c0_33] : memref<8x8x32xf32, #tpu.memory_space<vmem>>, vector<1x8x32xf32>
    %61 = vector.shape_cast %60 : vector<1x8x32xf32> to vector<8x32xf32>
    %cst_34 = arith.constant dense<0.000000e+00> : vector<8x128xf32>
    %62 = tpu.matmul %61, %3, %cst_34 {dimension_numbers = #tpu.dot_dimension_numbers<[1], [0], [0], [1], [0, 0, 1, 1], [], []>} : vector<8x32xf32>, vector<32x128xf32>, vector<8x128xf32> -> vector<8x128xf32>
    %cst_35 = arith.constant dense<0.000000e+00> : vector<8x128xf32>
    %63 = tpu.matmul %54, %4, %cst_35 {dimension_numbers = #tpu.dot_dimension_numbers<[1], [0], [0], [1], [0, 0, 1, 1], [], []>} : vector<8x128xf32>, vector<128x128xf32>, vector<8x128xf32> -> vector<8x128xf32>
    %64 = arith.addf %62, %63 : vector<8x128xf32>
    %65 = vector.broadcast %5 : vector<1x128xf32> to vector<8x128xf32>
    %66 = arith.addf %64, %65 : vector<8x128xf32>
    %67 = math.tanh %66 : vector<8x128xf32>
    %68 = arith.index_cast %c4_i32 : i32 to index
    %c0_36 = arith.constant 0 : index
    %c0_37 = arith.constant 0 : index
    %69 = vector.load %arg7[%68, %c0_36, %c0_37] : memref<8x8x128xf32, #tpu.memory_space<vmem>>, vector<1x8x128xf32>
    %70 = vector.shape_cast %69 : vector<1x8x128xf32> to vector<8x128xf32>
    %71 = vector.shape_cast %67 : vector<8x128xf32> to vector<1x8x128xf32>
    tpu.vector_store %arg7[%68, %c0_36, %c0_37], %71 {strides = array<i32>} : memref<8x8x128xf32, #tpu.memory_space<vmem>>, vector<1x8x128xf32>,
    %c5_i32 = arith.constant 5 : i32
    %72 = arith.index_cast %c5_i32 : i32 to index
    %c0_38 = arith.constant 0 : index
    %c0_39 = arith.constant 0 : index
    %73 = vector.load %arg2[%72, %c0_38, %c0_39] : memref<8x8x32xf32, #tpu.memory_space<vmem>>, vector<1x8x32xf32>
    %74 = vector.shape_cast %73 : vector<1x8x32xf32> to vector<8x32xf32>
    %cst_40 = arith.constant dense<0.000000e+00> : vector<8x128xf32>
    %75 = tpu.matmul %74, %3, %cst_40 {dimension_numbers = #tpu.dot_dimension_numbers<[1], [0], [0], [1], [0, 0, 1, 1], [], []>} : vector<8x32xf32>, vector<32x128xf32>, vector<8x128xf32> -> vector<8x128xf32>
    %cst_41 = arith.constant dense<0.000000e+00> : vector<8x128xf32>
    %76 = tpu.matmul %67, %4, %cst_41 {dimension_numbers = #tpu.dot_dimension_numbers<[1], [0], [0], [1], [0, 0, 1, 1], [], []>} : vector<8x128xf32>, vector<128x128xf32>, vector<8x128xf32> -> vector<8x128xf32>
    %77 = arith.addf %75, %76 : vector<8x128xf32>
    %78 = vector.broadcast %5 : vector<1x128xf32> to vector<8x128xf32>
    %79 = arith.addf %77, %78 : vector<8x128xf32>
    %80 = math.tanh %79 : vector<8x128xf32>
    %81 = arith.index_cast %c5_i32 : i32 to index
    %c0_42 = arith.constant 0 : index
    %c0_43 = arith.constant 0 : index
    %82 = vector.load %arg7[%81, %c0_42, %c0_43] : memref<8x8x128xf32, #tpu.memory_space<vmem>>, vector<1x8x128xf32>
    %83 = vector.shape_cast %82 : vector<1x8x128xf32> to vector<8x128xf32>
    %84 = vector.shape_cast %80 : vector<8x128xf32> to vector<1x8x128xf32>
    tpu.vector_store %arg7[%81, %c0_42, %c0_43], %84 {strides = array<i32>} : memref<8x8x128xf32, #tpu.memory_space<vmem>>, vector<1x8x128xf32>,
    %c6_i32 = arith.constant 6 : i32
    %85 = arith.index_cast %c6_i32 : i32 to index
    %c0_44 = arith.constant 0 : index
    %c0_45 = arith.constant 0 : index
    %86 = vector.load %arg2[%85, %c0_44, %c0_45] : memref<8x8x32xf32, #tpu.memory_space<vmem>>, vector<1x8x32xf32>
    %87 = vector.shape_cast %86 : vector<1x8x32xf32> to vector<8x32xf32>
    %cst_46 = arith.constant dense<0.000000e+00> : vector<8x128xf32>
    %88 = tpu.matmul %87, %3, %cst_46 {dimension_numbers = #tpu.dot_dimension_numbers<[1], [0], [0], [1], [0, 0, 1, 1], [], []>} : vector<8x32xf32>, vector<32x128xf32>, vector<8x128xf32> -> vector<8x128xf32>
    %cst_47 = arith.constant dense<0.000000e+00> : vector<8x128xf32>
    %89 = tpu.matmul %80, %4, %cst_47 {dimension_numbers = #tpu.dot_dimension_numbers<[1], [0], [0], [1], [0, 0, 1, 1], [], []>} : vector<8x128xf32>, vector<128x128xf32>, vector<8x128xf32> -> vector<8x128xf32>
    %90 = arith.addf %88, %89 : vector<8x128xf32>
    %91 = vector.broadcast %5 : vector<1x128xf32> to vector<8x128xf32>
    %92 = arith.addf %90, %91 : vector<8x128xf32>
    %93 = math.tanh %92 : vector<8x128xf32>
    %94 = arith.index_cast %c6_i32 : i32 to index
    %c0_48 = arith.constant 0 : index
    %c0_49 = arith.constant 0 : index
    %95 = vector.load %arg7[%94, %c0_48, %c0_49] : memref<8x8x128xf32, #tpu.memory_space<vmem>>, vector<1x8x128xf32>
    %96 = vector.shape_cast %95 : vector<1x8x128xf32> to vector<8x128xf32>
    %97 = vector.shape_cast %93 : vector<8x128xf32> to vector<1x8x128xf32>
    tpu.vector_store %arg7[%94, %c0_48, %c0_49], %97 {strides = array<i32>} : memref<8x8x128xf32, #tpu.memory_space<vmem>>, vector<1x8x128xf32>,
    %c7_i32 = arith.constant 7 : i32
    %98 = arith.index_cast %c7_i32 : i32 to index
    %c0_50 = arith.constant 0 : index
    %c0_51 = arith.constant 0 : index
    %99 = vector.load %arg2[%98, %c0_50, %c0_51] : memref<8x8x32xf32, #tpu.memory_space<vmem>>, vector<1x8x32xf32>
    %100 = vector.shape_cast %99 : vector<1x8x32xf32> to vector<8x32xf32>
    %cst_52 = arith.constant dense<0.000000e+00> : vector<8x128xf32>
    %101 = tpu.matmul %100, %3, %cst_52 {dimension_numbers = #tpu.dot_dimension_numbers<[1], [0], [0], [1], [0, 0, 1, 1], [], []>} : vector<8x32xf32>, vector<32x128xf32>, vector<8x128xf32> -> vector<8x128xf32>
    %cst_53 = arith.constant dense<0.000000e+00> : vector<8x128xf32>
    %102 = tpu.matmul %93, %4, %cst_53 {dimension_numbers = #tpu.dot_dimension_numbers<[1], [0], [0], [1], [0, 0, 1, 1], [], []>} : vector<8x128xf32>, vector<128x128xf32>, vector<8x128xf32> -> vector<8x128xf32>
    %103 = arith.addf %101, %102 : vector<8x128xf32>
    %104 = vector.broadcast %5 : vector<1x128xf32> to vector<8x128xf32>
    %105 = arith.addf %103, %104 : vector<8x128xf32>
    %106 = math.tanh %105 : vector<8x128xf32>
    %107 = arith.index_cast %c7_i32 : i32 to index
    %c0_54 = arith.constant 0 : index
    %c0_55 = arith.constant 0 : index
    %108 = vector.load %arg7[%107, %c0_54, %c0_55] : memref<8x8x128xf32, #tpu.memory_space<vmem>>, vector<1x8x128xf32>
    %109 = vector.shape_cast %108 : vector<1x8x128xf32> to vector<8x128xf32>
    %110 = vector.shape_cast %106 : vector<8x128xf32> to vector<1x8x128xf32>
    tpu.vector_store %arg7[%107, %c0_54, %c0_55], %110 {strides = array<i32>} : memref<8x8x128xf32, #tpu.memory_space<vmem>>, vector<1x8x128xf32>,
    %c8_i32 = arith.constant 8 : i32
    %c0_56 = arith.constant 0 : index
    %c0_57 = arith.constant 0 : index
    %111 = vector.load %arg8[%c0_56, %c0_57] : memref<8x128xf32, #tpu.memory_space<vmem>>, vector<8x128xf32>
    tpu.vector_store %arg8[%c0_56, %c0_57], %106 {strides = array<i32>} : memref<8x128xf32, #tpu.memory_space<vmem>>, vector<8x128xf32>,
    return
  }
  func.func @transform_0(%arg0: i32, %arg1: i32) -> (i32, i32, i32) {
    %c0_i32 = arith.constant 0 : i32
    %c0_i32_0 = arith.constant 0 : i32
    return %arg1, %arg0, %c0_i32 : i32, i32, i32
  }
  func.func @transform_1(%arg0: i32, %arg1: i32) -> (i32, i32) {
    %c0_i32 = arith.constant 0 : i32
    %c0_i32_0 = arith.constant 0 : i32
    return %arg0, %c0_i32 : i32, i32
  }
  func.func @transform_2(%arg0: i32, %arg1: i32) -> (i32, i32) {
    %c0_i32 = arith.constant 0 : i32
    %c0_i32_0 = arith.constant 0 : i32
    %c0_i32_1 = arith.constant 0 : i32
    return %c0_i32, %c0_i32_0 : i32, i32
  }
  func.func @transform_3(%arg0: i32, %arg1: i32) -> (i32, i32) {
    %c0_i32 = arith.constant 0 : i32
    %c0_i32_0 = arith.constant 0 : i32
    %c0_i32_1 = arith.constant 0 : i32
    return %c0_i32, %c0_i32_0 : i32, i32
  }
  func.func @transform_4(%arg0: i32, %arg1: i32) -> (i32, i32) {
    %c0_i32 = arith.constant 0 : i32
    %c0_i32_0 = arith.constant 0 : i32
    %c0_i32_1 = arith.constant 0 : i32
    return %c0_i32, %c0_i32_0 : i32, i32
  }
  func.func @transform_5(%arg0: i32, %arg1: i32) -> (i32, i32, i32) {
    %c0_i32 = arith.constant 0 : i32
    %c0_i32_0 = arith.constant 0 : i32
    return %arg1, %arg0, %c0_i32 : i32, i32, i32
  }
}

module attributes {stable_mosaic.version = 11 : i64} {
  func.func @_sernn_chunk_kernel(%arg0: i32, %arg1: i32, %arg2: memref<8x8x32xf32, #tpu.memory_space<vmem>>, %arg3: memref<8x128xf32, #tpu.memory_space<vmem>>, %arg4: memref<32x128xf32, #tpu.memory_space<vmem>>, %arg5: memref<1x128xf32, #tpu.memory_space<vmem>>, %arg6: memref<128x128xf32, #tpu.memory_space<vmem>>, %arg7: memref<8x8x128xf32, #tpu.memory_space<vmem>>, %arg8: memref<8x128xf32, #tpu.memory_space<vmem>>) attributes {dimension_semantics = [#tpu.dimension_semantics<parallel>, #tpu.dimension_semantics<arbitrary>], iteration_bounds = array<i64: 1, 1>, scalar_prefetch = 0 : i64, scratch_operands = 1 : i64, tpu.core_type = #tpu.core_type<tc>, window_params = [{transform_indices = @transform_0, window_bounds = array<i64: 8, 8, 32>}, {transform_indices = @transform_1, window_bounds = array<i64: 8, 128>}, {pipeline_mode = #tpu.pipeline_mode<synchronous>, transform_indices = @transform_2, window_bounds = array<i64: 32, 128>}, {pipeline_mode = #tpu.pipeline_mode<synchronous>, transform_indices = @transform_3, window_bounds = array<i64: 1, 128>}, {pipeline_mode = #tpu.pipeline_mode<synchronous>, transform_indices = @transform_4, window_bounds = array<i64: 128, 128>}, {transform_indices = @transform_5, window_bounds = array<i64: 8, 8, 128>}]} {
    %c0_i32 = arith.constant 0 : i32
    %0 = arith.cmpi eq, %arg1, %c0_i32 : i32
    %1 = arith.extui %0 : i1 to i32
    %c0_i32_0 = arith.constant 0 : i32
    %2 = arith.cmpi ne, %1, %c0_i32_0 : i32
    scf.if %2 {
      %c0_58 = arith.constant 0 : index
      %c0_59 = arith.constant 0 : index
      %112 = vector.load %arg3[%c0_58, %c0_59] : memref<8x128xf32, #tpu.memory_space<vmem>>, vector<8x128xf32>
      %c0_60 = arith.constant 0 : index
      %c0_61 = arith.constant 0 : index
      %113 = vector.load %arg8[%c0_60, %c0_61] : memref<8x128xf32, #tpu.memory_space<vmem>>, vector<8x128xf32>
      tpu.vector_store %arg8[%c0_60, %c0_61], %112 {strides = array<i32>} : memref<8x128xf32, #tpu.memory_space<vmem>>, vector<8x128xf32>,
    } else {
    }
    %c0 = arith.constant 0 : index
    %c0_1 = arith.constant 0 : index
    %3 = vector.load %arg4[%c0, %c0_1] : memref<32x128xf32, #tpu.memory_space<vmem>>, vector<32x128xf32>
    %c0_2 = arith.constant 0 : index
    %c0_3 = arith.constant 0 : index
    %4 = vector.load %arg6[%c0_2, %c0_3] : memref<128x128xf32, #tpu.memory_space<vmem>>, vector<128x128xf32>
    %c0_4 = arith.constant 0 : index
    %c0_5 = arith.constant 0 : index
    %5 = vector.load %arg5[%c0_4, %c0_5] : memref<1x128xf32, #tpu.memory_space<vmem>>, vector<1x128xf32>
    %c0_6 = arith.constant 0 : index
    %c0_7 = arith.constant 0 : index
    %6 = vector.load %arg8[%c0_6, %c0_7] : memref<8x128xf32, #tpu.memory_space<vmem>>, vector<8x128xf32>
    %c0_i32_8 = arith.constant 0 : i32
    %7 = arith.index_cast %c0_i32_8 : i32 to index
    %c0_9 = arith.constant 0 : index
    %c0_10 = arith.constant 0 : index
    %8 = vector.load %arg2[%7, %c0_9, %c0_10] : memref<8x8x32xf32, #tpu.memory_space<vmem>>, vector<1x8x32xf32>
    %9 = vector.shape_cast %8 : vector<1x8x32xf32> to vector<8x32xf32>
    %cst = arith.constant dense<0.000000e+00> : vector<8x128xf32>
    %10 = tpu.matmul %9, %3, %cst {dimension_numbers = #tpu.dot_dimension_numbers<[1], [0], [0], [1], [0, 0, 1, 1], [], []>} : vector<8x32xf32>, vector<32x128xf32>, vector<8x128xf32> -> vector<8x128xf32>
    %cst_11 = arith.constant dense<0.000000e+00> : vector<8x128xf32>
    %11 = tpu.matmul %6, %4, %cst_11 {dimension_numbers = #tpu.dot_dimension_numbers<[1], [0], [0], [1], [0, 0, 1, 1], [], []>} : vector<8x128xf32>, vector<128x128xf32>, vector<8x128xf32> -> vector<8x128xf32>
    %12 = arith.addf %10, %11 : vector<8x128xf32>
    %13 = vector.broadcast %5 : vector<1x128xf32> to vector<8x128xf32>
    %14 = arith.addf %12, %13 : vector<8x128xf32>
    %15 = math.tanh %14 : vector<8x128xf32>
    %16 = arith.index_cast %c0_i32_8 : i32 to index
    %c0_12 = arith.constant 0 : index
    %c0_13 = arith.constant 0 : index
    %17 = vector.load %arg7[%16, %c0_12, %c0_13] : memref<8x8x128xf32, #tpu.memory_space<vmem>>, vector<1x8x128xf32>
    %18 = vector.shape_cast %17 : vector<1x8x128xf32> to vector<8x128xf32>
    %19 = vector.shape_cast %15 : vector<8x128xf32> to vector<1x8x128xf32>
    tpu.vector_store %arg7[%16, %c0_12, %c0_13], %19 {strides = array<i32>} : memref<8x8x128xf32, #tpu.memory_space<vmem>>, vector<1x8x128xf32>,
    %c1_i32 = arith.constant 1 : i32
    %20 = arith.index_cast %c1_i32 : i32 to index
    %c0_14 = arith.constant 0 : index
    %c0_15 = arith.constant 0 : index
    %21 = vector.load %arg2[%20, %c0_14, %c0_15] : memref<8x8x32xf32, #tpu.memory_space<vmem>>, vector<1x8x32xf32>
    %22 = vector.shape_cast %21 : vector<1x8x32xf32> to vector<8x32xf32>
    %cst_16 = arith.constant dense<0.000000e+00> : vector<8x128xf32>
    %23 = tpu.matmul %22, %3, %cst_16 {dimension_numbers = #tpu.dot_dimension_numbers<[1], [0], [0], [1], [0, 0, 1, 1], [], []>} : vector<8x32xf32>, vector<32x128xf32>, vector<8x128xf32> -> vector<8x128xf32>
    %cst_17 = arith.constant dense<0.000000e+00> : vector<8x128xf32>
    %24 = tpu.matmul %15, %4, %cst_17 {dimension_numbers = #tpu.dot_dimension_numbers<[1], [0], [0], [1], [0, 0, 1, 1], [], []>} : vector<8x128xf32>, vector<128x128xf32>, vector<8x128xf32> -> vector<8x128xf32>
    %25 = arith.addf %23, %24 : vector<8x128xf32>
    %26 = vector.broadcast %5 : vector<1x128xf32> to vector<8x128xf32>
    %27 = arith.addf %25, %26 : vector<8x128xf32>
    %28 = math.tanh %27 : vector<8x128xf32>
    %29 = arith.index_cast %c1_i32 : i32 to index
    %c0_18 = arith.constant 0 : index
    %c0_19 = arith.constant 0 : index
    %30 = vector.load %arg7[%29, %c0_18, %c0_19] : memref<8x8x128xf32, #tpu.memory_space<vmem>>, vector<1x8x128xf32>
    %31 = vector.shape_cast %30 : vector<1x8x128xf32> to vector<8x128xf32>
    %32 = vector.shape_cast %28 : vector<8x128xf32> to vector<1x8x128xf32>
    tpu.vector_store %arg7[%29, %c0_18, %c0_19], %32 {strides = array<i32>} : memref<8x8x128xf32, #tpu.memory_space<vmem>>, vector<1x8x128xf32>,
    %c2_i32 = arith.constant 2 : i32
    %33 = arith.index_cast %c2_i32 : i32 to index
    %c0_20 = arith.constant 0 : index
    %c0_21 = arith.constant 0 : index
    %34 = vector.load %arg2[%33, %c0_20, %c0_21] : memref<8x8x32xf32, #tpu.memory_space<vmem>>, vector<1x8x32xf32>
    %35 = vector.shape_cast %34 : vector<1x8x32xf32> to vector<8x32xf32>
    %cst_22 = arith.constant dense<0.000000e+00> : vector<8x128xf32>
    %36 = tpu.matmul %35, %3, %cst_22 {dimension_numbers = #tpu.dot_dimension_numbers<[1], [0], [0], [1], [0, 0, 1, 1], [], []>} : vector<8x32xf32>, vector<32x128xf32>, vector<8x128xf32> -> vector<8x128xf32>
    %cst_23 = arith.constant dense<0.000000e+00> : vector<8x128xf32>
    %37 = tpu.matmul %28, %4, %cst_23 {dimension_numbers = #tpu.dot_dimension_numbers<[1], [0], [0], [1], [0, 0, 1, 1], [], []>} : vector<8x128xf32>, vector<128x128xf32>, vector<8x128xf32> -> vector<8x128xf32>
    %38 = arith.addf %36, %37 : vector<8x128xf32>
    %39 = vector.broadcast %5 : vector<1x128xf32> to vector<8x128xf32>
    %40 = arith.addf %38, %39 : vector<8x128xf32>
    %41 = math.tanh %40 : vector<8x128xf32>
    %42 = arith.index_cast %c2_i32 : i32 to index
    %c0_24 = arith.constant 0 : index
    %c0_25 = arith.constant 0 : index
    %43 = vector.load %arg7[%42, %c0_24, %c0_25] : memref<8x8x128xf32, #tpu.memory_space<vmem>>, vector<1x8x128xf32>
    %44 = vector.shape_cast %43 : vector<1x8x128xf32> to vector<8x128xf32>
    %45 = vector.shape_cast %41 : vector<8x128xf32> to vector<1x8x128xf32>
    tpu.vector_store %arg7[%42, %c0_24, %c0_25], %45 {strides = array<i32>} : memref<8x8x128xf32, #tpu.memory_space<vmem>>, vector<1x8x128xf32>,
    %c3_i32 = arith.constant 3 : i32
    %46 = arith.index_cast %c3_i32 : i32 to index
    %c0_26 = arith.constant 0 : index
    %c0_27 = arith.constant 0 : index
    %47 = vector.load %arg2[%46, %c0_26, %c0_27] : memref<8x8x32xf32, #tpu.memory_space<vmem>>, vector<1x8x32xf32>
    %48 = vector.shape_cast %47 : vector<1x8x32xf32> to vector<8x32xf32>
    %cst_28 = arith.constant dense<0.000000e+00> : vector<8x128xf32>
    %49 = tpu.matmul %48, %3, %cst_28 {dimension_numbers = #tpu.dot_dimension_numbers<[1], [0], [0], [1], [0, 0, 1, 1], [], []>} : vector<8x32xf32>, vector<32x128xf32>, vector<8x128xf32> -> vector<8x128xf32>
    %cst_29 = arith.constant dense<0.000000e+00> : vector<8x128xf32>
    %50 = tpu.matmul %41, %4, %cst_29 {dimension_numbers = #tpu.dot_dimension_numbers<[1], [0], [0], [1], [0, 0, 1, 1], [], []>} : vector<8x128xf32>, vector<128x128xf32>, vector<8x128xf32> -> vector<8x128xf32>
    %51 = arith.addf %49, %50 : vector<8x128xf32>
    %52 = vector.broadcast %5 : vector<1x128xf32> to vector<8x128xf32>
    %53 = arith.addf %51, %52 : vector<8x128xf32>
    %54 = math.tanh %53 : vector<8x128xf32>
    %55 = arith.index_cast %c3_i32 : i32 to index
    %c0_30 = arith.constant 0 : index
    %c0_31 = arith.constant 0 : index
    %56 = vector.load %arg7[%55, %c0_30, %c0_31] : memref<8x8x128xf32, #tpu.memory_space<vmem>>, vector<1x8x128xf32>
    %57 = vector.shape_cast %56 : vector<1x8x128xf32> to vector<8x128xf32>
    %58 = vector.shape_cast %54 : vector<8x128xf32> to vector<1x8x128xf32>
    tpu.vector_store %arg7[%55, %c0_30, %c0_31], %58 {strides = array<i32>} : memref<8x8x128xf32, #tpu.memory_space<vmem>>, vector<1x8x128xf32>,
    %c4_i32 = arith.constant 4 : i32
    %59 = arith.index_cast %c4_i32 : i32 to index
    %c0_32 = arith.constant 0 : index
    %c0_33 = arith.constant 0 : index
    %60 = vector.load %arg2[%59, %c0_32, %c0_33] : memref<8x8x32xf32, #tpu.memory_space<vmem>>, vector<1x8x32xf32>
    %61 = vector.shape_cast %60 : vector<1x8x32xf32> to vector<8x32xf32>
    %cst_34 = arith.constant dense<0.000000e+00> : vector<8x128xf32>
    %62 = tpu.matmul %61, %3, %cst_34 {dimension_numbers = #tpu.dot_dimension_numbers<[1], [0], [0], [1], [0, 0, 1, 1], [], []>} : vector<8x32xf32>, vector<32x128xf32>, vector<8x128xf32> -> vector<8x128xf32>
    %cst_35 = arith.constant dense<0.000000e+00> : vector<8x128xf32>
    %63 = tpu.matmul %54, %4, %cst_35 {dimension_numbers = #tpu.dot_dimension_numbers<[1], [0], [0], [1], [0, 0, 1, 1], [], []>} : vector<8x128xf32>, vector<128x128xf32>, vector<8x128xf32> -> vector<8x128xf32>
    %64 = arith.addf %62, %63 : vector<8x128xf32>
    %65 = vector.broadcast %5 : vector<1x128xf32> to vector<8x128xf32>
    %66 = arith.addf %64, %65 : vector<8x128xf32>
    %67 = math.tanh %66 : vector<8x128xf32>
    %68 = arith.index_cast %c4_i32 : i32 to index
    %c0_36 = arith.constant 0 : index
    %c0_37 = arith.constant 0 : index
    %69 = vector.load %arg7[%68, %c0_36, %c0_37] : memref<8x8x128xf32, #tpu.memory_space<vmem>>, vector<1x8x128xf32>
    %70 = vector.shape_cast %69 : vector<1x8x128xf32> to vector<8x128xf32>
    %71 = vector.shape_cast %67 : vector<8x128xf32> to vector<1x8x128xf32>
    tpu.vector_store %arg7[%68, %c0_36, %c0_37], %71 {strides = array<i32>} : memref<8x8x128xf32, #tpu.memory_space<vmem>>, vector<1x8x128xf32>,
    %c5_i32 = arith.constant 5 : i32
    %72 = arith.index_cast %c5_i32 : i32 to index
    %c0_38 = arith.constant 0 : index
    %c0_39 = arith.constant 0 : index
    %73 = vector.load %arg2[%72, %c0_38, %c0_39] : memref<8x8x32xf32, #tpu.memory_space<vmem>>, vector<1x8x32xf32>
    %74 = vector.shape_cast %73 : vector<1x8x32xf32> to vector<8x32xf32>
    %cst_40 = arith.constant dense<0.000000e+00> : vector<8x128xf32>
    %75 = tpu.matmul %74, %3, %cst_40 {dimension_numbers = #tpu.dot_dimension_numbers<[1], [0], [0], [1], [0, 0, 1, 1], [], []>} : vector<8x32xf32>, vector<32x128xf32>, vector<8x128xf32> -> vector<8x128xf32>
    %cst_41 = arith.constant dense<0.000000e+00> : vector<8x128xf32>
    %76 = tpu.matmul %67, %4, %cst_41 {dimension_numbers = #tpu.dot_dimension_numbers<[1], [0], [0], [1], [0, 0, 1, 1], [], []>} : vector<8x128xf32>, vector<128x128xf32>, vector<8x128xf32> -> vector<8x128xf32>
    %77 = arith.addf %75, %76 : vector<8x128xf32>
    %78 = vector.broadcast %5 : vector<1x128xf32> to vector<8x128xf32>
    %79 = arith.addf %77, %78 : vector<8x128xf32>
    %80 = math.tanh %79 : vector<8x128xf32>
    %81 = arith.index_cast %c5_i32 : i32 to index
    %c0_42 = arith.constant 0 : index
    %c0_43 = arith.constant 0 : index
    %82 = vector.load %arg7[%81, %c0_42, %c0_43] : memref<8x8x128xf32, #tpu.memory_space<vmem>>, vector<1x8x128xf32>
    %83 = vector.shape_cast %82 : vector<1x8x128xf32> to vector<8x128xf32>
    %84 = vector.shape_cast %80 : vector<8x128xf32> to vector<1x8x128xf32>
    tpu.vector_store %arg7[%81, %c0_42, %c0_43], %84 {strides = array<i32>} : memref<8x8x128xf32, #tpu.memory_space<vmem>>, vector<1x8x128xf32>,
    %c6_i32 = arith.constant 6 : i32
    %85 = arith.index_cast %c6_i32 : i32 to index
    %c0_44 = arith.constant 0 : index
    %c0_45 = arith.constant 0 : index
    %86 = vector.load %arg2[%85, %c0_44, %c0_45] : memref<8x8x32xf32, #tpu.memory_space<vmem>>, vector<1x8x32xf32>
    %87 = vector.shape_cast %86 : vector<1x8x32xf32> to vector<8x32xf32>
    %cst_46 = arith.constant dense<0.000000e+00> : vector<8x128xf32>
    %88 = tpu.matmul %87, %3, %cst_46 {dimension_numbers = #tpu.dot_dimension_numbers<[1], [0], [0], [1], [0, 0, 1, 1], [], []>} : vector<8x32xf32>, vector<32x128xf32>, vector<8x128xf32> -> vector<8x128xf32>
    %cst_47 = arith.constant dense<0.000000e+00> : vector<8x128xf32>
    %89 = tpu.matmul %80, %4, %cst_47 {dimension_numbers = #tpu.dot_dimension_numbers<[1], [0], [0], [1], [0, 0, 1, 1], [], []>} : vector<8x128xf32>, vector<128x128xf32>, vector<8x128xf32> -> vector<8x128xf32>
    %90 = arith.addf %88, %89 : vector<8x128xf32>
    %91 = vector.broadcast %5 : vector<1x128xf32> to vector<8x128xf32>
    %92 = arith.addf %90, %91 : vector<8x128xf32>
    %93 = math.tanh %92 : vector<8x128xf32>
    %94 = arith.index_cast %c6_i32 : i32 to index
    %c0_48 = arith.constant 0 : index
    %c0_49 = arith.constant 0 : index
    %95 = vector.load %arg7[%94, %c0_48, %c0_49] : memref<8x8x128xf32, #tpu.memory_space<vmem>>, vector<1x8x128xf32>
    %96 = vector.shape_cast %95 : vector<1x8x128xf32> to vector<8x128xf32>
    %97 = vector.shape_cast %93 : vector<8x128xf32> to vector<1x8x128xf32>
    tpu.vector_store %arg7[%94, %c0_48, %c0_49], %97 {strides = array<i32>} : memref<8x8x128xf32, #tpu.memory_space<vmem>>, vector<1x8x128xf32>,
    %c7_i32 = arith.constant 7 : i32
    %98 = arith.index_cast %c7_i32 : i32 to index
    %c0_50 = arith.constant 0 : index
    %c0_51 = arith.constant 0 : index
    %99 = vector.load %arg2[%98, %c0_50, %c0_51] : memref<8x8x32xf32, #tpu.memory_space<vmem>>, vector<1x8x32xf32>
    %100 = vector.shape_cast %99 : vector<1x8x32xf32> to vector<8x32xf32>
    %cst_52 = arith.constant dense<0.000000e+00> : vector<8x128xf32>
    %101 = tpu.matmul %100, %3, %cst_52 {dimension_numbers = #tpu.dot_dimension_numbers<[1], [0], [0], [1], [0, 0, 1, 1], [], []>} : vector<8x32xf32>, vector<32x128xf32>, vector<8x128xf32> -> vector<8x128xf32>
    %cst_53 = arith.constant dense<0.000000e+00> : vector<8x128xf32>
    %102 = tpu.matmul %93, %4, %cst_53 {dimension_numbers = #tpu.dot_dimension_numbers<[1], [0], [0], [1], [0, 0, 1, 1], [], []>} : vector<8x128xf32>, vector<128x128xf32>, vector<8x128xf32> -> vector<8x128xf32>
    %103 = arith.addf %101, %102 : vector<8x128xf32>
    %104 = vector.broadcast %5 : vector<1x128xf32> to vector<8x128xf32>
    %105 = arith.addf %103, %104 : vector<8x128xf32>
    %106 = math.tanh %105 : vector<8x128xf32>
    %107 = arith.index_cast %c7_i32 : i32 to index
    %c0_54 = arith.constant 0 : index
    %c0_55 = arith.constant 0 : index
    %108 = vector.load %arg7[%107, %c0_54, %c0_55] : memref<8x8x128xf32, #tpu.memory_space<vmem>>, vector<1x8x128xf32>
    %109 = vector.shape_cast %108 : vector<1x8x128xf32> to vector<8x128xf32>
    %110 = vector.shape_cast %106 : vector<8x128xf32> to vector<1x8x128xf32>
    tpu.vector_store %arg7[%107, %c0_54, %c0_55], %110 {strides = array<i32>} : memref<8x8x128xf32, #tpu.memory_space<vmem>>, vector<1x8x128xf32>,
    %c8_i32 = arith.constant 8 : i32
    %c0_56 = arith.constant 0 : index
    %c0_57 = arith.constant 0 : index
    %111 = vector.load %arg8[%c0_56, %c0_57] : memref<8x128xf32, #tpu.memory_space<vmem>>, vector<8x128xf32>
    tpu.vector_store %arg8[%c0_56, %c0_57], %106 {strides = array<i32>} : memref<8x128xf32, #tpu.memory_space<vmem>>, vector<8x128xf32>,
    return
  }
  func.func @transform_0(%arg0: i32, %arg1: i32) -> (i32, i32, i32) {
    %c0_i32 = arith.constant 0 : i32
    %c0_i32_0 = arith.constant 0 : i32
    return %arg1, %arg0, %c0_i32 : i32, i32, i32
  }
  func.func @transform_1(%arg0: i32, %arg1: i32) -> (i32, i32) {
    %c0_i32 = arith.constant 0 : i32
    %c0_i32_0 = arith.constant 0 : i32
    return %arg0, %c0_i32 : i32, i32
  }
  func.func @transform_2(%arg0: i32, %arg1: i32) -> (i32, i32) {
    %c0_i32 = arith.constant 0 : i32
    %c0_i32_0 = arith.constant 0 : i32
    %c0_i32_1 = arith.constant 0 : i32
    return %c0_i32, %c0_i32_0 : i32, i32
  }
  func.func @transform_3(%arg0: i32, %arg1: i32) -> (i32, i32) {
    %c0_i32 = arith.constant 0 : i32
    %c0_i32_0 = arith.constant 0 : i32
    %c0_i32_1 = arith.constant 0 : i32
    return %c0_i32, %c0_i32_0 : i32, i32
  }
  func.func @transform_4(%arg0: i32, %arg1: i32) -> (i32, i32) {
    %c0_i32 = arith.constant 0 : i32
    %c0_i32_0 = arith.constant 0 : i32
    %c0_i32_1 = arith.constant 0 : i32
    return %c0_i32, %c0_i32_0 : i32, i32
  }
  func.func @transform_5(%arg0: i32, %arg1: i32) -> (i32, i32, i32) {
    %c0_i32 = arith.constant 0 : i32
    %c0_i32_0 = arith.constant 0 : i32
    return %arg1, %arg0, %c0_i32 : i32, i32, i32
  }
}

</mosaic_0001>

<llo_original>
// kernel: _sernn_seq_impl.1
$region0: #{_sernn_seq_impl.1}
  #allocation0 [shape = 'u32[]', space=smem, size = 0x4, offset = 0x4, fixed_abs, tag = 'smem constant byte address 0x4 - core index']
  #allocation1 [shape = 'u32[144,128]{1,0:T(1,128)}', space=vmem, size = 0x12000, scoped, tag = 'internal scratch']
  #allocation2 [shape = 'f32[8,128]{1,0:T(8,128)}', space=vmem, size = 0x1000, scoped, tag = 'scratch operand']
  %s0 = inlined_call_operand.hbm [shape: f32[8,8,32], index: 0, kind: input, shape index: {}]
  %s1 = inlined_call_operand.hbm [shape: f32[8,128], index: 1, kind: input, shape index: {}]
  %s2 = inlined_call_operand.hbm [shape: f32[32,128], index: 2, kind: input, shape index: {}]
  %s3 = inlined_call_operand.vmem [shape: f32[1,128], index: 3, kind: input, shape index: {}]
  %s4 = inlined_call_operand.hbm [shape: f32[128,128], index: 4, kind: input, shape index: {}]
  %s5 = inlined_call_operand.hbm [shape: f32[8,8,128], index: 5, kind: output, shape index: {}]
  %s6 = sld [smem:[#allocation0]]
  $region50: #{_sernn_seq_impl.1} parent=0
    _
  %s8 = ssub.s32 1, %s6
  %s9 = scalar_select 0, %s8, %s6
  $region1: #{_sernn_seq_impl.1} parent=0
    #allocation3 [shape = 'u8[32768]{0}', space=vmem, size = 0x8000, scoped, tag = 'input window, operand 0, single buffered']
    #allocation4 [shape = 's32[1]{0}', space=sflag, size = 0x4, scoped, tag = 'scoped memory for _sernn_seq_impl.1']
    #allocation5 [shape = 's32[1]{0}', space=sflag, size = 0x4, scoped, tag = 'scoped memory for _sernn_seq_impl.1']
    #allocation6 [shape = 'u8[4096]{0}', space=vmem, size = 0x1000, scoped, tag = 'input window, operand 1, single buffered']
    #allocation7 [shape = 's32[1]{0}', space=sflag, size = 0x4, scoped, tag = 'scoped memory for _sernn_seq_impl.1']
    #allocation8 [shape = 'u8[16384]{0}', space=vmem, size = 0x4000, scoped, tag = 'input window, operand 2, single buffered']
    #allocation9 [shape = 'u8[65536]{0}', space=vmem, size = 0x10000, scoped, tag = 'input window, operand 4, single buffered']
    #allocation10 [shape = 's32[1]{0}', space=sflag, size = 0x4, scoped, tag = 'scoped memory for _sernn_seq_impl.1']
    #allocation11 [shape = 'u8[32768]{0}', space=vmem, size = 0x8000, scoped, tag = 'output window, operand 0, single buffered']
    %10 = vsyncpa [#allocation4], 0
    %11 = vsyncpa [#allocation7], 0
    %12 = vsyncpa [#allocation10], 0
    %13 = vsyncpa [#allocation5], 0
    // Predicated region
    $region2: #{_sernn_seq_impl.1} parent=1 // pred_check
      _
    $region3: #{_sernn_seq_impl.1} parent=1 // pred_check_branch
      %15 = sbr.rel (0) target = $region5
    $region4: #{_sernn_seq_impl.1} parent=1 // pred_region
      %s17 = ssub.s32 1024, 1024
      %18 = vsyncadd [#allocation4], %s17
      %s19 = sshll.u32 [#allocation3], 4
      %s20 = int_to_ptr.vmem [resolvable:$true] %s19
      %25 = dma.hbm_to_vmem [thread:$0]  %s0, 1024, %s20, [#allocation4], 128, 128, 8
    $region5: #{_sernn_seq_impl.1} parent=1 // pred_fallthru
      _
    // Predicated region
    $region6: #{_sernn_seq_impl.1} parent=1 // pred_check
      _
    $region7: #{_sernn_seq_impl.1} parent=1 // pred_check_branch
      %27 = sbr.rel (0) target = $region9
    $region8: #{_sernn_seq_impl.1} parent=1 // pred_region
      %s29 = ssub.s32 128, 128
      %30 = vsyncadd [#allocation7], %s29
      %s32 = sshll.u32 [#allocation6], 4
      %s33 = int_to_ptr.vmem [resolvable:$true] %s32
      %35 = dma.hbm_to_vmem [thread:$0]  %s1, 128, %s33, [#allocation7]
    $region9: #{_sernn_seq_impl.1} parent=1 // pred_fallthru
      _
    // Predicated region
    $region10: #{_sernn_seq_impl.1} parent=1 // pred_check
      _
    $region11: #{_sernn_seq_impl.1} parent=1 // pred_check_branch
      %37 = sbr.rel (0) target = $region13
    $region12: #{_sernn_seq_impl.1} parent=1 // pred_region
      %s39 = ssub.s32 512, 512
      %40 = vsyncadd [#allocation7], %s39
      %s41 = sshll.u32 [#allocation8], 4
      %s42 = int_to_ptr.vmem [resolvable:$true] %s41
      %47 = dma.hbm_to_vmem [thread:$0]  %s2, 512, %s42, [#allocation7], 128, 128, 8
    $region13: #{_sernn_seq_impl.1} parent=1 // pred_fallthru
      _
    // Predicated region
    $region14: #{_sernn_seq_impl.1} parent=1 // pred_check
      _
    $region15: #{_sernn_seq_impl.1} parent=1 // pred_check_branch
      %49 = sbr.rel (0) target = $region17
    $region16: #{_sernn_seq_impl.1} parent=1 // pred_region
      _
    $region17: #{_sernn_seq_impl.1} parent=1 // pred_fallthru
      _
    // Predicated region
    $region18: #{_sernn_seq_impl.1} parent=1 // pred_check
      _
    $region19: #{_sernn_seq_impl.1} parent=1 // pred_check_branch
      %51 = sbr.rel (0) target = $region21
    $region20: #{_sernn_seq_impl.1} parent=1 // pred_region
      %s53 = ssub.s32 2048, 2048
      %54 = vsyncadd [#allocation10], %s53
      %s55 = sshll.u32 [#allocation9], 4
      %s56 = int_to_ptr.vmem [resolvable:$true] %s55
      %61 = dma.hbm_to_vmem [thread:$0]  %s4, 2048, %s56, [#allocation10], 128, 128, 8
    $region21: #{_sernn_seq_impl.1} parent=1 // pred_fallthru
      _
    // Predicated region
    $region22: #{_sernn_seq_impl.1} parent=1 // pred_check
      _
    $region23: #{_sernn_seq_impl.1} parent=1 // pred_check_branch
      %63 = sbr.rel (0) target = $region25
    $region24: #{_sernn_seq_impl.1} parent=1 // pred_region
      %64 = dma.done [#allocation4], 1024
    $region25: #{_sernn_seq_impl.1} parent=1 // pred_fallthru
      _
    // Predicated region
    $region26: #{_sernn_seq_impl.1} parent=1 // pred_check
      _
    $region27: #{_sernn_seq_impl.1} parent=1 // pred_check_branch
      %66 = sbr.rel (0) target = $region29
    $region28: #{_sernn_seq_impl.1} parent=1 // pred_region
      %67 = dma.done [#allocation7], 128
    $region29: #{_sernn_seq_impl.1} parent=1 // pred_fallthru
      _
    // Predicated region
    $region30: #{_sernn_seq_impl.1} parent=1 // pred_check
      _
    $region31: #{_sernn_seq_impl.1} parent=1 // pred_check_branch
      %69 = sbr.rel (0) target = $region33
    $region32: #{_sernn_seq_impl.1} parent=1 // pred_region
      %70 = dma.done [#allocation7], 512
    $region33: #{_sernn_seq_impl.1} parent=1 // pred_fallthru
      _
    // Predicated region
    $region34: #{_sernn_seq_impl.1} parent=1 // pred_check
      _
    $region35: #{_sernn_seq_impl.1} parent=1 // pred_check_branch
      %72 = sbr.rel (0) target = $region37
    $region36: #{_sernn_seq_impl.1} parent=1 // pred_region
      %73 = dma.done [#allocation10], 2048
    $region37: #{_sernn_seq_impl.1} parent=1 // pred_fallthru
      _
    %p74 = scmp.eq.s32.totalorder 0, 0
    // Predicated region
    $region38: #{_sernn_seq_impl.1} parent=1 // pred_check
      %p75 = pneg %p74
    $region39: #{_sernn_seq_impl.1} parent=1 // pred_check_branch
      %77 = sbr.rel (%p75) target = $region41
    $region40: #{_sernn_seq_impl.1} parent=1 // pred_region
      %v78 = vld [vmem:[#allocation6] sm:$0xff]
      %79 = vst [vmem:[#allocation2] sm:$0xff] %v78
    $region41: #{_sernn_seq_impl.1} parent=1 // pred_fallthru
      _
    %v80 = vld [vmem:[#allocation8] sm:$0xff]
    %v81 = vld [vmem:[#allocation8 + $0x8] sm:$0xff]
    %v82 = vld [vmem:[#allocation8 + $0x10] sm:$0xff]
    %v83 = vld [vmem:[#allocation8 + $0x18] sm:$0xff]
    %v84 = vld [vmem:[#allocation9] sm:$0xff]
    %v85 = vld [vmem:[#allocation9 + $0x8] sm:$0xff]
    %v86 = vld [vmem:[#allocation9 + $0x10] sm:$0xff]
    %v87 = vld [vmem:[#allocation9 + $0x18] sm:$0xff]
    %v88 = vld [vmem:[#allocation9 + $0x20] sm:$0xff]
    %v89 = vld [vmem:[#allocation9 + $0x28] sm:$0xff]
    %v90 = vld [vmem:[#allocation9 + $0x30] sm:$0xff]
    %v91 = vld [vmem:[#allocation9 + $0x38] sm:$0xff]
    %v92 = vld [vmem:[#allocation9 + $0x40] sm:$0xff]
    %v93 = vld [vmem:[#allocation9 + $0x48] sm:$0xff]
    %v94 = vld [vmem:[#allocation9 + $0x50] sm:$0xff]
    %v95 = vld [vmem:[#allocation9 + $0x58] sm:$0xff]
    %v96 = vld [vmem:[#allocation9 + $0x60] sm:$0xff]
    %v97 = vld [vmem:[#allocation9 + $0x68] sm:$0xff]
    %v98 = vld [vmem:[#allocation9 + $0x70] sm:$0xff]
    %v99 = vld [vmem:[#allocation9 + $0x78] sm:$0xff]
    %v100 = vld [vmem:[%s3] sm:$0x1]
    %v101 = vld [vmem:[#allocation2] sm:$0xff]
    %v102 = vld [vmem:[#allocation3] sm:$0xff]
    %103 = vmatprep.subr.mxu0 0.0
    %104 = vmatpush1.msra.mxu0 %v84
    %105 = vmatprep.subr.mxu0 0.0
    %106 = vmatpush1.msra.mxu0 %v85
    %107 = vmatprep.subr.mxu0 0.0
    %108 = vmatpush1.msra.mxu0 %v86
    %109 = vmatprep.subr.mxu0 0.0
    %110 = vmatpush1.msra.mxu0 %v87
    %111 = vmatprep.subr.mxu0 0.0
    %112 = vmatpush1.msra.mxu0 %v88
    %113 = vmatprep.subr.mxu0 0.0
    %114 = vmatpush1.msra.mxu0 %v89
    %115 = vmatprep.subr.mxu0 0.0
    %116 = vmatpush1.msra.mxu0 %v90
    %117 = vmatprep.subr.mxu0 0.0
    %118 = vmatpush1.msra.mxu0 %v91
    %119 = vmatprep.subr.mxu0 0.0
    %120 = vmatpush1.msra.mxu0 %v92
    %121 = vmatprep.subr.mxu0 0.0
    %122 = vmatpush1.msra.mxu0 %v93
    %123 = vmatprep.subr.mxu0 0.0
    %124 = vmatpush1.msra.mxu0 %v94
    %125 = vmatprep.subr.mxu0 0.0
    %126 = vmatpush1.msra.mxu0 %v95
    %127 = vmatprep.subr.mxu0 0.0
    %128 = vmatpush1.msra.mxu0 %v96
    %129 = vmatprep.subr.mxu0 0.0
    %130 = vmatpush1.msra.mxu0 %v97
    %131 = vmatprep.subr.mxu0 0.0
    %132 = vmatpush1.msra.mxu0 %v98
    %133 = vmatprep.subr.mxu0 0.0
    %134 = vmatpush1.msra.mxu0 %v99
    %135 = vmatprep.subr.mxu0 0.0
    %136 = vmatpush1.msra.mxu0 0.0
    %137 = vmatprep.subr.mxu0 0.0
    %138 = vmatpush1.msra.mxu0 0.0
    %139 = vmatprep.subr.mxu0 0.0
    %140 = vmatpush1.msra.mxu0 0.0
    %141 = vmatprep.subr.mxu0 0.0
    %142 = vmatpush1.msra.mxu0 0.0
    %143 = vmatprep.subr.mxu0 0.0
    %144 = vmatpush1.msra.mxu0 0.0
    %145 = vmatprep.subr.mxu0 0.0
    %146 = vmatpush1.msra.mxu0 0.0
    %147 = vmatprep.subr.mxu0 0.0
    %148 = vmatpush1.msra.mxu0 0.0
    %149 = vmatprep.subr.mxu0 0.0
    %150 = vmatpush1.msra.mxu0 0.0
    %151 = vmatprep.subr.mxu0 0.0
    %152 = vmatpush1.msra.mxu0 0.0
    %153 = vmatprep.subr.mxu0 0.0
    %154 = vmatpush1.msra.mxu0 0.0
    %155 = vmatprep.subr.mxu0 0.0
    %156 = vmatpush1.msra.mxu0 0.0
    %157 = vmatprep.subr.mxu0 0.0
    %158 = vmatpush1.msra.mxu0 0.0
    %159 = vmatprep.subr.mxu0 0.0
    %160 = vmatpush1.msra.mxu0 0.0
    %161 = vmatprep.subr.mxu0 0.0
    %162 = vmatpush1.msra.mxu0 0.0
    %163 = vmatprep.subr.mxu0 0.0
    %164 = vmatpush1.msra.mxu0 0.0
    %165 = vmatprep.subr.mxu0 0.0
    %166 = vmatpush1.msra.mxu0 0.0
    %167 = vmatprep.mubr.f32.mxu0 0.0
    %168 = vmatmul.mubr.f32.gmra.mrb[0].mxu0 %v101
    %v169 = vpop.f32.mrb[0].mxu0
    %v170 = vadd.f32 0.0, %v169
    %v171 = vpop.f32.mrb[0].mxu0
    %172 = vdwg.mxu0
    %vm173 = vcmask 261120
    %v175 = vsel %vm173, %v102, 0
    %177 = vmatprep.subr.mxu0 0.0
    %178 = vmatpush1.msra.mxu0 %v80
    %179 = vmatprep.subr.mxu0 0.0
    %180 = vmatpush1.msra.mxu0 %v81
    %181 = vmatprep.subr.mxu0 0.0
    %182 = vmatpush1.msra.mxu0 %v82
    %183 = vmatprep.subr.mxu0 0.0
    %184 = vmatpush1.msra.mxu0 %v83
    %185 = vmatprep.subr.mxu0 0.0
    %186 = vmatpush1.msra.mxu0 0.0
    %187 = vmatprep.subr.mxu0 0.0
    %188 = vmatpush1.msra.mxu0 0.0
    %189 = vmatprep.subr.mxu0 0.0
    %190 = vmatpush1.msra.mxu0 0.0
    %191 = vmatprep.subr.mxu0 0.0
    %192 = vmatpush1.msra.mxu0 0.0
    %193 = vmatprep.subr.mxu0 0.0
    %194 = vmatpush1.msra.mxu0 0.0
    %195 = vmatprep.subr.mxu0 0.0
    %196 = vmatpush1.msra.mxu0 0.0
    %197 = vmatprep.subr.mxu0 0.0
    %198 = vmatpush1.msra.mxu0 0.0
    %199 = vmatprep.subr.mxu0 0.0
    %200 = vmatpush1.msra.mxu0 0.0
    %201 = vmatprep.subr.mxu0 0.0
    %202 = vmatpush1.msra.mxu0 0.0
    %203 = vmatprep.subr.mxu0 0.0
    %204 = vmatpush1.msra.mxu0 0.0
    %205 = vmatprep.subr.mxu0 0.0
    %206 = vmatpush1.msra.mxu0 0.0
    %207 = vmatprep.subr.mxu0 0.0
    %208 = vmatpush1.msra.mxu0 0.0
    %209 = vmatprep.subr.mxu0 0.0
    %210 = vmatpush1.msra.mxu0 0.0
    %211 = vmatprep.subr.mxu0 0.0
    %212 = vmatpush1.msra.mxu0 0.0
    %213 = vmatprep.subr.mxu0 0.0
    %214 = vmatpush1.msra.mxu0 0.0
    %215 = vmatprep.subr.mxu0 0.0
    %216 = vmatpush1.msra.mxu0 0.0
    %217 = vmatprep.subr.mxu0 0.0
    %218 = vmatpush1.msra.mxu0 0.0
    %219 = vmatprep.subr.mxu0 0.0
    %220 = vmatpush1.msra.mxu0 0.0
    %221 = vmatprep.subr.mxu0 0.0
    %222 = vmatpush1.msra.mxu0 0.0
    %223 = vmatprep.subr.mxu0 0.0
    %224 = vmatpush1.msra.mxu0 0.0
    %225 = vmatprep.subr.mxu0 0.0
    %226 = vmatpush1.msra.mxu0 0.0
    %227 = vmatprep.subr.mxu0 0.0
    %228 = vmatpush1.msra.mxu0 0.0
    %229 = vmatprep.subr.mxu0 0.0
    %230 = vmatpush1.msra.mxu0 0.0
    %231 = vmatprep.subr.mxu0 0.0
    %232 = vmatpush1.msra.mxu0 0.0
    %233 = vmatprep.subr.mxu0 0.0
    %234 = vmatpush1.msra.mxu0 0.0
    %235 = vmatprep.subr.mxu0 0.0
    %236 = vmatpush1.msra.mxu0 0.0
    %237 = vmatprep.subr.mxu0 0.0
    %238 = vmatpush1.msra.mxu0 0.0
    %239 = vmatprep.subr.mxu0 0.0
    %240 = vmatpush1.msra.mxu0 0.0
    %241 = vmatprep.mubr.f32.mxu0 0.0
    %242 = vmatmul.mubr.f32.gmra.mrb[0].mxu0 %v175
    %v243 = vpop.f32.mrb[0].mxu0
    %v244 = vadd.f32 %v170, %v243
    %v245 = vpop.f32.mrb[0].mxu0
    %246 = vdwg.mxu0
    %v248 = vlaneseq
    %v249 = vshrl.u32 %v248, 7
    %v250 = vsub.s32 0, %v249
    %v251 = vrot.slane %v100, %v250
    %v253 = vadd.f32 %v244, %v251
    %v254 = vtanh.pop %v253
    %255 = vst [vmem:[#allocation11] sm:$0xff] %v254
    %s256 = scalar_lea.vmem [#allocation3], 8
    %v257 = vld [vmem:[%s256] sm:$0xff]
    %258 = vmatprep.subr.mxu0 0.0
    %259 = vmatpush1.msra.mxu0 %v84
    %260 = vmatprep.subr.mxu0 0.0
    %261 = vmatpush1.msra.mxu0 %v85
    %262 = vmatprep.subr.mxu0 0.0
    %263 = vmatpush1.msra.mxu0 %v86
    %264 = vmatprep.subr.mxu0 0.0
    %265 = vmatpush1.msra.mxu0 %v87
    %266 = vmatprep.subr.mxu0 0.0
    %267 = vmatpush1.msra.mxu0 %v88
    %268 = vmatprep.subr.mxu0 0.0
    %269 = vmatpush1.msra.mxu0 %v89
    %270 = vmatprep.subr.mxu0 0.0
    %271 = vmatpush1.msra.mxu0 %v90
    %272 = vmatprep.subr.mxu0 0.0
    %273 = vmatpush1.msra.mxu0 %v91
    %274 = vmatprep.subr.mxu0 0.0
    %275 = vmatpush1.msra.mxu0 %v92
    %276 = vmatprep.subr.mxu0 0.0
    %277 = vmatpush1.msra.mxu0 %v93
    %278 = vmatprep.subr.mxu0 0.0
    %279 = vmatpush1.msra.mxu0 %v94
    %280 = vmatprep.subr.mxu0 0.0
    %281 = vmatpush1.msra.mxu0 %v95
    %282 = vmatprep.subr.mxu0 0.0
    %283 = vmatpush1.msra.mxu0 %v96
    %284 = vmatprep.subr.mxu0 0.0
    %285 = vmatpush1.msra.mxu0 %v97
    %286 = vmatprep.subr.mxu0 0.0
    %287 = vmatpush1.msra.mxu0 %v98
    %288 = vmatprep.subr.mxu0 0.0
    %289 = vmatpush1.msra.mxu0 %v99
    %290 = vmatprep.subr.mxu0 0.0
    %291 = vmatpush1.msra.mxu0 0.0
    %292 = vmatprep.subr.mxu0 0.0
    %293 = vmatpush1.msra.mxu0 0.0
    %294 = vmatprep.subr.mxu0 0.0
    %295 = vmatpush1.msra.mxu0 0.0
    %296 = vmatprep.subr.mxu0 0.0
    %297 = vmatpush1.msra.mxu0 0.0
    %298 = vmatprep.subr.mxu0 0.0
    %299 = vmatpush1.msra.mxu0 0.0
    %300 = vmatprep.subr.mxu0 0.0
    %301 = vmatpush1.msra.mxu0 0.0
    %302 = vmatprep.subr.mxu0 0.0
    %303 = vmatpush1.msra.mxu0 0.0
    %304 = vmatprep.subr.mxu0 0.0
    %305 = vmatpush1.msra.mxu0 0.0
    %306 = vmatprep.subr.mxu0 0.0
    %307 = vmatpush1.msra.mxu0 0.0
    %308 = vmatprep.subr.mxu0 0.0
    %309 = vmatpush1.msra.mxu0 0.0
    %310 = vmatprep.subr.mxu0 0.0
    %311 = vmatpush1.msra.mxu0 0.0
    %312 = vmatprep.subr.mxu0 0.0
    %313 = vmatpush1.msra.mxu0 0.0
    %314 = vmatprep.subr.mxu0 0.0
    %315 = vmatpush1.msra.mxu0 0.0
    %316 = vmatprep.subr.mxu0 0.0
    %317 = vmatpush1.msra.mxu0 0.0
    %318 = vmatprep.subr.mxu0 0.0
    %319 = vmatpush1.msra.mxu0 0.0
    %320 = vmatprep.subr.mxu0 0.0
    %321 = vmatpush1.msra.mxu0 0.0
    %322 = vmatprep.mubr.f32.mxu0 0.0
    %323 = vmatmul.mubr.f32.gmra.mrb[0].mxu0 %v254
    %v324 = vpop.f32.mrb[0].mxu0
    %v325 = vadd.f32 0.0, %v324
    %v326 = vpop.f32.mrb[0].mxu0
    %327 = vdwg.mxu0
    %v329 = vsel %vm173, %v257, 0
    %331 = vmatprep.subr.mxu0 0.0
    %332 = vmatpush1.msra.mxu0 %v80
    %333 = vmatprep.subr.mxu0 0.0
    %334 = vmatpush1.msra.mxu0 %v81
    %335 = vmatprep.subr.mxu0 0.0
    %336 = vmatpush1.msra.mxu0 %v82
    %337 = vmatprep.subr.mxu0 0.0
    %338 = vmatpush1.msra.mxu0 %v83
    %339 = vmatprep.subr.mxu0 0.0
    %340 = vmatpush1.msra.mxu0 0.0
    %341 = vmatprep.subr.mxu0 0.0
    %342 = vmatpush1.msra.mxu0 0.0
    %343 = vmatprep.subr.mxu0 0.0
    %344 = vmatpush1.msra.mxu0 0.0
    %345 = vmatprep.subr.mxu0 0.0
    %346 = vmatpush1.msra.mxu0 0.0
    %347 = vmatprep.subr.mxu0 0.0
    %348 = vmatpush1.msra.mxu0 0.0
    %349 = vmatprep.subr.mxu0 0.0
    %350 = vmatpush1.msra.mxu0 0.0
    %351 = vmatprep.subr.mxu0 0.0
    %352 = vmatpush1.msra.mxu0 0.0
    %353 = vmatprep.subr.mxu0 0.0
    %354 = vmatpush1.msra.mxu0 0.0
    %355 = vmatprep.subr.mxu0 0.0
    %356 = vmatpush1.msra.mxu0 0.0
    %357 = vmatprep.subr.mxu0 0.0
    %358 = vmatpush1.msra.mxu0 0.0
    %359 = vmatprep.subr.mxu0 0.0
    %360 = vmatpush1.msra.mxu0 0.0
    %361 = vmatprep.subr.mxu0 0.0
    %362 = vmatpush1.msra.mxu0 0.0
    %363 = vmatprep.subr.mxu0 0.0
    %364 = vmatpush1.msra.mxu0 0.0
    %365 = vmatprep.subr.mxu0 0.0
    %366 = vmatpush1.msra.mxu0 0.0
    %367 = vmatprep.subr.mxu0 0.0
    %368 = vmatpush1.msra.mxu0 0.0
    %369 = vmatprep.subr.mxu0 0.0
    %370 = vmatpush1.msra.mxu0 0.0
    %371 = vmatprep.subr.mxu0 0.0
    %372 = vmatpush1.msra.mxu0 0.0
    %373 = vmatprep.subr.mxu0 0.0
    %374 = vmatpush1.msra.mxu0 0.0
    %375 = vmatprep.subr.mxu0 0.0
    %376 = vmatpush1.msra.mxu0 0.0
    %377 = vmatprep.subr.mxu0 0.0
    %378 = vmatpush1.msra.mxu0 0.0
    %379 = vmatprep.subr.mxu0 0.0
    %380 = vmatpush1.msra.mxu0 0.0
    %381 = vmatprep.subr.mxu0 0.0
    %382 = vmatpush1.msra.mxu0 0.0
    %383 = vmatprep.subr.mxu0 0.0
    %384 = vmatpush1.msra.mxu0 0.0
    %385 = vmatprep.subr.mxu0 0.0
    %386 = vmatpush1.msra.mxu0 0.0
    %387 = vmatprep.subr.mxu0 0.0
    %388 = vmatpush1.msra.mxu0 0.0
    %389 = vmatprep.subr.mxu0 0.0
    %390 = vmatpush1.msra.mxu0 0.0
    %391 = vmatprep.subr.mxu0 0.0
    %392 = vmatpush1.msra.mxu0 0.0
    %393 = vmatprep.subr.mxu0 0.0
    %394 = vmatpush1.msra.mxu0 0.0
    %395 = vmatprep.mubr.f32.mxu0 0.0
    %396 = vmatmul.mubr.f32.gmra.mrb[0].mxu0 %v329
    %v397 = vpop.f32.mrb[0].mxu0
    %v398 = vadd.f32 %v325, %v397
    %v399 = vpop.f32.mrb[0].mxu0
    %400 = vdwg.mxu0
    %v401 = vadd.f32 %v398, %v251
    %v402 = vtanh.pop %v401
    %s403 = scalar_lea.vmem [#allocation11], 8
    %404 = vst [vmem:[%s403] sm:$0xff] %v402
    %s405 = scalar_lea.vmem [#allocation3], 16
    %v406 = vld [vmem:[%s405] sm:$0xff]
    %407 = vmatprep.subr.mxu0 0.0
    %408 = vmatpush1.msra.mxu0 %v84
    %409 = vmatprep.subr.mxu0 0.0
    %410 = vmatpush1.msra.mxu0 %v85
    %411 = vmatprep.subr.mxu0 0.0
    %412 = vmatpush1.msra.mxu0 %v86
    %413 = vmatprep.subr.mxu0 0.0
    %414 = vmatpush1.msra.mxu0 %v87
    %415 = vmatprep.subr.mxu0 0.0
    %416 = vmatpush1.msra.mxu0 %v88
    %417 = vmatprep.subr.mxu0 0.0
    %418 = vmatpush1.msra.mxu0 %v89
    %419 = vmatprep.subr.mxu0 0.0
    %420 = vmatpush1.msra.mxu0 %v90
    %421 = vmatprep.subr.mxu0 0.0
    %422 = vmatpush1.msra.mxu0 %v91
    %423 = vmatprep.subr.mxu0 0.0
    %424 = vmatpush1.msra.mxu0 %v92
    %425 = vmatprep.subr.mxu0 0.0
    %426 = vmatpush1.msra.mxu0 %v93
    %427 = vmatprep.subr.mxu0 0.0
    %428 = vmatpush1.msra.mxu0 %v94
    %429 = vmatprep.subr.mxu0 0.0
    %430 = vmatpush1.msra.mxu0 %v95
    %431 = vmatprep.subr.mxu0 0.0
    %432 = vmatpush1.msra.mxu0 %v96
    %433 = vmatprep.subr.mxu0 0.0
    %434 = vmatpush1.msra.mxu0 %v97
    %435 = vmatprep.subr.mxu0 0.0
    %436 = vmatpush1.msra.mxu0 %v98
    %437 = vmatprep.subr.mxu0 0.0
    %438 = vmatpush1.msra.mxu0 %v99
    %439 = vmatprep.subr.mxu0 0.0
    %440 = vmatpush1.msra.mxu0 0.0
    %441 = vmatprep.subr.mxu0 0.0
    %442 = vmatpush1.msra.mxu0 0.0
    %443 = vmatprep.subr.mxu0 0.0
    %444 = vmatpush1.msra.mxu0 0.0
    %445 = vmatprep.subr.mxu0 0.0
    %446 = vmatpush1.msra.mxu0 0.0
    %447 = vmatprep.subr.mxu0 0.0
    %448 = vmatpush1.msra.mxu0 0.0
    %449 = vmatprep.subr.mxu0 0.0
    %450 = vmatpush1.msra.mxu0 0.0
    %451 = vmatprep.subr.mxu0 0.0
    %452 = vmatpush1.msra.mxu0 0.0
    %453 = vmatprep.subr.mxu0 0.0
    %454 = vmatpush1.msra.mxu0 0.0
    %455 = vmatprep.subr.mxu0 0.0
    %456 = vmatpush1.msra.mxu0 0.0
    %457 = vmatprep.subr.mxu0 0.0
    %458 = vmatpush1.msra.mxu0 0.0
    %459 = vmatprep.subr.mxu0 0.0
    %460 = vmatpush1.msra.mxu0 0.0
    %461 = vmatprep.subr.mxu0 0.0
    %462 = vmatpush1.msra.mxu0 0.0
    %463 = vmatprep.subr.mxu0 0.0
    %464 = vmatpush1.msra.mxu0 0.0
    %465 = vmatprep.subr.mxu0 0.0
    %466 = vmatpush1.msra.mxu0 0.0
    %467 = vmatprep.subr.mxu0 0.0
    %468 = vmatpush1.msra.mxu0 0.0
    %469 = vmatprep.subr.mxu0 0.0
    %470 = vmatpush1.msra.mxu0 0.0
    %471 = vmatprep.mubr.f32.mxu0 0.0
    %472 = vmatmul.mubr.f32.gmra.mrb[0].mxu0 %v402
    %v473 = vpop.f32.mrb[0].mxu0
    %v474 = vadd.f32 0.0, %v473
    %v475 = vpop.f32.mrb[0].mxu0
    %476 = vdwg.mxu0
    %v478 = vsel %vm173, %v406, 0
    %480 = vmatprep.subr.mxu0 0.0
    %481 = vmatpush1.msra.mxu0 %v80
    %482 = vmatprep.subr.mxu0 0.0
    %483 = vmatpush1.msra.mxu0 %v81
    %484 = vmatprep.subr.mxu0 0.0
    %485 = vmatpush1.msra.mxu0 %v82
    %486 = vmatprep.subr.mxu0 0.0
    %487 = vmatpush1.msra.mxu0 %v83
    %488 = vmatprep.subr.mxu0 0.0
    %489 = vmatpush1.msra.mxu0 0.0
    %490 = vmatprep.subr.mxu0 0.0
    %491 = vmatpush1.msra.mxu0 0.0
    %492 = vmatprep.subr.mxu0 0.0
    %493 = vmatpush1.msra.mxu0 0.0
    %494 = vmatprep.subr.mxu0 0.0
    %495 = vmatpush1.msra.mxu0 0.0
    %496 = vmatprep.subr.mxu0 0.0
    %497 = vmatpush1.msra.mxu0 0.0
    %498 = vmatprep.subr.mxu0 0.0
    %499 = vmatpush1.msra.mxu0 0.0
    %500 = vmatprep.subr.mxu0 0.0
    %501 = vmatpush1.msra.mxu0 0.0
    %502 = vmatprep.subr.mxu0 0.0
    %503 = vmatpush1.msra.mxu0 0.0
    %504 = vmatprep.subr.mxu0 0.0
    %505 = vmatpush1.msra.mxu0 0.0
    %506 = vmatprep.subr.mxu0 0.0
    %507 = vmatpush1.msra.mxu0 0.0
    %508 = vmatprep.subr.mxu0 0.0
    %509 = vmatpush1.msra.mxu0 0.0
    %510 = vmatprep.subr.mxu0 0.0
    %511 = vmatpush1.msra.mxu0 0.0
    %512 = vmatprep.subr.mxu0 0.0
    %513 = vmatpush1.msra.mxu0 0.0
    %514 = vmatprep.subr.mxu0 0.0
    %515 = vmatpush1.msra.mxu0 0.0
    %516 = vmatprep.subr.mxu0 0.0
    %517 = vmatpush1.msra.mxu0 0.0
    %518 = vmatprep.subr.mxu0 0.0
    %519 = vmatpush1.msra.mxu0 0.0
    %520 = vmatprep.subr.mxu0 0.0
    %521 = vmatpush1.msra.mxu0 0.0
    %522 = vmatprep.subr.mxu0 0.0
    %523 = vmatpush1.msra.mxu0 0.0
    %524 = vmatprep.subr.mxu0 0.0
    %525 = vmatpush1.msra.mxu0 0.0
    %526 = vmatprep.subr.mxu0 0.0
    %527 = vmatpush1.msra.mxu0 0.0
    %528 = vmatprep.subr.mxu0 0.0
    %529 = vmatpush1.msra.mxu0 0.0
    %530 = vmatprep.subr.mxu0 0.0
    %531 = vmatpush1.msra.mxu0 0.0
    %532 = vmatprep.subr.mxu0 0.0
    %533 = vmatpush1.msra.mxu0 0.0
    %534 = vmatprep.subr.mxu0 0.0
    %535 = vmatpush1.msra.mxu0 0.0
    %536 = vmatprep.subr.mxu0 0.0
    %537 = vmatpush1.msra.mxu0 0.0
    %538 = vmatprep.subr.mxu0 0.0
    %539 = vmatpush1.msra.mxu0 0.0
    %540 = vmatprep.subr.mxu0 0.0
    %541 = vmatpush1.msra.mxu0 0.0
    %542 = vmatprep.subr.mxu0 0.0
    %543 = vmatpush1.msra.mxu0 0.0
    %544 = vmatprep.mubr.f32.mxu0 0.0
    %545 = vmatmul.mubr.f32.gmra.mrb[0].mxu0 %v478
    %v546 = vpop.f32.mrb[0].mxu0
    %v547 = vadd.f32 %v474, %v546
    %v548 = vpop.f32.mrb[0].mxu0
    %549 = vdwg.mxu0
    %v550 = vadd.f32 %v547, %v251
    %v551 = vtanh.pop %v550
    %s552 = scalar_lea.vmem [#allocation11], 16
    %553 = vst [vmem:[%s552] sm:$0xff] %v551
    %s554 = scalar_lea.vmem [#allocation3], 24
    %v555 = vld [vmem:[%s554] sm:$0xff]
    %556 = vmatprep.subr.mxu0 0.0
    %557 = vmatpush1.msra.mxu0 %v84
    %558 = vmatprep.subr.mxu0 0.0
    %559 = vmatpush1.msra.mxu0 %v85
    %560 = vmatprep.subr.mxu0 0.0
    %561 = vmatpush1.msra.mxu0 %v86
    %562 = vmatprep.subr.mxu0 0.0
    %563 = vmatpush1.msra.mxu0 %v87
    %564 = vmatprep.subr.mxu0 0.0
    %565 = vmatpush1.msra.mxu0 %v88
    %566 = vmatprep.subr.mxu0 0.0
    %567 = vmatpush1.msra.mxu0 %v89
    %568 = vmatprep.subr.mxu0 0.0
    %569 = vmatpush1.msra.mxu0 %v90
    %570 = vmatprep.subr.mxu0 0.0
    %571 = vmatpush1.msra.mxu0 %v91
    %572 = vmatprep.subr.mxu0 0.0
    %573 = vmatpush1.msra.mxu0 %v92
    %574 = vmatprep.subr.mxu0 0.0
    %575 = vmatpush1.msra.mxu0 %v93
    %576 = vmatprep.subr.mxu0 0.0
    %577 = vmatpush1.msra.mxu0 %v94
    %578 = vmatprep.subr.mxu0 0.0
    %579 = vmatpush1.msra.mxu0 %v95
    %580 = vmatprep.subr.mxu0 0.0
    %581 = vmatpush1.msra.mxu0 %v96
    %582 = vmatprep.subr.mxu0 0.0
    %583 = vmatpush1.msra.mxu0 %v97
    %584 = vmatprep.subr.mxu0 0.0
    %585 = vmatpush1.msra.mxu0 %v98
    %586 = vmatprep.subr.mxu0 0.0
    %587 = vmatpush1.msra.mxu0 %v99
    %588 = vmatprep.subr.mxu0 0.0
    %589 = vmatpush1.msra.mxu0 0.0
    %590 = vmatprep.subr.mxu0 0.0
    %591 = vmatpush1.msra.mxu0 0.0
    %592 = vmatprep.subr.mxu0 0.0
    %593 = vmatpush1.msra.mxu0 0.0
    %594 = vmatprep.subr.mxu0 0.0
    %595 = vmatpush1.msra.mxu0 0.0
    %596 = vmatprep.subr.mxu0 0.0
    %597 = vmatpush1.msra.mxu0 0.0
    %598 = vmatprep.subr.mxu0 0.0
    %599 = vmatpush1.msra.mxu0 0.0
    %600 = vmatprep.subr.mxu0 0.0
    %601 = vmatpush1.msra.mxu0 0.0
    %602 = vmatprep.subr.mxu0 0.0
    %603 = vmatpush1.msra.mxu0 0.0
    %604 = vmatprep.subr.mxu0 0.0
    %605 = vmatpush1.msra.mxu0 0.0
    %606 = vmatprep.subr.mxu0 0.0
    %607 = vmatpush1.msra.mxu0 0.0
    %608 = vmatprep.subr.mxu0 0.0
    %609 = vmatpush1.msra.mxu0 0.0
    %610 = vmatprep.subr.mxu0 0.0
    %611 = vmatpush1.msra.mxu0 0.0
    %612 = vmatprep.subr.mxu0 0.0
    %613 = vmatpush1.msra.mxu0 0.0
    %614 = vmatprep.subr.mxu0 0.0
    %615 = vmatpush1.msra.mxu0 0.0
    %616 = vmatprep.subr.mxu0 0.0
    %617 = vmatpush1.msra.mxu0 0.0
    %618 = vmatprep.subr.mxu0 0.0
    %619 = vmatpush1.msra.mxu0 0.0
    %620 = vmatprep.mubr.f32.mxu0 0.0
    %621 = vmatmul.mubr.f32.gmra.mrb[0].mxu0 %v551
    %v622 = vpop.f32.mrb[0].mxu0
    %v623 = vadd.f32 0.0, %v622
    %v624 = vpop.f32.mrb[0].mxu0
    %625 = vdwg.mxu0
    %v627 = vsel %vm173, %v555, 0
    %629 = vmatprep.subr.mxu0 0.0
    %630 = vmatpush1.msra.mxu0 %v80
    %631 = vmatprep.subr.mxu0 0.0
    %632 = vmatpush1.msra.mxu0 %v81
    %633 = vmatprep.subr.mxu0 0.0
    %634 = vmatpush1.msra.mxu0 %v82
    %635 = vmatprep.subr.mxu0 0.0
    %636 = vmatpush1.msra.mxu0 %v83
    %637 = vmatprep.subr.mxu0 0.0
    %638 = vmatpush1.msra.mxu0 0.0
    %639 = vmatprep.subr.mxu0 0.0
    %640 = vmatpush1.msra.mxu0 0.0
    %641 = vmatprep.subr.mxu0 0.0
    %642 = vmatpush1.msra.mxu0 0.0
    %643 = vmatprep.subr.mxu0 0.0
    %644 = vmatpush1.msra.mxu0 0.0
    %645 = vmatprep.subr.mxu0 0.0
    %646 = vmatpush1.msra.mxu0 0.0
    %647 = vmatprep.subr.mxu0 0.0
    %648 = vmatpush1.msra.mxu0 0.0
    %649 = vmatprep.subr.mxu0 0.0
    %650 = vmatpush1.msra.mxu0 0.0
    %651 = vmatprep.subr.mxu0 0.0
    %652 = vmatpush1.msra.mxu0 0.0
    %653 = vmatprep.subr.mxu0 0.0
    %654 = vmatpush1.msra.mxu0 0.0
    %655 = vmatprep.subr.mxu0 0.0
    %656 = vmatpush1.msra.mxu0 0.0
    %657 = vmatprep.subr.mxu0 0.0
    %658 = vmatpush1.msra.mxu0 0.0
    %659 = vmatprep.subr.mxu0 0.0
    %660 = vmatpush1.msra.mxu0 0.0
    %661 = vmatprep.subr.mxu0 0.0
    %662 = vmatpush1.msra.mxu0 0.0
    %663 = vmatprep.subr.mxu0 0.0
    %664 = vmatpush1.msra.mxu0 0.0
    %665 = vmatprep.subr.mxu0 0.0
    %666 = vmatpush1.msra.mxu0 0.0
    %667 = vmatprep.subr.mxu0 0.0
    %668 = vmatpush1.msra.mxu0 0.0
    %669 = vmatprep.subr.mxu0 0.0
    %670 = vmatpush1.msra.mxu0 0.0
    %671 = vmatprep.subr.mxu0 0.0
    %672 = vmatpush1.msra.mxu0 0.0
    %673 = vmatprep.subr.mxu0 0.0
    %674 = vmatpush1.msra.mxu0 0.0
    %675 = vmatprep.subr.mxu0 0.0
    %676 = vmatpush1.msra.mxu0 0.0
    %677 = vmatprep.subr.mxu0 0.0
    %678 = vmatpush1.msra.mxu0 0.0
    %679 = vmatprep.subr.mxu0 0.0
    %680 = vmatpush1.msra.mxu0 0.0
    %681 = vmatprep.subr.mxu0 0.0
    %682 = vmatpush1.msra.mxu0 0.0
    %683 = vmatprep.subr.mxu0 0.0
    %684 = vmatpush1.msra.mxu0 0.0
    %685 = vmatprep.subr.mxu0 0.0
    %686 = vmatpush1.msra.mxu0 0.0
    %687 = vmatprep.subr.mxu0 0.0
    %688 = vmatpush1.msra.mxu0 0.0
    %689 = vmatprep.subr.mxu0 0.0
    %690 = vmatpush1.msra.mxu0 0.0
    %691 = vmatprep.subr.mxu0 0.0
    %692 = vmatpush1.msra.mxu0 0.0
    %693 = vmatprep.mubr.f32.mxu0 0.0
    %694 = vmatmul.mubr.f32.gmra.mrb[0].mxu0 %v627
    %v695 = vpop.f32.mrb[0].mxu0
    %v696 = vadd.f32 %v623, %v695
    %v697 = vpop.f32.mrb[0].mxu0
    %698 = vdwg.mxu0
    %v699 = vadd.f32 %v696, %v251
    %v700 = vtanh.pop %v699
    %s701 = scalar_lea.vmem [#allocation11], 24
    %702 = vst [vmem:[%s701] sm:$0xff] %v700
    %s703 = scalar_lea.vmem [#allocation3], 32
    %v704 = vld [vmem:[%s703] sm:$0xff]
    %705 = vmatprep.subr.mxu0 0.0
    %706 = vmatpush1.msra.mxu0 %v84
    %707 = vmatprep.subr.mxu0 0.0
    %708 = vmatpush1.msra.mxu0 %v85
    %709 = vmatprep.subr.mxu0 0.0
    %710 = vmatpush1.msra.mxu0 %v86
    %711 = vmatprep.subr.mxu0 0.0
    %712 = vmatpush1.msra.mxu0 %v87
    %713 = vmatprep.subr.mxu0 0.0
    %714 = vmatpush1.msra.mxu0 %v88
    %715 = vmatprep.subr.mxu0 0.0
    %716 = vmatpush1.msra.mxu0 %v89
    %717 = vmatprep.subr.mxu0 0.0
    %718 = vmatpush1.msra.mxu0 %v90
    %719 = vmatprep.subr.mxu0 0.0
    %720 = vmatpush1.msra.mxu0 %v91
    %721 = vmatprep.subr.mxu0 0.0
    %722 = vmatpush1.msra.mxu0 %v92
    %723 = vmatprep.subr.mxu0 0.0
    %724 = vmatpush1.msra.mxu0 %v93
    %725 = vmatprep.subr.mxu0 0.0
    %726 = vmatpush1.msra.mxu0 %v94
    %727 = vmatprep.subr.mxu0 0.0
    %728 = vmatpush1.msra.mxu0 %v95
    %729 = vmatprep.subr.mxu0 0.0
    %730 = vmatpush1.msra.mxu0 %v96
    %731 = vmatprep.subr.mxu0 0.0
    %732 = vmatpush1.msra.mxu0 %v97
    %733 = vmatprep.subr.mxu0 0.0
    %734 = vmatpush1.msra.mxu0 %v98
    %735 = vmatprep.subr.mxu0 0.0
    %736 = vmatpush1.msra.mxu0 %v99
    %737 = vmatprep.subr.mxu0 0.0
    %738 = vmatpush1.msra.mxu0 0.0
    %739 = vmatprep.subr.mxu0 0.0
    %740 = vmatpush1.msra.mxu0 0.0
    %741 = vmatprep.subr.mxu0 0.0
    %742 = vmatpush1.msra.mxu0 0.0
    %743 = vmatprep.subr.mxu0 0.0
    %744 = vmatpush1.msra.mxu0 0.0
    %745 = vmatprep.subr.mxu0 0.0
    %746 = vmatpush1.msra.mxu0 0.0
    %747 = vmatprep.subr.mxu0 0.0
    %748 = vmatpush1.msra.mxu0 0.0
    %749 = vmatprep.subr.mxu0 0.0
    %750 = vmatpush1.msra.mxu0 0.0
    %751 = vmatprep.subr.mxu0 0.0
    %752 = vmatpush1.msra.mxu0 0.0
    %753 = vmatprep.subr.mxu0 0.0
    %754 = vmatpush1.msra.mxu0 0.0
    %755 = vmatprep.subr.mxu0 0.0
    %756 = vmatpush1.msra.mxu0 0.0
    %757 = vmatprep.subr.mxu0 0.0
    %758 = vmatpush1.msra.mxu0 0.0
    %759 = vmatprep.subr.mxu0 0.0
    %760 = vmatpush1.msra.mxu0 0.0
    %761 = vmatprep.subr.mxu0 0.0
    %762 = vmatpush1.msra.mxu0 0.0
    %763 = vmatprep.subr.mxu0 0.0
    %764 = vmatpush1.msra.mxu0 0.0
    %765 = vmatprep.subr.mxu0 0.0
    %766 = vmatpush1.msra.mxu0 0.0
    %767 = vmatprep.subr.mxu0 0.0
    %768 = vmatpush1.msra.mxu0 0.0
    %769 = vmatprep.mubr.f32.mxu0 0.0
    %770 = vmatmul.mubr.f32.gmra.mrb[0].mxu0 %v700
    %v771 = vpop.f32.mrb[0].mxu0
    %v772 = vadd.f32 0.0, %v771
    %v773 = vpop.f32.mrb[0].mxu0
    %774 = vdwg.mxu0
    %v776 = vsel %vm173, %v704, 0
    %778 = vmatprep.subr.mxu0 0.0
    %779 = vmatpush1.msra.mxu0 %v80
    %780 = vmatprep.subr.mxu0 0.0
    %781 = vmatpush1.msra.mxu0 %v81
    %782 = vmatprep.subr.mxu0 0.0
    %783 = vmatpush1.msra.mxu0 %v82
    %784 = vmatprep.subr.mxu0 0.0
    %785 = vmatpush1.msra.mxu0 %v83
    %786 = vmatprep.subr.mxu0 0.0
    %787 = vmatpush1.msra.mxu0 0.0
    %788 = vmatprep.subr.mxu0 0.0
    %789 = vmatpush1.msra.mxu0 0.0
    %790 = vmatprep.subr.mxu0 0.0
    %791 = vmatpush1.msra.mxu0 0.0
    %792 = vmatprep.subr.mxu0 0.0
    %793 = vmatpush1.msra.mxu0 0.0
    %794 = vmatprep.subr.mxu0 0.0
    %795 = vmatpush1.msra.mxu0 0.0
    %796 = vmatprep.subr.mxu0 0.0
    %797 = vmatpush1.msra.mxu0 0.0
    %798 = vmatprep.subr.mxu0 0.0
    %799 = vmatpush1.msra.mxu0 0.0
    %800 = vmatprep.subr.mxu0 0.0
    %801 = vmatpush1.msra.mxu0 0.0
    %802 = vmatprep.subr.mxu0 0.0
    %803 = vmatpush1.msra.mxu0 0.0
    %804 = vmatprep.subr.mxu0 0.0
    %805 = vmatpush1.msra.mxu0 0.0
    %806 = vmatprep.subr.mxu0 0.0
    %807 = vmatpush1.msra.mxu0 0.0
    %808 = vmatprep.subr.mxu0 0.0
    %809 = vmatpush1.msra.mxu0 0.0
    %810 = vmatprep.subr.mxu0 0.0
    %811 = vmatpush1.msra.mxu0 0.0
    %812 = vmatprep.subr.mxu0 0.0
    %813 = vmatpush1.msra.mxu0 0.0
    %814 = vmatprep.subr.mxu0 0.0
    %815 = vmatpush1.msra.mxu0 0.0
    %816 = vmatprep.subr.mxu0 0.0
    %817 = vmatpush1.msra.mxu0 0.0
    %818 = vmatprep.subr.mxu0 0.0
    %819 = vmatpush1.msra.mxu0 0.0
    %820 = vmatprep.subr.mxu0 0.0
    %821 = vmatpush1.msra.mxu0 0.0
    %822 = vmatprep.subr.mxu0 0.0
    %823 = vmatpush1.msra.mxu0 0.0
    %824 = vmatprep.subr.mxu0 0.0
    %825 = vmatpush1.msra.mxu0 0.0
    %826 = vmatprep.subr.mxu0 0.0
    %827 = vmatpush1.msra.mxu0 0.0
    %828 = vmatprep.subr.mxu0 0.0
    %829 = vmatpush1.msra.mxu0 0.0
    %830 = vmatprep.subr.mxu0 0.0
    %831 = vmatpush1.msra.mxu0 0.0
    %832 = vmatprep.subr.mxu0 0.0
    %833 = vmatpush1.msra.mxu0 0.0
    %834 = vmatprep.subr.mxu0 0.0
    %835 = vmatpush1.msra.mxu0 0.0
    %836 = vmatprep.subr.mxu0 0.0
    %837 = vmatpush1.msra.mxu0 0.0
    %838 = vmatprep.subr.mxu0 0.0
    %839 = vmatpush1.msra.mxu0 0.0
    %840 = vmatprep.subr.mxu0 0.0
    %841 = vmatpush1.msra.mxu0 0.0
    %842 = vmatprep.mubr.f32.mxu0 0.0
    %843 = vmatmul.mubr.f32.gmra.mrb[0].mxu0 %v776
    %v844 = vpop.f32.mrb[0].mxu0
    %v845 = vadd.f32 %v772, %v844
    %v846 = vpop.f32.mrb[0].mxu0
    %847 = vdwg.mxu0
    %v848 = vadd.f32 %v845, %v251
    %v849 = vtanh.pop %v848
    %s850 = scalar_lea.vmem [#allocation11], 32
    %851 = vst [vmem:[%s850] sm:$0xff] %v849
    %s852 = scalar_lea.vmem [#allocation3], 40
    %v853 = vld [vmem:[%s852] sm:$0xff]
    %854 = vmatprep.subr.mxu0 0.0
    %855 = vmatpush1.msra.mxu0 %v84
    %856 = vmatprep.subr.mxu0 0.0
    %857 = vmatpush1.msra.mxu0 %v85
    %858 = vmatprep.subr.mxu0 0.0
    %859 = vmatpush1.msra.mxu0 %v86
    %860 = vmatprep.subr.mxu0 0.0
    %861 = vmatpush1.msra.mxu0 %v87
    %862 = vmatprep.subr.mxu0 0.0
    %863 = vmatpush1.msra.mxu0 %v88
    %864 = vmatprep.subr.mxu0 0.0
    %865 = vmatpush1.msra.mxu0 %v89
    %866 = vmatprep.subr.mxu0 0.0
    %867 = vmatpush1.msra.mxu0 %v90
    %868 = vmatprep.subr.mxu0 0.0
    %869 = vmatpush1.msra.mxu0 %v91
    %870 = vmatprep.subr.mxu0 0.0
    %871 = vmatpush1.msra.mxu0 %v92
    %872 = vmatprep.subr.mxu0 0.0
    %873 = vmatpush1.msra.mxu0 %v93
    %874 = vmatprep.subr.mxu0 0.0
    %875 = vmatpush1.msra.mxu0 %v94
    %876 = vmatprep.subr.mxu0 0.0
    %877 = vmatpush1.msra.mxu0 %v95
    %878 = vmatprep.subr.mxu0 0.0
    %879 = vmatpush1.msra.mxu0 %v96
    %880 = vmatprep.subr.mxu0 0.0
    %881 = vmatpush1.msra.mxu0 %v97
    %882 = vmatprep.subr.mxu0 0.0
    %883 = vmatpush1.msra.mxu0 %v98
    %884 = vmatprep.subr.mxu0 0.0
    %885 = vmatpush1.msra.mxu0 %v99
    %886 = vmatprep.subr.mxu0 0.0
    %887 = vmatpush1.msra.mxu0 0.0
    %888 = vmatprep.subr.mxu0 0.0
    %889 = vmatpush1.msra.mxu0 0.0
    %890 = vmatprep.subr.mxu0 0.0
    %891 = vmatpush1.msra.mxu0 0.0
    %892 = vmatprep.subr.mxu0 0.0
    %893 = vmatpush1.msra.mxu0 0.0
    %894 = vmatprep.subr.mxu0 0.0
    %895 = vmatpush1.msra.mxu0 0.0
    %896 = vmatprep.subr.mxu0 0.0
    %897 = vmatpush1.msra.mxu0 0.0
    %898 = vmatprep.subr.mxu0 0.0
    %899 = vmatpush1.msra.mxu0 0.0
    %900 = vmatprep.subr.mxu0 0.0
    %901 = vmatpush1.msra.mxu0 0.0
    %902 = vmatprep.subr.mxu0 0.0
    %903 = vmatpush1.msra.mxu0 0.0
    %904 = vmatprep.subr.mxu0 0.0
    %905 = vmatpush1.msra.mxu0 0.0
    %906 = vmatprep.subr.mxu0 0.0
    %907 = vmatpush1.msra.mxu0 0.0
    %908 = vmatprep.subr.mxu0 0.0
    %909 = vmatpush1.msra.mxu0 0.0
    %910 = vmatprep.subr.mxu0 0.0
    %911 = vmatpush1.msra.mxu0 0.0
    %912 = vmatprep.subr.mxu0 0.0
    %913 = vmatpush1.msra.mxu0 0.0
    %914 = vmatprep.subr.mxu0 0.0
    %915 = vmatpush1.msra.mxu0 0.0
    %916 = vmatprep.subr.mxu0 0.0
    %917 = vmatpush1.msra.mxu0 0.0
    %918 = vmatprep.mubr.f32.mxu0 0.0
    %919 = vmatmul.mubr.f32.gmra.mrb[0].mxu0 %v849
    %v920 = vpop.f32.mrb[0].mxu0
    %v921 = vadd.f32 0.0, %v920
    %v922 = vpop.f32.mrb[0].mxu0
    %923 = vdwg.mxu0
    %v925 = vsel %vm173, %v853, 0
    %927 = vmatprep.subr.mxu0 0.0
    %928 = vmatpush1.msra.mxu0 %v80
    %929 = vmatprep.subr.mxu0 0.0
    %930 = vmatpush1.msra.mxu0 %v81
    %931 = vmatprep.subr.mxu0 0.0
    %932 = vmatpush1.msra.mxu0 %v82
    %933 = vmatprep.subr.mxu0 0.0
    %934 = vmatpush1.msra.mxu0 %v83
    %935 = vmatprep.subr.mxu0 0.0
    %936 = vmatpush1.msra.mxu0 0.0
    %937 = vmatprep.subr.mxu0 0.0
    %938 = vmatpush1.msra.mxu0 0.0
    %939 = vmatprep.subr.mxu0 0.0
    %940 = vmatpush1.msra.mxu0 0.0
    %941 = vmatprep.subr.mxu0 0.0
    %942 = vmatpush1.msra.mxu0 0.0
    %943 = vmatprep.subr.mxu0 0.0
    %944 = vmatpush1.msra.mxu0 0.0
    %945 = vmatprep.subr.mxu0 0.0
    %946 = vmatpush1.msra.mxu0 0.0
    %947 = vmatprep.subr.mxu0 0.0
    %948 = vmatpush1.msra.mxu0 0.0
    %949 = vmatprep.subr.mxu0 0.0
    %950 = vmatpush1.msra.mxu0 0.0
    %951 = vmatprep.subr.mxu0 0.0
    %952 = vmatpush1.msra.mxu0 0.0
    %953 = vmatprep.subr.mxu0 0.0
    %954 = vmatpush1.msra.mxu0 0.0
    %955 = vmatprep.subr.mxu0 0.0
    %956 = vmatpush1.msra.mxu0 0.0
    %957 = vmatprep.subr.mxu0 0.0
    %958 = vmatpush1.msra.mxu0 0.0
    %959 = vmatprep.subr.mxu0 0.0
    %960 = vmatpush1.msra.mxu0 0.0
    %961 = vmatprep.subr.mxu0 0.0
    %962 = vmatpush1.msra.mxu0 0.0
    %963 = vmatprep.subr.mxu0 0.0
    %964 = vmatpush1.msra.mxu0 0.0
    %965 = vmatprep.subr.mxu0 0.0
    %966 = vmatpush1.msra.mxu0 0.0
    %967 = vmatprep.subr.mxu0 0.0
    %968 = vmatpush1.msra.mxu0 0.0
    %969 = vmatprep.subr.mxu0 0.0
    %970 = vmatpush1.msra.mxu0 0.0
    %971 = vmatprep.subr.mxu0 0.0
    %972 = vmatpush1.msra.mxu0 0.0
    %973 = vmatprep.subr.mxu0 0.0
    %974 = vmatpush1.msra.mxu0 0.0
    %975 = vmatprep.subr.mxu0 0.0
    %976 = vmatpush1.msra.mxu0 0.0
    %977 = vmatprep.subr.mxu0 0.0
    %978 = vmatpush1.msra.mxu0 0.0
    %979 = vmatprep.subr.mxu0 0.0
    %980 = vmatpush1.msra.mxu0 0.0
    %981 = vmatprep.subr.mxu0 0.0
    %982 = vmatpush1.msra.mxu0 0.0
    %983 = vmatprep.subr.mxu0 0.0
    %984 = vmatpush1.msra.mxu0 0.0
    %985 = vmatprep.subr.mxu0 0.0
    %986 = vmatpush1.msra.mxu0 0.0
    %987 = vmatprep.subr.mxu0 0.0
    %988 = vmatpush1.msra.mxu0 0.0
    %989 = vmatprep.subr.mxu0 0.0
    %990 = vmatpush1.msra.mxu0 0.0
    %991 = vmatprep.mubr.f32.mxu0 0.0
    %992 = vmatmul.mubr.f32.gmra.mrb[0].mxu0 %v925
    %v993 = vpop.f32.mrb[0].mxu0
    %v994 = vadd.f32 %v921, %v993
    %v995 = vpop.f32.mrb[0].mxu0
    %996 = vdwg.mxu0
    %v997 = vadd.f32 %v994, %v251
    %v998 = vtanh.pop %v997
    %s999 = scalar_lea.vmem [#allocation11], 40
    %1000 = vst [vmem:[%s999] sm:$0xff] %v998
    %s1001 = scalar_lea.vmem [#allocation3], 48
    %v1002 = vld [vmem:[%s1001] sm:$0xff]
    %1003 = vmatprep.subr.mxu0 0.0
    %1004 = vmatpush1.msra.mxu0 %v84
    %1005 = vmatprep.subr.mxu0 0.0
    %1006 = vmatpush1.msra.mxu0 %v85
    %1007 = vmatprep.subr.mxu0 0.0
    %1008 = vmatpush1.msra.mxu0 %v86
    %1009 = vmatprep.subr.mxu0 0.0
    %1010 = vmatpush1.msra.mxu0 %v87
    %1011 = vmatprep.subr.mxu0 0.0
    %1012 = vmatpush1.msra.mxu0 %v88
    %1013 = vmatprep.subr.mxu0 0.0
    %1014 = vmatpush1.msra.mxu0 %v89
    %1015 = vmatprep.subr.mxu0 0.0
    %1016 = vmatpush1.msra.mxu0 %v90
    %1017 = vmatprep.subr.mxu0 0.0
    %1018 = vmatpush1.msra.mxu0 %v91
    %1019 = vmatprep.subr.mxu0 0.0
    %1020 = vmatpush1.msra.mxu0 %v92
    %1021 = vmatprep.subr.mxu0 0.0
    %1022 = vmatpush1.msra.mxu0 %v93
    %1023 = vmatprep.subr.mxu0 0.0
    %1024 = vmatpush1.msra.mxu0 %v94
    %1025 = vmatprep.subr.mxu0 0.0
    %1026 = vmatpush1.msra.mxu0 %v95
    %1027 = vmatprep.subr.mxu0 0.0
    %1028 = vmatpush1.msra.mxu0 %v96
    %1029 = vmatprep.subr.mxu0 0.0
    %1030 = vmatpush1.msra.mxu0 %v97
    %1031 = vmatprep.subr.mxu0 0.0
    %1032 = vmatpush1.msra.mxu0 %v98
    %1033 = vmatprep.subr.mxu0 0.0
    %1034 = vmatpush1.msra.mxu0 %v99
    %1035 = vmatprep.subr.mxu0 0.0
    %1036 = vmatpush1.msra.mxu0 0.0
    %1037 = vmatprep.subr.mxu0 0.0
    %1038 = vmatpush1.msra.mxu0 0.0
    %1039 = vmatprep.subr.mxu0 0.0
    %1040 = vmatpush1.msra.mxu0 0.0
    %1041 = vmatprep.subr.mxu0 0.0
    %1042 = vmatpush1.msra.mxu0 0.0
    %1043 = vmatprep.subr.mxu0 0.0
    %1044 = vmatpush1.msra.mxu0 0.0
    %1045 = vmatprep.subr.mxu0 0.0
    %1046 = vmatpush1.msra.mxu0 0.0
    %1047 = vmatprep.subr.mxu0 0.0
    %1048 = vmatpush1.msra.mxu0 0.0
    %1049 = vmatprep.subr.mxu0 0.0
    %1050 = vmatpush1.msra.mxu0 0.0
    %1051 = vmatprep.subr.mxu0 0.0
    %1052 = vmatpush1.msra.mxu0 0.0
    %1053 = vmatprep.subr.mxu0 0.0
    %1054 = vmatpush1.msra.mxu0 0.0
    %1055 = vmatprep.subr.mxu0 0.0
    %1056 = vmatpush1.msra.mxu0 0.0
    %1057 = vmatprep.subr.mxu0 0.0
    %1058 = vmatpush1.msra.mxu0 0.0
    %1059 = vmatprep.subr.mxu0 0.0
    %1060 = vmatpush1.msra.mxu0 0.0
    %1061 = vmatprep.subr.mxu0 0.0
    %1062 = vmatpush1.msra.mxu0 0.0
    %1063 = vmatprep.subr.mxu0 0.0
    %1064 = vmatpush1.msra.mxu0 0.0
    %1065 = vmatprep.subr.mxu0 0.0
    %1066 = vmatpush1.msra.mxu0 0.0
    %1067 = vmatprep.mubr.f32.mxu0 0.0
    %1068 = vmatmul.mubr.f32.gmra.mrb[0].mxu0 %v998
    %v1069 = vpop.f32.mrb[0].mxu0
    %v1070 = vadd.f32 0.0, %v1069
    %v1071 = vpop.f32.mrb[0].mxu0
    %1072 = vdwg.mxu0
    %v1074 = vsel %vm173, %v1002, 0
    %1076 = vmatprep.subr.mxu0 0.0
    %1077 = vmatpush1.msra.mxu0 %v80
    %1078 = vmatprep.subr.mxu0 0.0
    %1079 = vmatpush1.msra.mxu0 %v81
    %1080 = vmatprep.subr.mxu0 0.0
    %1081 = vmatpush1.msra.mxu0 %v82
    %1082 = vmatprep.subr.mxu0 0.0
    %1083 = vmatpush1.msra.mxu0 %v83
    %1084 = vmatprep.subr.mxu0 0.0
    %1085 = vmatpush1.msra.mxu0 0.0
    %1086 = vmatprep.subr.mxu0 0.0
    %1087 = vmatpush1.msra.mxu0 0.0
    %1088 = vmatprep.subr.mxu0 0.0
    %1089 = vmatpush1.msra.mxu0 0.0
    %1090 = vmatprep.subr.mxu0 0.0
    %1091 = vmatpush1.msra.mxu0 0.0
    %1092 = vmatprep.subr.mxu0 0.0
    %1093 = vmatpush1.msra.mxu0 0.0
    %1094 = vmatprep.subr.mxu0 0.0
    %1095 = vmatpush1.msra.mxu0 0.0
    %1096 = vmatprep.subr.mxu0 0.0
    %1097 = vmatpush1.msra.mxu0 0.0
    %1098 = vmatprep.subr.mxu0 0.0
    %1099 = vmatpush1.msra.mxu0 0.0
    %1100 = vmatprep.subr.mxu0 0.0
    %1101 = vmatpush1.msra.mxu0 0.0
    %1102 = vmatprep.subr.mxu0 0.0
    %1103 = vmatpush1.msra.mxu0 0.0
    %1104 = vmatprep.subr.mxu0 0.0
    %1105 = vmatpush1.msra.mxu0 0.0
    %1106 = vmatprep.subr.mxu0 0.0
    %1107 = vmatpush1.msra.mxu0 0.0
    %1108 = vmatprep.subr.mxu0 0.0
    %1109 = vmatpush1.msra.mxu0 0.0
    %1110 = vmatprep.subr.mxu0 0.0
    %1111 = vmatpush1.msra.mxu0 0.0
    %1112 = vmatprep.subr.mxu0 0.0
    %1113 = vmatpush1.msra.mxu0 0.0
    %1114 = vmatprep.subr.mxu0 0.0
    %1115 = vmatpush1.msra.mxu0 0.0
    %1116 = vmatprep.subr.mxu0 0.0
    %1117 = vmatpush1.msra.mxu0 0.0
    %1118 = vmatprep.subr.mxu0 0.0
    %1119 = vmatpush1.msra.mxu0 0.0
    %1120 = vmatprep.subr.mxu0 0.0
    %1121 = vmatpush1.msra.mxu0 0.0
    %1122 = vmatprep.subr.mxu0 0.0
    %1123 = vmatpush1.msra.mxu0 0.0
    %1124 = vmatprep.subr.mxu0 0.0
    %1125 = vmatpush1.msra.mxu0 0.0
    %1126 = vmatprep.subr.mxu0 0.0
    %1127 = vmatpush1.msra.mxu0 0.0
    %1128 = vmatprep.subr.mxu0 0.0
    %1129 = vmatpush1.msra.mxu0 0.0
    %1130 = vmatprep.subr.mxu0 0.0
    %1131 = vmatpush1.msra.mxu0 0.0
    %1132 = vmatprep.subr.mxu0 0.0
    %1133 = vmatpush1.msra.mxu0 0.0
    %1134 = vmatprep.subr.mxu0 0.0
    %1135 = vmatpush1.msra.mxu0 0.0
    %1136 = vmatprep.subr.mxu0 0.0
    %1137 = vmatpush1.msra.mxu0 0.0
    %1138 = vmatprep.subr.mxu0 0.0
    %1139 = vmatpush1.msra.mxu0 0.0
    %1140 = vmatprep.mubr.f32.mxu0 0.0
    %1141 = vmatmul.mubr.f32.gmra.mrb[0].mxu0 %v1074
    %v1142 = vpop.f32.mrb[0].mxu0
    %v1143 = vadd.f32 %v1070, %v1142
    %v1144 = vpop.f32.mrb[0].mxu0
    %1145 = vdwg.mxu0
    %v1146 = vadd.f32 %v1143, %v251
    %v1147 = vtanh.pop %v1146
    %s1148 = scalar_lea.vmem [#allocation11], 48
    %1149 = vst [vmem:[%s1148] sm:$0xff] %v1147
    %s1150 = scalar_lea.vmem [#allocation3], 56
    %v1151 = vld [vmem:[%s1150] sm:$0xff]
    %1152 = vmatprep.subr.mxu0 0.0
    %1153 = vmatpush1.msra.mxu0 %v84
    %1154 = vmatprep.subr.mxu0 0.0
    %1155 = vmatpush1.msra.mxu0 %v85
    %1156 = vmatprep.subr.mxu0 0.0
    %1157 = vmatpush1.msra.mxu0 %v86
    %1158 = vmatprep.subr.mxu0 0.0
    %1159 = vmatpush1.msra.mxu0 %v87
    %1160 = vmatprep.subr.mxu0 0.0
    %1161 = vmatpush1.msra.mxu0 %v88
    %1162 = vmatprep.subr.mxu0 0.0
    %1163 = vmatpush1.msra.mxu0 %v89
    %1164 = vmatprep.subr.mxu0 0.0
    %1165 = vmatpush1.msra.mxu0 %v90
    %1166 = vmatprep.subr.mxu0 0.0
    %1167 = vmatpush1.msra.mxu0 %v91
    %1168 = vmatprep.subr.mxu0 0.0
    %1169 = vmatpush1.msra.mxu0 %v92
    %1170 = vmatprep.subr.mxu0 0.0
    %1171 = vmatpush1.msra.mxu0 %v93
    %1172 = vmatprep.subr.mxu0 0.0
    %1173 = vmatpush1.msra.mxu0 %v94
    %1174 = vmatprep.subr.mxu0 0.0
    %1175 = vmatpush1.msra.mxu0 %v95
    %1176 = vmatprep.subr.mxu0 0.0
    %1177 = vmatpush1.msra.mxu0 %v96
    %1178 = vmatprep.subr.mxu0 0.0
    %1179 = vmatpush1.msra.mxu0 %v97
    %1180 = vmatprep.subr.mxu0 0.0
    %1181 = vmatpush1.msra.mxu0 %v98
    %1182 = vmatprep.subr.mxu0 0.0
    %1183 = vmatpush1.msra.mxu0 %v99
    %1184 = vmatprep.subr.mxu0 0.0
    %1185 = vmatpush1.msra.mxu0 0.0
    %1186 = vmatprep.subr.mxu0 0.0
    %1187 = vmatpush1.msra.mxu0 0.0
    %1188 = vmatprep.subr.mxu0 0.0
    %1189 = vmatpush1.msra.mxu0 0.0
    %1190 = vmatprep.subr.mxu0 0.0
    %1191 = vmatpush1.msra.mxu0 0.0
    %1192 = vmatprep.subr.mxu0 0.0
    %1193 = vmatpush1.msra.mxu0 0.0
    %1194 = vmatprep.subr.mxu0 0.0
    %1195 = vmatpush1.msra.mxu0 0.0
    %1196 = vmatprep.subr.mxu0 0.0
    %1197 = vmatpush1.msra.mxu0 0.0
    %1198 = vmatprep.subr.mxu0 0.0
    %1199 = vmatpush1.msra.mxu0 0.0
    %1200 = vmatprep.subr.mxu0 0.0
    %1201 = vmatpush1.msra.mxu0 0.0
    %1202 = vmatprep.subr.mxu0 0.0
    %1203 = vmatpush1.msra.mxu0 0.0
    %1204 = vmatprep.subr.mxu0 0.0
    %1205 = vmatpush1.msra.mxu0 0.0
    %1206 = vmatprep.subr.mxu0 0.0
    %1207 = vmatpush1.msra.mxu0 0.0
    %1208 = vmatprep.subr.mxu0 0.0
    %1209 = vmatpush1.msra.mxu0 0.0
    %1210 = vmatprep.subr.mxu0 0.0
    %1211 = vmatpush1.msra.mxu0 0.0
    %1212 = vmatprep.subr.mxu0 0.0
    %1213 = vmatpush1.msra.mxu0 0.0
    %1214 = vmatprep.subr.mxu0 0.0
    %1215 = vmatpush1.msra.mxu0 0.0
    %1216 = vmatprep.mubr.f32.mxu0 0.0
    %1217 = vmatmul.mubr.f32.gmra.mrb[0].mxu0 %v1147
    %v1218 = vpop.f32.mrb[0].mxu0
    %v1219 = vadd.f32 0.0, %v1218
    %v1220 = vpop.f32.mrb[0].mxu0
    %1221 = vdwg.mxu0
    %v1223 = vsel %vm173, %v1151, 0
    %1225 = vmatprep.subr.mxu0 0.0
    %1226 = vmatpush1.msra.mxu0 %v80
    %1227 = vmatprep.subr.mxu0 0.0
    %1228 = vmatpush1.msra.mxu0 %v81
    %1229 = vmatprep.subr.mxu0 0.0
    %1230 = vmatpush1.msra.mxu0 %v82
    %1231 = vmatprep.subr.mxu0 0.0
    %1232 = vmatpush1.msra.mxu0 %v83
    %1233 = vmatprep.subr.mxu0 0.0
    %1234 = vmatpush1.msra.mxu0 0.0
    %1235 = vmatprep.subr.mxu0 0.0
    %1236 = vmatpush1.msra.mxu0 0.0
    %1237 = vmatprep.subr.mxu0 0.0
    %1238 = vmatpush1.msra.mxu0 0.0
    %1239 = vmatprep.subr.mxu0 0.0
    %1240 = vmatpush1.msra.mxu0 0.0
    %1241 = vmatprep.subr.mxu0 0.0
    %1242 = vmatpush1.msra.mxu0 0.0
    %1243 = vmatprep.subr.mxu0 0.0
    %1244 = vmatpush1.msra.mxu0 0.0
    %1245 = vmatprep.subr.mxu0 0.0
    %1246 = vmatpush1.msra.mxu0 0.0
    %1247 = vmatprep.subr.mxu0 0.0
    %1248 = vmatpush1.msra.mxu0 0.0
    %1249 = vmatprep.subr.mxu0 0.0
    %1250 = vmatpush1.msra.mxu0 0.0
    %1251 = vmatprep.subr.mxu0 0.0
    %1252 = vmatpush1.msra.mxu0 0.0
    %1253 = vmatprep.subr.mxu0 0.0
    %1254 = vmatpush1.msra.mxu0 0.0
    %1255 = vmatprep.subr.mxu0 0.0
    %1256 = vmatpush1.msra.mxu0 0.0
    %1257 = vmatprep.subr.mxu0 0.0
    %1258 = vmatpush1.msra.mxu0 0.0
    %1259 = vmatprep.subr.mxu0 0.0
    %1260 = vmatpush1.msra.mxu0 0.0
    %1261 = vmatprep.subr.mxu0 0.0
    %1262 = vmatpush1.msra.mxu0 0.0
    %1263 = vmatprep.subr.mxu0 0.0
    %1264 = vmatpush1.msra.mxu0 0.0
    %1265 = vmatprep.subr.mxu0 0.0
    %1266 = vmatpush1.msra.mxu0 0.0
    %1267 = vmatprep.subr.mxu0 0.0
    %1268 = vmatpush1.msra.mxu0 0.0
    %1269 = vmatprep.subr.mxu0 0.0
    %1270 = vmatpush1.msra.mxu0 0.0
    %1271 = vmatprep.subr.mxu0 0.0
    %1272 = vmatpush1.msra.mxu0 0.0
    %1273 = vmatprep.subr.mxu0 0.0
    %1274 = vmatpush1.msra.mxu0 0.0
    %1275 = vmatprep.subr.mxu0 0.0
    %1276 = vmatpush1.msra.mxu0 0.0
    %1277 = vmatprep.subr.mxu0 0.0
    %1278 = vmatpush1.msra.mxu0 0.0
    %1279 = vmatprep.subr.mxu0 0.0
    %1280 = vmatpush1.msra.mxu0 0.0
    %1281 = vmatprep.subr.mxu0 0.0
    %1282 = vmatpush1.msra.mxu0 0.0
    %1283 = vmatprep.subr.mxu0 0.0
    %1284 = vmatpush1.msra.mxu0 0.0
    %1285 = vmatprep.subr.mxu0 0.0
    %1286 = vmatpush1.msra.mxu0 0.0
    %1287 = vmatprep.subr.mxu0 0.0
    %1288 = vmatpush1.msra.mxu0 0.0
    %1289 = vmatprep.mubr.f32.mxu0 0.0
    %1290 = vmatmul.mubr.f32.gmra.mrb[0].mxu0 %v1223
    %v1291 = vpop.f32.mrb[0].mxu0
    %v1292 = vadd.f32 %v1219, %v1291
    %v1293 = vpop.f32.mrb[0].mxu0
    %1294 = vdwg.mxu0
    %v1295 = vadd.f32 %v1292, %v251
    %v1296 = vtanh.pop %v1295
    %s1297 = scalar_lea.vmem [#allocation11], 56
    %1298 = vst [vmem:[%s1297] sm:$0xff] %v1296
    %1299 = vst [vmem:[#allocation2] sm:$0xff] %v1296
    // Predicated region
    $region42: #{_sernn_seq_impl.1} parent=1 // pred_check
      _
    $region43: #{_sernn_seq_impl.1} parent=1 // pred_check_branch
      %1301 = sbr.rel (0) target = $region45
    $region44: #{_sernn_seq_impl.1} parent=1 // pred_region
      %s1303 = ssub.s32 1024, 1024
      %1304 = vsyncadd [#allocation5], %s1303
      %s1305 = sshll.u32 [#allocation11], 4
      %s1306 = int_to_ptr.vmem [resolvable:$true] %s1305
      %1311 = dma.vmem_to_hbm [thread:$0]  %s1306, 1024, %s5, [#allocation5], 128, 128, 8
    $region45: #{_sernn_seq_impl.1} parent=1 // pred_fallthru
      _
    // Predicated region
    $region46: #{_sernn_seq_impl.1} parent=1 // pred_check
      _
    $region47: #{_sernn_seq_impl.1} parent=1 // pred_check_branch
      %1313 = sbr.rel (0) target = $region49
    $region48: #{_sernn_seq_impl.1} parent=1 // pred_region
      %1314 = dma.done [#allocation5], 1024
    $region49: #{_sernn_seq_impl.1} parent=1 // pred_fallthru
      _
    %1315 = vsyncpa [#allocation4], 1
    %1316 = vsyncpa [#allocation7], 1
    %1317 = vsyncpa [#allocation10], 1
    %1318 = vsyncpa [#allocation5], 1

// kernel: _sernn_seq_impl.1
$region0: #{_sernn_seq_impl.1}
  #allocation0 [shape = 'u32[]', space=smem, size = 0x4, offset = 0x4, fixed_abs, tag = 'smem constant byte address 0x4 - core index']
  #allocation1 [shape = 'u32[144,128]{1,0:T(1,128)}', space=vmem, size = 0x12000, scoped, tag = 'internal scratch']
  #allocation2 [shape = 'f32[8,128]{1,0:T(8,128)}', space=vmem, size = 0x1000, scoped, tag = 'scratch operand']
  %s0 = inlined_call_operand.hbm [shape: f32[8,8,32], index: 0, kind: input, shape index: {}]
  %s1 = inlined_call_operand.hbm [shape: f32[8,128], index: 1, kind: input, shape index: {}]
  %s2 = inlined_call_operand.hbm [shape: f32[32,128], index: 2, kind: input, shape index: {}]
  %s3 = inlined_call_operand.vmem [shape: f32[1,128], index: 3, kind: input, shape index: {}]
  %s4 = inlined_call_operand.hbm [shape: f32[128,128], index: 4, kind: input, shape index: {}]
  %s5 = inlined_call_operand.hbm [shape: f32[8,8,128], index: 5, kind: output, shape index: {}]
  %s6 = sld [smem:[#allocation0]]
  $region50: #{_sernn_seq_impl.1} parent=0
    _
  %s8 = ssub.s32 1, %s6
  %s9 = scalar_select 0, %s8, %s6
  $region1: #{_sernn_seq_impl.1} parent=0
    #allocation3 [shape = 'u8[32768]{0}', space=vmem, size = 0x8000, scoped, tag = 'input window, operand 0, single buffered']
    #allocation4 [shape = 's32[1]{0}', space=sflag, size = 0x4, scoped, tag = 'scoped memory for _sernn_seq_impl.1']
    #allocation5 [shape = 's32[1]{0}', space=sflag, size = 0x4, scoped, tag = 'scoped memory for _sernn_seq_impl.1']
    #allocation6 [shape = 'u8[4096]{0}', space=vmem, size = 0x1000, scoped, tag = 'input window, operand 1, single buffered']
    #allocation7 [shape = 's32[1]{0}', space=sflag, size = 0x4, scoped, tag = 'scoped memory for _sernn_seq_impl.1']
    #allocation8 [shape = 'u8[16384]{0}', space=vmem, size = 0x4000, scoped, tag = 'input window, operand 2, single buffered']
    #allocation9 [shape = 'u8[65536]{0}', space=vmem, size = 0x10000, scoped, tag = 'input window, operand 4, single buffered']
    #allocation10 [shape = 's32[1]{0}', space=sflag, size = 0x4, scoped, tag = 'scoped memory for _sernn_seq_impl.1']
    #allocation11 [shape = 'u8[32768]{0}', space=vmem, size = 0x8000, scoped, tag = 'output window, operand 0, single buffered']
    %10 = vsyncpa [#allocation4], 0
    %11 = vsyncpa [#allocation7], 0
    %12 = vsyncpa [#allocation10], 0
    %13 = vsyncpa [#allocation5], 0
    // Predicated region
    $region2: #{_sernn_seq_impl.1} parent=1 // pred_check
      _
    $region3: #{_sernn_seq_impl.1} parent=1 // pred_check_branch
      %15 = sbr.rel (0) target = $region5
    $region4: #{_sernn_seq_impl.1} parent=1 // pred_region
      %s17 = ssub.s32 1024, 1024
      %18 = vsyncadd [#allocation4], %s17
      %s19 = sshll.u32 [#allocation3], 4
      %s20 = int_to_ptr.vmem [resolvable:$true] %s19
      %25 = dma.hbm_to_vmem [thread:$0]  %s0, 1024, %s20, [#allocation4], 128, 128, 8
    $region5: #{_sernn_seq_impl.1} parent=1 // pred_fallthru
      _
    // Predicated region
    $region6: #{_sernn_seq_impl.1} parent=1 // pred_check
      _
    $region7: #{_sernn_seq_impl.1} parent=1 // pred_check_branch
      %27 = sbr.rel (0) target = $region9
    $region8: #{_sernn_seq_impl.1} parent=1 // pred_region
      %s29 = ssub.s32 128, 128
      %30 = vsyncadd [#allocation7], %s29
      %s32 = sshll.u32 [#allocation6], 4
      %s33 = int_to_ptr.vmem [resolvable:$true] %s32
      %35 = dma.hbm_to_vmem [thread:$0]  %s1, 128, %s33, [#allocation7]
    $region9: #{_sernn_seq_impl.1} parent=1 // pred_fallthru
      _
    // Predicated region
    $region10: #{_sernn_seq_impl.1} parent=1 // pred_check
      _
    $region11: #{_sernn_seq_impl.1} parent=1 // pred_check_branch
      %37 = sbr.rel (0) target = $region13
    $region12: #{_sernn_seq_impl.1} parent=1 // pred_region
      %s39 = ssub.s32 512, 512
      %40 = vsyncadd [#allocation7], %s39
      %s41 = sshll.u32 [#allocation8], 4
      %s42 = int_to_ptr.vmem [resolvable:$true] %s41
      %47 = dma.hbm_to_vmem [thread:$0]  %s2, 512, %s42, [#allocation7], 128, 128, 8
    $region13: #{_sernn_seq_impl.1} parent=1 // pred_fallthru
      _
    // Predicated region
    $region14: #{_sernn_seq_impl.1} parent=1 // pred_check
      _
    $region15: #{_sernn_seq_impl.1} parent=1 // pred_check_branch
      %49 = sbr.rel (0) target = $region17
    $region16: #{_sernn_seq_impl.1} parent=1 // pred_region
      _
    $region17: #{_sernn_seq_impl.1} parent=1 // pred_fallthru
      _
    // Predicated region
    $region18: #{_sernn_seq_impl.1} parent=1 // pred_check
      _
    $region19: #{_sernn_seq_impl.1} parent=1 // pred_check_branch
      %51 = sbr.rel (0) target = $region21
    $region20: #{_sernn_seq_impl.1} parent=1 // pred_region
      %s53 = ssub.s32 2048, 2048
      %54 = vsyncadd [#allocation10], %s53
      %s55 = sshll.u32 [#allocation9], 4
      %s56 = int_to_ptr.vmem [resolvable:$true] %s55
      %61 = dma.hbm_to_vmem [thread:$0]  %s4, 2048, %s56, [#allocation10], 128, 128, 8
    $region21: #{_sernn_seq_impl.1} parent=1 // pred_fallthru
      _
    // Predicated region
    $region22: #{_sernn_seq_impl.1} parent=1 // pred_check
      _
    $region23: #{_sernn_seq_impl.1} parent=1 // pred_check_branch
      %63 = sbr.rel (0) target = $region25
    $region24: #{_sernn_seq_impl.1} parent=1 // pred_region
      %64 = dma.done [#allocation4], 1024
    $region25: #{_sernn_seq_impl.1} parent=1 // pred_fallthru
      _
    // Predicated region
    $region26: #{_sernn_seq_impl.1} parent=1 // pred_check
      _
    $region27: #{_sernn_seq_impl.1} parent=1 // pred_check_branch
      %66 = sbr.rel (0) target = $region29
    $region28: #{_sernn_seq_impl.1} parent=1 // pred_region
      %67 = dma.done [#allocation7], 128
    $region29: #{_sernn_seq_impl.1} parent=1 // pred_fallthru
      _
    // Predicated region
    $region30: #{_sernn_seq_impl.1} parent=1 // pred_check
      _
    $region31: #{_sernn_seq_impl.1} parent=1 // pred_check_branch
      %69 = sbr.rel (0) target = $region33
    $region32: #{_sernn_seq_impl.1} parent=1 // pred_region
      %70 = dma.done [#allocation7], 512
    $region33: #{_sernn_seq_impl.1} parent=1 // pred_fallthru
      _
    // Predicated region
    $region34: #{_sernn_seq_impl.1} parent=1 // pred_check
      _
    $region35: #{_sernn_seq_impl.1} parent=1 // pred_check_branch
      %72 = sbr.rel (0) target = $region37
    $region36: #{_sernn_seq_impl.1} parent=1 // pred_region
      %73 = dma.done [#allocation10], 2048
    $region37: #{_sernn_seq_impl.1} parent=1 // pred_fallthru
      _
    %p74 = scmp.eq.s32.totalorder 0, 0
    // Predicated region
    $region38: #{_sernn_seq_impl.1} parent=1 // pred_check
      %p75 = pneg %p74
    $region39: #{_sernn_seq_impl.1} parent=1 // pred_check_branch
      %77 = sbr.rel (%p75) target = $region41
    $region40: #{_sernn_seq_impl.1} parent=1 // pred_region
      %v78 = vld [vmem:[#allocation6] sm:$0xff]
      %79 = vst [vmem:[#allocation2] sm:$0xff] %v78
    $region41: #{_sernn_seq_impl.1} parent=1 // pred_fallthru
      _
    %v80 = vld [vmem:[#allocation8] sm:$0xff]
    %v81 = vld [vmem:[#allocation8 + $0x8] sm:$0xff]
    %v82 = vld [vmem:[#allocation8 + $0x10] sm:$0xff]
    %v83 = vld [vmem:[#allocation8 + $0x18] sm:$0xff]
    %v84 = vld [vmem:[#allocation9] sm:$0xff]
    %v85 = vld [vmem:[#allocation9 + $0x8] sm:$0xff]
    %v86 = vld [vmem:[#allocation9 + $0x10] sm:$0xff]
    %v87 = vld [vmem:[#allocation9 + $0x18] sm:$0xff]
    %v88 = vld [vmem:[#allocation9 + $0x20] sm:$0xff]
    %v89 = vld [vmem:[#allocation9 + $0x28] sm:$0xff]
    %v90 = vld [vmem:[#allocation9 + $0x30] sm:$0xff]
    %v91 = vld [vmem:[#allocation9 + $0x38] sm:$0xff]
    %v92 = vld [vmem:[#allocation9 + $0x40] sm:$0xff]
    %v93 = vld [vmem:[#allocation9 + $0x48] sm:$0xff]
    %v94 = vld [vmem:[#allocation9 + $0x50] sm:$0xff]
    %v95 = vld [vmem:[#allocation9 + $0x58] sm:$0xff]
    %v96 = vld [vmem:[#allocation9 + $0x60] sm:$0xff]
    %v97 = vld [vmem:[#allocation9 + $0x68] sm:$0xff]
    %v98 = vld [vmem:[#allocation9 + $0x70] sm:$0xff]
    %v99 = vld [vmem:[#allocation9 + $0x78] sm:$0xff]
    %v100 = vld [vmem:[%s3] sm:$0x1]
    %v101 = vld [vmem:[#allocation2] sm:$0xff]
    %v102 = vld [vmem:[#allocation3] sm:$0xff]
    %103 = vmatprep.subr.mxu0 0.0
    %104 = vmatpush1.msra.mxu0 %v84
    %105 = vmatprep.subr.mxu0 0.0
    %106 = vmatpush1.msra.mxu0 %v85
    %107 = vmatprep.subr.mxu0 0.0
    %108 = vmatpush1.msra.mxu0 %v86
    %109 = vmatprep.subr.mxu0 0.0
    %110 = vmatpush1.msra.mxu0 %v87
    %111 = vmatprep.subr.mxu0 0.0
    %112 = vmatpush1.msra.mxu0 %v88
    %113 = vmatprep.subr.mxu0 0.0
    %114 = vmatpush1.msra.mxu0 %v89
    %115 = vmatprep.subr.mxu0 0.0
    %116 = vmatpush1.msra.mxu0 %v90
    %117 = vmatprep.subr.mxu0 0.0
    %118 = vmatpush1.msra.mxu0 %v91
    %119 = vmatprep.subr.mxu0 0.0
    %120 = vmatpush1.msra.mxu0 %v92
    %121 = vmatprep.subr.mxu0 0.0
    %122 = vmatpush1.msra.mxu0 %v93
    %123 = vmatprep.subr.mxu0 0.0
    %124 = vmatpush1.msra.mxu0 %v94
    %125 = vmatprep.subr.mxu0 0.0
    %126 = vmatpush1.msra.mxu0 %v95
    %127 = vmatprep.subr.mxu0 0.0
    %128 = vmatpush1.msra.mxu0 %v96
    %129 = vmatprep.subr.mxu0 0.0
    %130 = vmatpush1.msra.mxu0 %v97
    %131 = vmatprep.subr.mxu0 0.0
    %132 = vmatpush1.msra.mxu0 %v98
    %133 = vmatprep.subr.mxu0 0.0
    %134 = vmatpush1.msra.mxu0 %v99
    %135 = vmatprep.subr.mxu0 0.0
    %136 = vmatpush1.msra.mxu0 0.0
    %137 = vmatprep.subr.mxu0 0.0
    %138 = vmatpush1.msra.mxu0 0.0
    %139 = vmatprep.subr.mxu0 0.0
    %140 = vmatpush1.msra.mxu0 0.0
    %141 = vmatprep.subr.mxu0 0.0
    %142 = vmatpush1.msra.mxu0 0.0
    %143 = vmatprep.subr.mxu0 0.0
    %144 = vmatpush1.msra.mxu0 0.0
    %145 = vmatprep.subr.mxu0 0.0
    %146 = vmatpush1.msra.mxu0 0.0
    %147 = vmatprep.subr.mxu0 0.0
    %148 = vmatpush1.msra.mxu0 0.0
    %149 = vmatprep.subr.mxu0 0.0
    %150 = vmatpush1.msra.mxu0 0.0
    %151 = vmatprep.subr.mxu0 0.0
    %152 = vmatpush1.msra.mxu0 0.0
    %153 = vmatprep.subr.mxu0 0.0
    %154 = vmatpush1.msra.mxu0 0.0
    %155 = vmatprep.subr.mxu0 0.0
    %156 = vmatpush1.msra.mxu0 0.0
    %157 = vmatprep.subr.mxu0 0.0
    %158 = vmatpush1.msra.mxu0 0.0
    %159 = vmatprep.subr.mxu0 0.0
    %160 = vmatpush1.msra.mxu0 0.0
    %161 = vmatprep.subr.mxu0 0.0
    %162 = vmatpush1.msra.mxu0 0.0
    %163 = vmatprep.subr.mxu0 0.0
    %164 = vmatpush1.msra.mxu0 0.0
    %165 = vmatprep.subr.mxu0 0.0
    %166 = vmatpush1.msra.mxu0 0.0
    %167 = vmatprep.mubr.f32.mxu0 0.0
    %168 = vmatmul.mubr.f32.gmra.mrb[0].mxu0 %v101
    %v169 = vpop.f32.mrb[0].mxu0
    %v170 = vadd.f32 0.0, %v169
    %v171 = vpop.f32.mrb[0].mxu0
    %172 = vdwg.mxu0
    %vm173 = vcmask 261120
    %v175 = vsel %vm173, %v102, 0
    %177 = vmatprep.subr.mxu0 0.0
    %178 = vmatpush1.msra.mxu0 %v80
    %179 = vmatprep.subr.mxu0 0.0
    %180 = vmatpush1.msra.mxu0 %v81
    %181 = vmatprep.subr.mxu0 0.0
    %182 = vmatpush1.msra.mxu0 %v82
    %183 = vmatprep.subr.mxu0 0.0
    %184 = vmatpush1.msra.mxu0 %v83
    %185 = vmatprep.subr.mxu0 0.0
    %186 = vmatpush1.msra.mxu0 0.0
    %187 = vmatprep.subr.mxu0 0.0
    %188 = vmatpush1.msra.mxu0 0.0
    %189 = vmatprep.subr.mxu0 0.0
    %190 = vmatpush1.msra.mxu0 0.0
    %191 = vmatprep.subr.mxu0 0.0
    %192 = vmatpush1.msra.mxu0 0.0
    %193 = vmatprep.subr.mxu0 0.0
    %194 = vmatpush1.msra.mxu0 0.0
    %195 = vmatprep.subr.mxu0 0.0
    %196 = vmatpush1.msra.mxu0 0.0
    %197 = vmatprep.subr.mxu0 0.0
    %198 = vmatpush1.msra.mxu0 0.0
    %199 = vmatprep.subr.mxu0 0.0
    %200 = vmatpush1.msra.mxu0 0.0
    %201 = vmatprep.subr.mxu0 0.0
    %202 = vmatpush1.msra.mxu0 0.0
    %203 = vmatprep.subr.mxu0 0.0
    %204 = vmatpush1.msra.mxu0 0.0
    %205 = vmatprep.subr.mxu0 0.0
    %206 = vmatpush1.msra.mxu0 0.0
    %207 = vmatprep.subr.mxu0 0.0
    %208 = vmatpush1.msra.mxu0 0.0
    %209 = vmatprep.subr.mxu0 0.0
    %210 = vmatpush1.msra.mxu0 0.0
    %211 = vmatprep.subr.mxu0 0.0
    %212 = vmatpush1.msra.mxu0 0.0
    %213 = vmatprep.subr.mxu0 0.0
    %214 = vmatpush1.msra.mxu0 0.0
    %215 = vmatprep.subr.mxu0 0.0
    %216 = vmatpush1.msra.mxu0 0.0
    %217 = vmatprep.subr.mxu0 0.0
    %218 = vmatpush1.msra.mxu0 0.0
    %219 = vmatprep.subr.mxu0 0.0
    %220 = vmatpush1.msra.mxu0 0.0
    %221 = vmatprep.subr.mxu0 0.0
    %222 = vmatpush1.msra.mxu0 0.0
    %223 = vmatprep.subr.mxu0 0.0
    %224 = vmatpush1.msra.mxu0 0.0
    %225 = vmatprep.subr.mxu0 0.0
    %226 = vmatpush1.msra.mxu0 0.0
    %227 = vmatprep.subr.mxu0 0.0
    %228 = vmatpush1.msra.mxu0 0.0
    %229 = vmatprep.subr.mxu0 0.0
    %230 = vmatpush1.msra.mxu0 0.0
    %231 = vmatprep.subr.mxu0 0.0
    %232 = vmatpush1.msra.mxu0 0.0
    %233 = vmatprep.subr.mxu0 0.0
    %234 = vmatpush1.msra.mxu0 0.0
    %235 = vmatprep.subr.mxu0 0.0
    %236 = vmatpush1.msra.mxu0 0.0
    %237 = vmatprep.subr.mxu0 0.0
    %238 = vmatpush1.msra.mxu0 0.0
    %239 = vmatprep.subr.mxu0 0.0
    %240 = vmatpush1.msra.mxu0 0.0
    %241 = vmatprep.mubr.f32.mxu0 0.0
    %242 = vmatmul.mubr.f32.gmra.mrb[0].mxu0 %v175
    %v243 = vpop.f32.mrb[0].mxu0
    %v244 = vadd.f32 %v170, %v243
    %v245 = vpop.f32.mrb[0].mxu0
    %246 = vdwg.mxu0
    %v248 = vlaneseq
    %v249 = vshrl.u32 %v248, 7
    %v250 = vsub.s32 0, %v249
    %v251 = vrot.slane %v100, %v250
    %v253 = vadd.f32 %v244, %v251
    %v254 = vtanh.pop %v253
    %255 = vst [vmem:[#allocation11] sm:$0xff] %v254
    %s256 = scalar_lea.vmem [#allocation3], 8
    %v257 = vld [vmem:[%s256] sm:$0xff]
    %258 = vmatprep.subr.mxu0 0.0
    %259 = vmatpush1.msra.mxu0 %v84
    %260 = vmatprep.subr.mxu0 0.0
    %261 = vmatpush1.msra.mxu0 %v85
    %262 = vmatprep.subr.mxu0 0.0
    %263 = vmatpush1.msra.mxu0 %v86
    %264 = vmatprep.subr.mxu0 0.0
    %265 = vmatpush1.msra.mxu0 %v87
    %266 = vmatprep.subr.mxu0 0.0
    %267 = vmatpush1.msra.mxu0 %v88
    %268 = vmatprep.subr.mxu0 0.0
    %269 = vmatpush1.msra.mxu0 %v89
    %270 = vmatprep.subr.mxu0 0.0
    %271 = vmatpush1.msra.mxu0 %v90
    %272 = vmatprep.subr.mxu0 0.0
    %273 = vmatpush1.msra.mxu0 %v91
    %274 = vmatprep.subr.mxu0 0.0
    %275 = vmatpush1.msra.mxu0 %v92
    %276 = vmatprep.subr.mxu0 0.0
    %277 = vmatpush1.msra.mxu0 %v93
    %278 = vmatprep.subr.mxu0 0.0
    %279 = vmatpush1.msra.mxu0 %v94
    %280 = vmatprep.subr.mxu0 0.0
    %281 = vmatpush1.msra.mxu0 %v95
    %282 = vmatprep.subr.mxu0 0.0
    %283 = vmatpush1.msra.mxu0 %v96
    %284 = vmatprep.subr.mxu0 0.0
    %285 = vmatpush1.msra.mxu0 %v97
    %286 = vmatprep.subr.mxu0 0.0
    %287 = vmatpush1.msra.mxu0 %v98
    %288 = vmatprep.subr.mxu0 0.0
    %289 = vmatpush1.msra.mxu0 %v99
    %290 = vmatprep.subr.mxu0 0.0
    %291 = vmatpush1.msra.mxu0 0.0
    %292 = vmatprep.subr.mxu0 0.0
    %293 = vmatpush1.msra.mxu0 0.0
    %294 = vmatprep.subr.mxu0 0.0
    %295 = vmatpush1.msra.mxu0 0.0
    %296 = vmatprep.subr.mxu0 0.0
    %297 = vmatpush1.msra.mxu0 0.0
    %298 = vmatprep.subr.mxu0 0.0
    %299 = vmatpush1.msra.mxu0 0.0
    %300 = vmatprep.subr.mxu0 0.0
    %301 = vmatpush1.msra.mxu0 0.0
    %302 = vmatprep.subr.mxu0 0.0
    %303 = vmatpush1.msra.mxu0 0.0
    %304 = vmatprep.subr.mxu0 0.0
    %305 = vmatpush1.msra.mxu0 0.0
    %306 = vmatprep.subr.mxu0 0.0
    %307 = vmatpush1.msra.mxu0 0.0
    %308 = vmatprep.subr.mxu0 0.0
    %309 = vmatpush1.msra.mxu0 0.0
    %310 = vmatprep.subr.mxu0 0.0
    %311 = vmatpush1.msra.mxu0 0.0
    %312 = vmatprep.subr.mxu0 0.0
    %313 = vmatpush1.msra.mxu0 0.0
    %314 = vmatprep.subr.mxu0 0.0
    %315 = vmatpush1.msra.mxu0 0.0
    %316 = vmatprep.subr.mxu0 0.0
    %317 = vmatpush1.msra.mxu0 0.0
    %318 = vmatprep.subr.mxu0 0.0
    %319 = vmatpush1.msra.mxu0 0.0
    %320 = vmatprep.subr.mxu0 0.0
    %321 = vmatpush1.msra.mxu0 0.0
    %322 = vmatprep.mubr.f32.mxu0 0.0
    %323 = vmatmul.mubr.f32.gmra.mrb[0].mxu0 %v254
    %v324 = vpop.f32.mrb[0].mxu0
    %v325 = vadd.f32 0.0, %v324
    %v326 = vpop.f32.mrb[0].mxu0
    %327 = vdwg.mxu0
    %v329 = vsel %vm173, %v257, 0
    %331 = vmatprep.subr.mxu0 0.0
    %332 = vmatpush1.msra.mxu0 %v80
    %333 = vmatprep.subr.mxu0 0.0
    %334 = vmatpush1.msra.mxu0 %v81
    %335 = vmatprep.subr.mxu0 0.0
    %336 = vmatpush1.msra.mxu0 %v82
    %337 = vmatprep.subr.mxu0 0.0
    %338 = vmatpush1.msra.mxu0 %v83
    %339 = vmatprep.subr.mxu0 0.0
    %340 = vmatpush1.msra.mxu0 0.0
    %341 = vmatprep.subr.mxu0 0.0
    %342 = vmatpush1.msra.mxu0 0.0
    %343 = vmatprep.subr.mxu0 0.0
    %344 = vmatpush1.msra.mxu0 0.0
    %345 = vmatprep.subr.mxu0 0.0
    %346 = vmatpush1.msra.mxu0 0.0
    %347 = vmatprep.subr.mxu0 0.0
    %348 = vmatpush1.msra.mxu0 0.0
    %349 = vmatprep.subr.mxu0 0.0
    %350 = vmatpush1.msra.mxu0 0.0
    %351 = vmatprep.subr.mxu0 0.0
    %352 = vmatpush1.msra.mxu0 0.0
    %353 = vmatprep.subr.mxu0 0.0
    %354 = vmatpush1.msra.mxu0 0.0
    %355 = vmatprep.subr.mxu0 0.0
    %356 = vmatpush1.msra.mxu0 0.0
    %357 = vmatprep.subr.mxu0 0.0
    %358 = vmatpush1.msra.mxu0 0.0
    %359 = vmatprep.subr.mxu0 0.0
    %360 = vmatpush1.msra.mxu0 0.0
    %361 = vmatprep.subr.mxu0 0.0
    %362 = vmatpush1.msra.mxu0 0.0
    %363 = vmatprep.subr.mxu0 0.0
    %364 = vmatpush1.msra.mxu0 0.0
    %365 = vmatprep.subr.mxu0 0.0
    %366 = vmatpush1.msra.mxu0 0.0
    %367 = vmatprep.subr.mxu0 0.0
    %368 = vmatpush1.msra.mxu0 0.0
    %369 = vmatprep.subr.mxu0 0.0
    %370 = vmatpush1.msra.mxu0 0.0
    %371 = vmatprep.subr.mxu0 0.0
    %372 = vmatpush1.msra.mxu0 0.0
    %373 = vmatprep.subr.mxu0 0.0
    %374 = vmatpush1.msra.mxu0 0.0
    %375 = vmatprep.subr.mxu0 0.0
    %376 = vmatpush1.msra.mxu0 0.0
    %377 = vmatprep.subr.mxu0 0.0
    %378 = vmatpush1.msra.mxu0 0.0
    %379 = vmatprep.subr.mxu0 0.0
    %380 = vmatpush1.msra.mxu0 0.0
    %381 = vmatprep.subr.mxu0 0.0
    %382 = vmatpush1.msra.mxu0 0.0
    %383 = vmatprep.subr.mxu0 0.0
    %384 = vmatpush1.msra.mxu0 0.0
    %385 = vmatprep.subr.mxu0 0.0
    %386 = vmatpush1.msra.mxu0 0.0
    %387 = vmatprep.subr.mxu0 0.0
    %388 = vmatpush1.msra.mxu0 0.0
    %389 = vmatprep.subr.mxu0 0.0
    %390 = vmatpush1.msra.mxu0 0.0
    %391 = vmatprep.subr.mxu0 0.0
    %392 = vmatpush1.msra.mxu0 0.0
    %393 = vmatprep.subr.mxu0 0.0
    %394 = vmatpush1.msra.mxu0 0.0
    %395 = vmatprep.mubr.f32.mxu0 0.0
    %396 = vmatmul.mubr.f32.gmra.mrb[0].mxu0 %v329
    %v397 = vpop.f32.mrb[0].mxu0
    %v398 = vadd.f32 %v325, %v397
    %v399 = vpop.f32.mrb[0].mxu0
    %400 = vdwg.mxu0
    %v401 = vadd.f32 %v398, %v251
    %v402 = vtanh.pop %v401
    %s403 = scalar_lea.vmem [#allocation11], 8
    %404 = vst [vmem:[%s403] sm:$0xff] %v402
    %s405 = scalar_lea.vmem [#allocation3], 16
    %v406 = vld [vmem:[%s405] sm:$0xff]
    %407 = vmatprep.subr.mxu0 0.0
    %408 = vmatpush1.msra.mxu0 %v84
    %409 = vmatprep.subr.mxu0 0.0
    %410 = vmatpush1.msra.mxu0 %v85
    %411 = vmatprep.subr.mxu0 0.0
    %412 = vmatpush1.msra.mxu0 %v86
    %413 = vmatprep.subr.mxu0 0.0
    %414 = vmatpush1.msra.mxu0 %v87
    %415 = vmatprep.subr.mxu0 0.0
    %416 = vmatpush1.msra.mxu0 %v88
    %417 = vmatprep.subr.mxu0 0.0
    %418 = vmatpush1.msra.mxu0 %v89
    %419 = vmatprep.subr.mxu0 0.0
    %420 = vmatpush1.msra.mxu0 %v90
    %421 = vmatprep.subr.mxu0 0.0
    %422 = vmatpush1.msra.mxu0 %v91
    %423 = vmatprep.subr.mxu0 0.0
    %424 = vmatpush1.msra.mxu0 %v92
    %425 = vmatprep.subr.mxu0 0.0
    %426 = vmatpush1.msra.mxu0 %v93
    %427 = vmatprep.subr.mxu0 0.0
    %428 = vmatpush1.msra.mxu0 %v94
    %429 = vmatprep.subr.mxu0 0.0
    %430 = vmatpush1.msra.mxu0 %v95
    %431 = vmatprep.subr.mxu0 0.0
    %432 = vmatpush1.msra.mxu0 %v96
    %433 = vmatprep.subr.mxu0 0.0
    %434 = vmatpush1.msra.mxu0 %v97
    %435 = vmatprep.subr.mxu0 0.0
    %436 = vmatpush1.msra.mxu0 %v98
    %437 = vmatprep.subr.mxu0 0.0
    %438 = vmatpush1.msra.mxu0 %v99
    %439 = vmatprep.subr.mxu0 0.0
    %440 = vmatpush1.msra.mxu0 0.0
    %441 = vmatprep.subr.mxu0 0.0
    %442 = vmatpush1.msra.mxu0 0.0
    %443 = vmatprep.subr.mxu0 0.0
    %444 = vmatpush1.msra.mxu0 0.0
    %445 = vmatprep.subr.mxu0 0.0
    %446 = vmatpush1.msra.mxu0 0.0
    %447 = vmatprep.subr.mxu0 0.0
    %448 = vmatpush1.msra.mxu0 0.0
    %449 = vmatprep.subr.mxu0 0.0
    %450 = vmatpush1.msra.mxu0 0.0
    %451 = vmatprep.subr.mxu0 0.0
    %452 = vmatpush1.msra.mxu0 0.0
    %453 = vmatprep.subr.mxu0 0.0
    %454 = vmatpush1.msra.mxu0 0.0
    %455 = vmatprep.subr.mxu0 0.0
    %456 = vmatpush1.msra.mxu0 0.0
    %457 = vmatprep.subr.mxu0 0.0
    %458 = vmatpush1.msra.mxu0 0.0
    %459 = vmatprep.subr.mxu0 0.0
    %460 = vmatpush1.msra.mxu0 0.0
    %461 = vmatprep.subr.mxu0 0.0
    %462 = vmatpush1.msra.mxu0 0.0
    %463 = vmatprep.subr.mxu0 0.0
    %464 = vmatpush1.msra.mxu0 0.0
    %465 = vmatprep.subr.mxu0 0.0
    %466 = vmatpush1.msra.mxu0 0.0
    %467 = vmatprep.subr.mxu0 0.0
    %468 = vmatpush1.msra.mxu0 0.0
    %469 = vmatprep.subr.mxu0 0.0
    %470 = vmatpush1.msra.mxu0 0.0
    %471 = vmatprep.mubr.f32.mxu0 0.0
    %472 = vmatmul.mubr.f32.gmra.mrb[0].mxu0 %v402
    %v473 = vpop.f32.mrb[0].mxu0
    %v474 = vadd.f32 0.0, %v473
    %v475 = vpop.f32.mrb[0].mxu0
    %476 = vdwg.mxu0
    %v478 = vsel %vm173, %v406, 0
    %480 = vmatprep.subr.mxu0 0.0
    %481 = vmatpush1.msra.mxu0 %v80
    %482 = vmatprep.subr.mxu0 0.0
    %483 = vmatpush1.msra.mxu0 %v81
    %484 = vmatprep.subr.mxu0 0.0
    %485 = vmatpush1.msra.mxu0 %v82
    %486 = vmatprep.subr.mxu0 0.0
    %487 = vmatpush1.msra.mxu0 %v83
    %488 = vmatprep.subr.mxu0 0.0
    %489 = vmatpush1.msra.mxu0 0.0
    %490 = vmatprep.subr.mxu0 0.0
    %491 = vmatpush1.msra.mxu0 0.0
    %492 = vmatprep.subr.mxu0 0.0
    %493 = vmatpush1.msra.mxu0 0.0
    %494 = vmatprep.subr.mxu0 0.0
    %495 = vmatpush1.msra.mxu0 0.0
    %496 = vmatprep.subr.mxu0 0.0
    %497 = vmatpush1.msra.mxu0 0.0
    %498 = vmatprep.subr.mxu0 0.0
    %499 = vmatpush1.msra.mxu0 0.0
    %500 = vmatprep.subr.mxu0 0.0
    %501 = vmatpush1.msra.mxu0 0.0
    %502 = vmatprep.subr.mxu0 0.0
    %503 = vmatpush1.msra.mxu0 0.0
    %504 = vmatprep.subr.mxu0 0.0
    %505 = vmatpush1.msra.mxu0 0.0
    %506 = vmatprep.subr.mxu0 0.0
    %507 = vmatpush1.msra.mxu0 0.0
    %508 = vmatprep.subr.mxu0 0.0
    %509 = vmatpush1.msra.mxu0 0.0
    %510 = vmatprep.subr.mxu0 0.0
    %511 = vmatpush1.msra.mxu0 0.0
    %512 = vmatprep.subr.mxu0 0.0
    %513 = vmatpush1.msra.mxu0 0.0
    %514 = vmatprep.subr.mxu0 0.0
    %515 = vmatpush1.msra.mxu0 0.0
    %516 = vmatprep.subr.mxu0 0.0
    %517 = vmatpush1.msra.mxu0 0.0
    %518 = vmatprep.subr.mxu0 0.0
    %519 = vmatpush1.msra.mxu0 0.0
    %520 = vmatprep.subr.mxu0 0.0
    %521 = vmatpush1.msra.mxu0 0.0
    %522 = vmatprep.subr.mxu0 0.0
    %523 = vmatpush1.msra.mxu0 0.0
    %524 = vmatprep.subr.mxu0 0.0
    %525 = vmatpush1.msra.mxu0 0.0
    %526 = vmatprep.subr.mxu0 0.0
    %527 = vmatpush1.msra.mxu0 0.0
    %528 = vmatprep.subr.mxu0 0.0
    %529 = vmatpush1.msra.mxu0 0.0
    %530 = vmatprep.subr.mxu0 0.0
    %531 = vmatpush1.msra.mxu0 0.0
    %532 = vmatprep.subr.mxu0 0.0
    %533 = vmatpush1.msra.mxu0 0.0
    %534 = vmatprep.subr.mxu0 0.0
    %535 = vmatpush1.msra.mxu0 0.0
    %536 = vmatprep.subr.mxu0 0.0
    %537 = vmatpush1.msra.mxu0 0.0
    %538 = vmatprep.subr.mxu0 0.0
    %539 = vmatpush1.msra.mxu0 0.0
    %540 = vmatprep.subr.mxu0 0.0
    %541 = vmatpush1.msra.mxu0 0.0
    %542 = vmatprep.subr.mxu0 0.0
    %543 = vmatpush1.msra.mxu0 0.0
    %544 = vmatprep.mubr.f32.mxu0 0.0
    %545 = vmatmul.mubr.f32.gmra.mrb[0].mxu0 %v478
    %v546 = vpop.f32.mrb[0].mxu0
    %v547 = vadd.f32 %v474, %v546
    %v548 = vpop.f32.mrb[0].mxu0
    %549 = vdwg.mxu0
    %v550 = vadd.f32 %v547, %v251
    %v551 = vtanh.pop %v550
    %s552 = scalar_lea.vmem [#allocation11], 16
    %553 = vst [vmem:[%s552] sm:$0xff] %v551
    %s554 = scalar_lea.vmem [#allocation3], 24
    %v555 = vld [vmem:[%s554] sm:$0xff]
    %556 = vmatprep.subr.mxu0 0.0
    %557 = vmatpush1.msra.mxu0 %v84
    %558 = vmatprep.subr.mxu0 0.0
    %559 = vmatpush1.msra.mxu0 %v85
    %560 = vmatprep.subr.mxu0 0.0
    %561 = vmatpush1.msra.mxu0 %v86
    %562 = vmatprep.subr.mxu0 0.0
    %563 = vmatpush1.msra.mxu0 %v87
    %564 = vmatprep.subr.mxu0 0.0
    %565 = vmatpush1.msra.mxu0 %v88
    %566 = vmatprep.subr.mxu0 0.0
    %567 = vmatpush1.msra.mxu0 %v89
    %568 = vmatprep.subr.mxu0 0.0
    %569 = vmatpush1.msra.mxu0 %v90
    %570 = vmatprep.subr.mxu0 0.0
    %571 = vmatpush1.msra.mxu0 %v91
    %572 = vmatprep.subr.mxu0 0.0
    %573 = vmatpush1.msra.mxu0 %v92
    %574 = vmatprep.subr.mxu0 0.0
    %575 = vmatpush1.msra.mxu0 %v93
    %576 = vmatprep.subr.mxu0 0.0
    %577 = vmatpush1.msra.mxu0 %v94
    %578 = vmatprep.subr.mxu0 0.0
    %579 = vmatpush1.msra.mxu0 %v95
    %580 = vmatprep.subr.mxu0 0.0
    %581 = vmatpush1.msra.mxu0 %v96
    %582 = vmatprep.subr.mxu0 0.0
    %583 = vmatpush1.msra.mxu0 %v97
    %584 = vmatprep.subr.mxu0 0.0
    %585 = vmatpush1.msra.mxu0 %v98
    %586 = vmatprep.subr.mxu0 0.0
    %587 = vmatpush1.msra.mxu0 %v99
    %588 = vmatprep.subr.mxu0 0.0
    %589 = vmatpush1.msra.mxu0 0.0
    %590 = vmatprep.subr.mxu0 0.0
    %591 = vmatpush1.msra.mxu0 0.0
    %592 = vmatprep.subr.mxu0 0.0
    %593 = vmatpush1.msra.mxu0 0.0
    %594 = vmatprep.subr.mxu0 0.0
    %595 = vmatpush1.msra.mxu0 0.0
    %596 = vmatprep.subr.mxu0 0.0
    %597 = vmatpush1.msra.mxu0 0.0
    %598 = vmatprep.subr.mxu0 0.0
    %599 = vmatpush1.msra.mxu0 0.0
    %600 = vmatprep.subr.mxu0 0.0
    %601 = vmatpush1.msra.mxu0 0.0
    %602 = vmatprep.subr.mxu0 0.0
    %603 = vmatpush1.msra.mxu0 0.0
    %604 = vmatprep.subr.mxu0 0.0
    %605 = vmatpush1.msra.mxu0 0.0
    %606 = vmatprep.subr.mxu0 0.0
    %607 = vmatpush1.msra.mxu0 0.0
    %608 = vmatprep.subr.mxu0 0.0
    %609 = vmatpush1.msra.mxu0 0.0
    %610 = vmatprep.subr.mxu0 0.0
    %611 = vmatpush1.msra.mxu0 0.0
    %612 = vmatprep.subr.mxu0 0.0
    %613 = vmatpush1.msra.mxu0 0.0
    %614 = vmatprep.subr.mxu0 0.0
    %615 = vmatpush1.msra.mxu0 0.0
    %616 = vmatprep.subr.mxu0 0.0
    %617 = vmatpush1.msra.mxu0 0.0
    %618 = vmatprep.subr.mxu0 0.0
    %619 = vmatpush1.msra.mxu0 0.0
    %620 = vmatprep.mubr.f32.mxu0 0.0
    %621 = vmatmul.mubr.f32.gmra.mrb[0].mxu0 %v551
    %v622 = vpop.f32.mrb[0].mxu0
    %v623 = vadd.f32 0.0, %v622
    %v624 = vpop.f32.mrb[0].mxu0
    %625 = vdwg.mxu0
    %v627 = vsel %vm173, %v555, 0
    %629 = vmatprep.subr.mxu0 0.0
    %630 = vmatpush1.msra.mxu0 %v80
    %631 = vmatprep.subr.mxu0 0.0
    %632 = vmatpush1.msra.mxu0 %v81
    %633 = vmatprep.subr.mxu0 0.0
    %634 = vmatpush1.msra.mxu0 %v82
    %635 = vmatprep.subr.mxu0 0.0
    %636 = vmatpush1.msra.mxu0 %v83
    %637 = vmatprep.subr.mxu0 0.0
    %638 = vmatpush1.msra.mxu0 0.0
    %639 = vmatprep.subr.mxu0 0.0
    %640 = vmatpush1.msra.mxu0 0.0
    %641 = vmatprep.subr.mxu0 0.0
    %642 = vmatpush1.msra.mxu0 0.0
    %643 = vmatprep.subr.mxu0 0.0
    %644 = vmatpush1.msra.mxu0 0.0
    %645 = vmatprep.subr.mxu0 0.0
    %646 = vmatpush1.msra.mxu0 0.0
    %647 = vmatprep.subr.mxu0 0.0
    %648 = vmatpush1.msra.mxu0 0.0
    %649 = vmatprep.subr.mxu0 0.0
    %650 = vmatpush1.msra.mxu0 0.0
    %651 = vmatprep.subr.mxu0 0.0
    %652 = vmatpush1.msra.mxu0 0.0
    %653 = vmatprep.subr.mxu0 0.0
    %654 = vmatpush1.msra.mxu0 0.0
    %655 = vmatprep.subr.mxu0 0.0
    %656 = vmatpush1.msra.mxu0 0.0
    %657 = vmatprep.subr.mxu0 0.0
    %658 = vmatpush1.msra.mxu0 0.0
    %659 = vmatprep.subr.mxu0 0.0
    %660 = vmatpush1.msra.mxu0 0.0
    %661 = vmatprep.subr.mxu0 0.0
    %662 = vmatpush1.msra.mxu0 0.0
    %663 = vmatprep.subr.mxu0 0.0
    %664 = vmatpush1.msra.mxu0 0.0
    %665 = vmatprep.subr.mxu0 0.0
    %666 = vmatpush1.msra.mxu0 0.0
    %667 = vmatprep.subr.mxu0 0.0
    %668 = vmatpush1.msra.mxu0 0.0
    %669 = vmatprep.subr.mxu0 0.0
    %670 = vmatpush1.msra.mxu0 0.0
    %671 = vmatprep.subr.mxu0 0.0
    %672 = vmatpush1.msra.mxu0 0.0
    %673 = vmatprep.subr.mxu0 0.0
    %674 = vmatpush1.msra.mxu0 0.0
    %675 = vmatprep.subr.mxu0 0.0
    %676 = vmatpush1.msra.mxu0 0.0
    %677 = vmatprep.subr.mxu0 0.0
    %678 = vmatpush1.msra.mxu0 0.0
    %679 = vmatprep.subr.mxu0 0.0
    %680 = vmatpush1.msra.mxu0 0.0
    %681 = vmatprep.subr.mxu0 0.0
    %682 = vmatpush1.msra.mxu0 0.0
    %683 = vmatprep.subr.mxu0 0.0
    %684 = vmatpush1.msra.mxu0 0.0
    %685 = vmatprep.subr.mxu0 0.0
    %686 = vmatpush1.msra.mxu0 0.0
    %687 = vmatprep.subr.mxu0 0.0
    %688 = vmatpush1.msra.mxu0 0.0
    %689 = vmatprep.subr.mxu0 0.0
    %690 = vmatpush1.msra.mxu0 0.0
    %691 = vmatprep.subr.mxu0 0.0
    %692 = vmatpush1.msra.mxu0 0.0
    %693 = vmatprep.mubr.f32.mxu0 0.0
    %694 = vmatmul.mubr.f32.gmra.mrb[0].mxu0 %v627
    %v695 = vpop.f32.mrb[0].mxu0
    %v696 = vadd.f32 %v623, %v695
    %v697 = vpop.f32.mrb[0].mxu0
    %698 = vdwg.mxu0
    %v699 = vadd.f32 %v696, %v251
    %v700 = vtanh.pop %v699
    %s701 = scalar_lea.vmem [#allocation11], 24
    %702 = vst [vmem:[%s701] sm:$0xff] %v700
    %s703 = scalar_lea.vmem [#allocation3], 32
    %v704 = vld [vmem:[%s703] sm:$0xff]
    %705 = vmatprep.subr.mxu0 0.0
    %706 = vmatpush1.msra.mxu0 %v84
    %707 = vmatprep.subr.mxu0 0.0
    %708 = vmatpush1.msra.mxu0 %v85
    %709 = vmatprep.subr.mxu0 0.0
    %710 = vmatpush1.msra.mxu0 %v86
    %711 = vmatprep.subr.mxu0 0.0
    %712 = vmatpush1.msra.mxu0 %v87
    %713 = vmatprep.subr.mxu0 0.0
    %714 = vmatpush1.msra.mxu0 %v88
    %715 = vmatprep.subr.mxu0 0.0
    %716 = vmatpush1.msra.mxu0 %v89
    %717 = vmatprep.subr.mxu0 0.0
    %718 = vmatpush1.msra.mxu0 %v90
    %719 = vmatprep.subr.mxu0 0.0
    %720 = vmatpush1.msra.mxu0 %v91
    %721 = vmatprep.subr.mxu0 0.0
    %722 = vmatpush1.msra.mxu0 %v92
    %723 = vmatprep.subr.mxu0 0.0
    %724 = vmatpush1.msra.mxu0 %v93
    %725 = vmatprep.subr.mxu0 0.0
    %726 = vmatpush1.msra.mxu0 %v94
    %727 = vmatprep.subr.mxu0 0.0
    %728 = vmatpush1.msra.mxu0 %v95
    %729 = vmatprep.subr.mxu0 0.0
    %730 = vmatpush1.msra.mxu0 %v96
    %731 = vmatprep.subr.mxu0 0.0
    %732 = vmatpush1.msra.mxu0 %v97
    %733 = vmatprep.subr.mxu0 0.0
    %734 = vmatpush1.msra.mxu0 %v98
    %735 = vmatprep.subr.mxu0 0.0
    %736 = vmatpush1.msra.mxu0 %v99
    %737 = vmatprep.subr.mxu0 0.0
    %738 = vmatpush1.msra.mxu0 0.0
    %739 = vmatprep.subr.mxu0 0.0
    %740 = vmatpush1.msra.mxu0 0.0
    %741 = vmatprep.subr.mxu0 0.0
    %742 = vmatpush1.msra.mxu0 0.0
    %743 = vmatprep.subr.mxu0 0.0
    %744 = vmatpush1.msra.mxu0 0.0
    %745 = vmatprep.subr.mxu0 0.0
    %746 = vmatpush1.msra.mxu0 0.0
    %747 = vmatprep.subr.mxu0 0.0
    %748 = vmatpush1.msra.mxu0 0.0
    %749 = vmatprep.subr.mxu0 0.0
    %750 = vmatpush1.msra.mxu0 0.0
    %751 = vmatprep.subr.mxu0 0.0
    %752 = vmatpush1.msra.mxu0 0.0
    %753 = vmatprep.subr.mxu0 0.0
    %754 = vmatpush1.msra.mxu0 0.0
    %755 = vmatprep.subr.mxu0 0.0
    %756 = vmatpush1.msra.mxu0 0.0
    %757 = vmatprep.subr.mxu0 0.0
    %758 = vmatpush1.msra.mxu0 0.0
    %759 = vmatprep.subr.mxu0 0.0
    %760 = vmatpush1.msra.mxu0 0.0
    %761 = vmatprep.subr.mxu0 0.0
    %762 = vmatpush1.msra.mxu0 0.0
    %763 = vmatprep.subr.mxu0 0.0
    %764 = vmatpush1.msra.mxu0 0.0
    %765 = vmatprep.subr.mxu0 0.0
    %766 = vmatpush1.msra.mxu0 0.0
    %767 = vmatprep.subr.mxu0 0.0
    %768 = vmatpush1.msra.mxu0 0.0
    %769 = vmatprep.mubr.f32.mxu0 0.0
    %770 = vmatmul.mubr.f32.gmra.mrb[0].mxu0 %v700
    %v771 = vpop.f32.mrb[0].mxu0
    %v772 = vadd.f32 0.0, %v771
    %v773 = vpop.f32.mrb[0].mxu0
    %774 = vdwg.mxu0
    %v776 = vsel %vm173, %v704, 0
    %778 = vmatprep.subr.mxu0 0.0
    %779 = vmatpush1.msra.mxu0 %v80
    %780 = vmatprep.subr.mxu0 0.0
    %781 = vmatpush1.msra.mxu0 %v81
    %782 = vmatprep.subr.mxu0 0.0
    %783 = vmatpush1.msra.mxu0 %v82
    %784 = vmatprep.subr.mxu0 0.0
    %785 = vmatpush1.msra.mxu0 %v83
    %786 = vmatprep.subr.mxu0 0.0
    %787 = vmatpush1.msra.mxu0 0.0
    %788 = vmatprep.subr.mxu0 0.0
    %789 = vmatpush1.msra.mxu0 0.0
    %790 = vmatprep.subr.mxu0 0.0
    %791 = vmatpush1.msra.mxu0 0.0
    %792 = vmatprep.subr.mxu0 0.0
    %793 = vmatpush1.msra.mxu0 0.0
    %794 = vmatprep.subr.mxu0 0.0
    %795 = vmatpush1.msra.mxu0 0.0
    %796 = vmatprep.subr.mxu0 0.0
    %797 = vmatpush1.msra.mxu0 0.0
    %798 = vmatprep.subr.mxu0 0.0
    %799 = vmatpush1.msra.mxu0 0.0
    %800 = vmatprep.subr.mxu0 0.0
    %801 = vmatpush1.msra.mxu0 0.0
    %802 = vmatprep.subr.mxu0 0.0
    %803 = vmatpush1.msra.mxu0 0.0
    %804 = vmatprep.subr.mxu0 0.0
    %805 = vmatpush1.msra.mxu0 0.0
    %806 = vmatprep.subr.mxu0 0.0
    %807 = vmatpush1.msra.mxu0 0.0
    %808 = vmatprep.subr.mxu0 0.0
    %809 = vmatpush1.msra.mxu0 0.0
    %810 = vmatprep.subr.mxu0 0.0
    %811 = vmatpush1.msra.mxu0 0.0
    %812 = vmatprep.subr.mxu0 0.0
    %813 = vmatpush1.msra.mxu0 0.0
    %814 = vmatprep.subr.mxu0 0.0
    %815 = vmatpush1.msra.mxu0 0.0
    %816 = vmatprep.subr.mxu0 0.0
    %817 = vmatpush1.msra.mxu0 0.0
    %818 = vmatprep.subr.mxu0 0.0
    %819 = vmatpush1.msra.mxu0 0.0
    %820 = vmatprep.subr.mxu0 0.0
    %821 = vmatpush1.msra.mxu0 0.0
    %822 = vmatprep.subr.mxu0 0.0
    %823 = vmatpush1.msra.mxu0 0.0
    %824 = vmatprep.subr.mxu0 0.0
    %825 = vmatpush1.msra.mxu0 0.0
    %826 = vmatprep.subr.mxu0 0.0
    %827 = vmatpush1.msra.mxu0 0.0
    %828 = vmatprep.subr.mxu0 0.0
    %829 = vmatpush1.msra.mxu0 0.0
    %830 = vmatprep.subr.mxu0 0.0
    %831 = vmatpush1.msra.mxu0 0.0
    %832 = vmatprep.subr.mxu0 0.0
    %833 = vmatpush1.msra.mxu0 0.0
    %834 = vmatprep.subr.mxu0 0.0
    %835 = vmatpush1.msra.mxu0 0.0
    %836 = vmatprep.subr.mxu0 0.0
    %837 = vmatpush1.msra.mxu0 0.0
    %838 = vmatprep.subr.mxu0 0.0
    %839 = vmatpush1.msra.mxu0 0.0
    %840 = vmatprep.subr.mxu0 0.0
    %841 = vmatpush1.msra.mxu0 0.0
    %842 = vmatprep.mubr.f32.mxu0 0.0
    %843 = vmatmul.mubr.f32.gmra.mrb[0].mxu0 %v776
    %v844 = vpop.f32.mrb[0].mxu0
    %v845 = vadd.f32 %v772, %v844
    %v846 = vpop.f32.mrb[0].mxu0
    %847 = vdwg.mxu0
    %v848 = vadd.f32 %v845, %v251
    %v849 = vtanh.pop %v848
    %s850 = scalar_lea.vmem [#allocation11], 32
    %851 = vst [vmem:[%s850] sm:$0xff] %v849
    %s852 = scalar_lea.vmem [#allocation3], 40
    %v853 = vld [vmem:[%s852] sm:$0xff]
    %854 = vmatprep.subr.mxu0 0.0
    %855 = vmatpush1.msra.mxu0 %v84
    %856 = vmatprep.subr.mxu0 0.0
    %857 = vmatpush1.msra.mxu0 %v85
    %858 = vmatprep.subr.mxu0 0.0
    %859 = vmatpush1.msra.mxu0 %v86
    %860 = vmatprep.subr.mxu0 0.0
    %861 = vmatpush1.msra.mxu0 %v87
    %862 = vmatprep.subr.mxu0 0.0
    %863 = vmatpush1.msra.mxu0 %v88
    %864 = vmatprep.subr.mxu0 0.0
    %865 = vmatpush1.msra.mxu0 %v89
    %866 = vmatprep.subr.mxu0 0.0
    %867 = vmatpush1.msra.mxu0 %v90
    %868 = vmatprep.subr.mxu0 0.0
    %869 = vmatpush1.msra.mxu0 %v91
    %870 = vmatprep.subr.mxu0 0.0
    %871 = vmatpush1.msra.mxu0 %v92
    %872 = vmatprep.subr.mxu0 0.0
    %873 = vmatpush1.msra.mxu0 %v93
    %874 = vmatprep.subr.mxu0 0.0
    %875 = vmatpush1.msra.mxu0 %v94
    %876 = vmatprep.subr.mxu0 0.0
    %877 = vmatpush1.msra.mxu0 %v95
    %878 = vmatprep.subr.mxu0 0.0
    %879 = vmatpush1.msra.mxu0 %v96
    %880 = vmatprep.subr.mxu0 0.0
    %881 = vmatpush1.msra.mxu0 %v97
    %882 = vmatprep.subr.mxu0 0.0
    %883 = vmatpush1.msra.mxu0 %v98
    %884 = vmatprep.subr.mxu0 0.0
    %885 = vmatpush1.msra.mxu0 %v99
    %886 = vmatprep.subr.mxu0 0.0
    %887 = vmatpush1.msra.mxu0 0.0
    %888 = vmatprep.subr.mxu0 0.0
    %889 = vmatpush1.msra.mxu0 0.0
    %890 = vmatprep.subr.mxu0 0.0
    %891 = vmatpush1.msra.mxu0 0.0
    %892 = vmatprep.subr.mxu0 0.0
    %893 = vmatpush1.msra.mxu0 0.0
    %894 = vmatprep.subr.mxu0 0.0
    %895 = vmatpush1.msra.mxu0 0.0
    %896 = vmatprep.subr.mxu0 0.0
    %897 = vmatpush1.msra.mxu0 0.0
    %898 = vmatprep.subr.mxu0 0.0
    %899 = vmatpush1.msra.mxu0 0.0
    %900 = vmatprep.subr.mxu0 0.0
    %901 = vmatpush1.msra.mxu0 0.0
    %902 = vmatprep.subr.mxu0 0.0
    %903 = vmatpush1.msra.mxu0 0.0
    %904 = vmatprep.subr.mxu0 0.0
    %905 = vmatpush1.msra.mxu0 0.0
    %906 = vmatprep.subr.mxu0 0.0
    %907 = vmatpush1.msra.mxu0 0.0
    %908 = vmatprep.subr.mxu0 0.0
    %909 = vmatpush1.msra.mxu0 0.0
    %910 = vmatprep.subr.mxu0 0.0
    %911 = vmatpush1.msra.mxu0 0.0
    %912 = vmatprep.subr.mxu0 0.0
    %913 = vmatpush1.msra.mxu0 0.0
    %914 = vmatprep.subr.mxu0 0.0
    %915 = vmatpush1.msra.mxu0 0.0
    %916 = vmatprep.subr.mxu0 0.0
    %917 = vmatpush1.msra.mxu0 0.0
    %918 = vmatprep.mubr.f32.mxu0 0.0
    %919 = vmatmul.mubr.f32.gmra.mrb[0].mxu0 %v849
    %v920 = vpop.f32.mrb[0].mxu0
    %v921 = vadd.f32 0.0, %v920
    %v922 = vpop.f32.mrb[0].mxu0
    %923 = vdwg.mxu0
    %v925 = vsel %vm173, %v853, 0
    %927 = vmatprep.subr.mxu0 0.0
    %928 = vmatpush1.msra.mxu0 %v80
    %929 = vmatprep.subr.mxu0 0.0
    %930 = vmatpush1.msra.mxu0 %v81
    %931 = vmatprep.subr.mxu0 0.0
    %932 = vmatpush1.msra.mxu0 %v82
    %933 = vmatprep.subr.mxu0 0.0
    %934 = vmatpush1.msra.mxu0 %v83
    %935 = vmatprep.subr.mxu0 0.0
    %936 = vmatpush1.msra.mxu0 0.0
    %937 = vmatprep.subr.mxu0 0.0
    %938 = vmatpush1.msra.mxu0 0.0
    %939 = vmatprep.subr.mxu0 0.0
    %940 = vmatpush1.msra.mxu0 0.0
    %941 = vmatprep.subr.mxu0 0.0
    %942 = vmatpush1.msra.mxu0 0.0
    %943 = vmatprep.subr.mxu0 0.0
    %944 = vmatpush1.msra.mxu0 0.0
    %945 = vmatprep.subr.mxu0 0.0
    %946 = vmatpush1.msra.mxu0 0.0
    %947 = vmatprep.subr.mxu0 0.0
    %948 = vmatpush1.msra.mxu0 0.0
    %949 = vmatprep.subr.mxu0 0.0
    %950 = vmatpush1.msra.mxu0 0.0
    %951 = vmatprep.subr.mxu0 0.0
    %952 = vmatpush1.msra.mxu0 0.0
    %953 = vmatprep.subr.mxu0 0.0
    %954 = vmatpush1.msra.mxu0 0.0
    %955 = vmatprep.subr.mxu0 0.0
    %956 = vmatpush1.msra.mxu0 0.0
    %957 = vmatprep.subr.mxu0 0.0
    %958 = vmatpush1.msra.mxu0 0.0
    %959 = vmatprep.subr.mxu0 0.0
    %960 = vmatpush1.msra.mxu0 0.0
    %961 = vmatprep.subr.mxu0 0.0
    %962 = vmatpush1.msra.mxu0 0.0
    %963 = vmatprep.subr.mxu0 0.0
    %964 = vmatpush1.msra.mxu0 0.0
    %965 = vmatprep.subr.mxu0 0.0
    %966 = vmatpush1.msra.mxu0 0.0
    %967 = vmatprep.subr.mxu0 0.0
    %968 = vmatpush1.msra.mxu0 0.0
    %969 = vmatprep.subr.mxu0 0.0
    %970 = vmatpush1.msra.mxu0 0.0
    %971 = vmatprep.subr.mxu0 0.0
    %972 = vmatpush1.msra.mxu0 0.0
    %973 = vmatprep.subr.mxu0 0.0
    %974 = vmatpush1.msra.mxu0 0.0
    %975 = vmatprep.subr.mxu0 0.0
    %976 = vmatpush1.msra.mxu0 0.0
    %977 = vmatprep.subr.mxu0 0.0
    %978 = vmatpush1.msra.mxu0 0.0
    %979 = vmatprep.subr.mxu0 0.0
    %980 = vmatpush1.msra.mxu0 0.0
    %981 = vmatprep.subr.mxu0 0.0
    %982 = vmatpush1.msra.mxu0 0.0
    %983 = vmatprep.subr.mxu0 0.0
    %984 = vmatpush1.msra.mxu0 0.0
    %985 = vmatprep.subr.mxu0 0.0
    %986 = vmatpush1.msra.mxu0 0.0
    %987 = vmatprep.subr.mxu0 0.0
    %988 = vmatpush1.msra.mxu0 0.0
    %989 = vmatprep.subr.mxu0 0.0
    %990 = vmatpush1.msra.mxu0 0.0
    %991 = vmatprep.mubr.f32.mxu0 0.0
    %992 = vmatmul.mubr.f32.gmra.mrb[0].mxu0 %v925
    %v993 = vpop.f32.mrb[0].mxu0
    %v994 = vadd.f32 %v921, %v993
    %v995 = vpop.f32.mrb[0].mxu0
    %996 = vdwg.mxu0
    %v997 = vadd.f32 %v994, %v251
    %v998 = vtanh.pop %v997
    %s999 = scalar_lea.vmem [#allocation11], 40
    %1000 = vst [vmem:[%s999] sm:$0xff] %v998
    %s1001 = scalar_lea.vmem [#allocation3], 48
    %v1002 = vld [vmem:[%s1001] sm:$0xff]
    %1003 = vmatprep.subr.mxu0 0.0
    %1004 = vmatpush1.msra.mxu0 %v84
    %1005 = vmatprep.subr.mxu0 0.0
    %1006 = vmatpush1.msra.mxu0 %v85
    %1007 = vmatprep.subr.mxu0 0.0
    %1008 = vmatpush1.msra.mxu0 %v86
    %1009 = vmatprep.subr.mxu0 0.0
    %1010 = vmatpush1.msra.mxu0 %v87
    %1011 = vmatprep.subr.mxu0 0.0
    %1012 = vmatpush1.msra.mxu0 %v88
    %1013 = vmatprep.subr.mxu0 0.0
    %1014 = vmatpush1.msra.mxu0 %v89
    %1015 = vmatprep.subr.mxu0 0.0
    %1016 = vmatpush1.msra.mxu0 %v90
    %1017 = vmatprep.subr.mxu0 0.0
    %1018 = vmatpush1.msra.mxu0 %v91
    %1019 = vmatprep.subr.mxu0 0.0
    %1020 = vmatpush1.msra.mxu0 %v92
    %1021 = vmatprep.subr.mxu0 0.0
    %1022 = vmatpush1.msra.mxu0 %v93
    %1023 = vmatprep.subr.mxu0 0.0
    %1024 = vmatpush1.msra.mxu0 %v94
    %1025 = vmatprep.subr.mxu0 0.0
    %1026 = vmatpush1.msra.mxu0 %v95
    %1027 = vmatprep.subr.mxu0 0.0
    %1028 = vmatpush1.msra.mxu0 %v96
    %1029 = vmatprep.subr.mxu0 0.0
    %1030 = vmatpush1.msra.mxu0 %v97
    %1031 = vmatprep.subr.mxu0 0.0
    %1032 = vmatpush1.msra.mxu0 %v98
    %1033 = vmatprep.subr.mxu0 0.0
    %1034 = vmatpush1.msra.mxu0 %v99
    %1035 = vmatprep.subr.mxu0 0.0
    %1036 = vmatpush1.msra.mxu0 0.0
    %1037 = vmatprep.subr.mxu0 0.0
    %1038 = vmatpush1.msra.mxu0 0.0
    %1039 = vmatprep.subr.mxu0 0.0
    %1040 = vmatpush1.msra.mxu0 0.0
    %1041 = vmatprep.subr.mxu0 0.0
    %1042 = vmatpush1.msra.mxu0 0.0
    %1043 = vmatprep.subr.mxu0 0.0
    %1044 = vmatpush1.msra.mxu0 0.0
    %1045 = vmatprep.subr.mxu0 0.0
    %1046 = vmatpush1.msra.mxu0 0.0
    %1047 = vmatprep.subr.mxu0 0.0
    %1048 = vmatpush1.msra.mxu0 0.0
    %1049 = vmatprep.subr.mxu0 0.0
    %1050 = vmatpush1.msra.mxu0 0.0
    %1051 = vmatprep.subr.mxu0 0.0
    %1052 = vmatpush1.msra.mxu0 0.0
    %1053 = vmatprep.subr.mxu0 0.0
    %1054 = vmatpush1.msra.mxu0 0.0
    %1055 = vmatprep.subr.mxu0 0.0
    %1056 = vmatpush1.msra.mxu0 0.0
    %1057 = vmatprep.subr.mxu0 0.0
    %1058 = vmatpush1.msra.mxu0 0.0
    %1059 = vmatprep.subr.mxu0 0.0
    %1060 = vmatpush1.msra.mxu0 0.0
    %1061 = vmatprep.subr.mxu0 0.0
    %1062 = vmatpush1.msra.mxu0 0.0
    %1063 = vmatprep.subr.mxu0 0.0
    %1064 = vmatpush1.msra.mxu0 0.0
    %1065 = vmatprep.subr.mxu0 0.0
    %1066 = vmatpush1.msra.mxu0 0.0
    %1067 = vmatprep.mubr.f32.mxu0 0.0
    %1068 = vmatmul.mubr.f32.gmra.mrb[0].mxu0 %v998
    %v1069 = vpop.f32.mrb[0].mxu0
    %v1070 = vadd.f32 0.0, %v1069
    %v1071 = vpop.f32.mrb[0].mxu0
    %1072 = vdwg.mxu0
    %v1074 = vsel %vm173, %v1002, 0
    %1076 = vmatprep.subr.mxu0 0.0
    %1077 = vmatpush1.msra.mxu0 %v80
    %1078 = vmatprep.subr.mxu0 0.0
    %1079 = vmatpush1.msra.mxu0 %v81
    %1080 = vmatprep.subr.mxu0 0.0
    %1081 = vmatpush1.msra.mxu0 %v82
    %1082 = vmatprep.subr.mxu0 0.0
    %1083 = vmatpush1.msra.mxu0 %v83
    %1084 = vmatprep.subr.mxu0 0.0
    %1085 = vmatpush1.msra.mxu0 0.0
    %1086 = vmatprep.subr.mxu0 0.0
    %1087 = vmatpush1.msra.mxu0 0.0
    %1088 = vmatprep.subr.mxu0 0.0
    %1089 = vmatpush1.msra.mxu0 0.0
    %1090 = vmatprep.subr.mxu0 0.0
    %1091 = vmatpush1.msra.mxu0 0.0
    %1092 = vmatprep.subr.mxu0 0.0
    %1093 = vmatpush1.msra.mxu0 0.0
    %1094 = vmatprep.subr.mxu0 0.0
    %1095 = vmatpush1.msra.mxu0 0.0
    %1096 = vmatprep.subr.mxu0 0.0
    %1097 = vmatpush1.msra.mxu0 0.0
    %1098 = vmatprep.subr.mxu0 0.0
    %1099 = vmatpush1.msra.mxu0 0.0
    %1100 = vmatprep.subr.mxu0 0.0
    %1101 = vmatpush1.msra.mxu0 0.0
    %1102 = vmatprep.subr.mxu0 0.0
    %1103 = vmatpush1.msra.mxu0 0.0
    %1104 = vmatprep.subr.mxu0 0.0
    %1105 = vmatpush1.msra.mxu0 0.0
    %1106 = vmatprep.subr.mxu0 0.0
    %1107 = vmatpush1.msra.mxu0 0.0
    %1108 = vmatprep.subr.mxu0 0.0
    %1109 = vmatpush1.msra.mxu0 0.0
    %1110 = vmatprep.subr.mxu0 0.0
    %1111 = vmatpush1.msra.mxu0 0.0
    %1112 = vmatprep.subr.mxu0 0.0
    %1113 = vmatpush1.msra.mxu0 0.0
    %1114 = vmatprep.subr.mxu0 0.0
    %1115 = vmatpush1.msra.mxu0 0.0
    %1116 = vmatprep.subr.mxu0 0.0
    %1117 = vmatpush1.msra.mxu0 0.0
    %1118 = vmatprep.subr.mxu0 0.0
    %1119 = vmatpush1.msra.mxu0 0.0
    %1120 = vmatprep.subr.mxu0 0.0
    %1121 = vmatpush1.msra.mxu0 0.0
    %1122 = vmatprep.subr.mxu0 0.0
    %1123 = vmatpush1.msra.mxu0 0.0
    %1124 = vmatprep.subr.mxu0 0.0
    %1125 = vmatpush1.msra.mxu0 0.0
    %1126 = vmatprep.subr.mxu0 0.0
    %1127 = vmatpush1.msra.mxu0 0.0
    %1128 = vmatprep.subr.mxu0 0.0
    %1129 = vmatpush1.msra.mxu0 0.0
    %1130 = vmatprep.subr.mxu0 0.0
    %1131 = vmatpush1.msra.mxu0 0.0
    %1132 = vmatprep.subr.mxu0 0.0
    %1133 = vmatpush1.msra.mxu0 0.0
    %1134 = vmatprep.subr.mxu0 0.0
    %1135 = vmatpush1.msra.mxu0 0.0
    %1136 = vmatprep.subr.mxu0 0.0
    %1137 = vmatpush1.msra.mxu0 0.0
    %1138 = vmatprep.subr.mxu0 0.0
    %1139 = vmatpush1.msra.mxu0 0.0
    %1140 = vmatprep.mubr.f32.mxu0 0.0
    %1141 = vmatmul.mubr.f32.gmra.mrb[0].mxu0 %v1074
    %v1142 = vpop.f32.mrb[0].mxu0
    %v1143 = vadd.f32 %v1070, %v1142
    %v1144 = vpop.f32.mrb[0].mxu0
    %1145 = vdwg.mxu0
    %v1146 = vadd.f32 %v1143, %v251
    %v1147 = vtanh.pop %v1146
    %s1148 = scalar_lea.vmem [#allocation11], 48
    %1149 = vst [vmem:[%s1148] sm:$0xff] %v1147
    %s1150 = scalar_lea.vmem [#allocation3], 56
    %v1151 = vld [vmem:[%s1150] sm:$0xff]
    %1152 = vmatprep.subr.mxu0 0.0
    %1153 = vmatpush1.msra.mxu0 %v84
    %1154 = vmatprep.subr.mxu0 0.0
    %1155 = vmatpush1.msra.mxu0 %v85
    %1156 = vmatprep.subr.mxu0 0.0
    %1157 = vmatpush1.msra.mxu0 %v86
    %1158 = vmatprep.subr.mxu0 0.0
    %1159 = vmatpush1.msra.mxu0 %v87
    %1160 = vmatprep.subr.mxu0 0.0
    %1161 = vmatpush1.msra.mxu0 %v88
    %1162 = vmatprep.subr.mxu0 0.0
    %1163 = vmatpush1.msra.mxu0 %v89
    %1164 = vmatprep.subr.mxu0 0.0
    %1165 = vmatpush1.msra.mxu0 %v90
    %1166 = vmatprep.subr.mxu0 0.0
    %1167 = vmatpush1.msra.mxu0 %v91
    %1168 = vmatprep.subr.mxu0 0.0
    %1169 = vmatpush1.msra.mxu0 %v92
    %1170 = vmatprep.subr.mxu0 0.0
    %1171 = vmatpush1.msra.mxu0 %v93
    %1172 = vmatprep.subr.mxu0 0.0
    %1173 = vmatpush1.msra.mxu0 %v94
    %1174 = vmatprep.subr.mxu0 0.0
    %1175 = vmatpush1.msra.mxu0 %v95
    %1176 = vmatprep.subr.mxu0 0.0
    %1177 = vmatpush1.msra.mxu0 %v96
    %1178 = vmatprep.subr.mxu0 0.0
    %1179 = vmatpush1.msra.mxu0 %v97
    %1180 = vmatprep.subr.mxu0 0.0
    %1181 = vmatpush1.msra.mxu0 %v98
    %1182 = vmatprep.subr.mxu0 0.0
    %1183 = vmatpush1.msra.mxu0 %v99
    %1184 = vmatprep.subr.mxu0 0.0
    %1185 = vmatpush1.msra.mxu0 0.0
    %1186 = vmatprep.subr.mxu0 0.0
    %1187 = vmatpush1.msra.mxu0 0.0
    %1188 = vmatprep.subr.mxu0 0.0
    %1189 = vmatpush1.msra.mxu0 0.0
    %1190 = vmatprep.subr.mxu0 0.0
    %1191 = vmatpush1.msra.mxu0 0.0
    %1192 = vmatprep.subr.mxu0 0.0
    %1193 = vmatpush1.msra.mxu0 0.0
    %1194 = vmatprep.subr.mxu0 0.0
    %1195 = vmatpush1.msra.mxu0 0.0
    %1196 = vmatprep.subr.mxu0 0.0
    %1197 = vmatpush1.msra.mxu0 0.0
    %1198 = vmatprep.subr.mxu0 0.0
    %1199 = vmatpush1.msra.mxu0 0.0
    %1200 = vmatprep.subr.mxu0 0.0
    %1201 = vmatpush1.msra.mxu0 0.0
    %1202 = vmatprep.subr.mxu0 0.0
    %1203 = vmatpush1.msra.mxu0 0.0
    %1204 = vmatprep.subr.mxu0 0.0
    %1205 = vmatpush1.msra.mxu0 0.0
    %1206 = vmatprep.subr.mxu0 0.0
    %1207 = vmatpush1.msra.mxu0 0.0
    %1208 = vmatprep.subr.mxu0 0.0
    %1209 = vmatpush1.msra.mxu0 0.0
    %1210 = vmatprep.subr.mxu0 0.0
    %1211 = vmatpush1.msra.mxu0 0.0
    %1212 = vmatprep.subr.mxu0 0.0
    %1213 = vmatpush1.msra.mxu0 0.0
    %1214 = vmatprep.subr.mxu0 0.0
    %1215 = vmatpush1.msra.mxu0 0.0
    %1216 = vmatprep.mubr.f32.mxu0 0.0
    %1217 = vmatmul.mubr.f32.gmra.mrb[0].mxu0 %v1147
    %v1218 = vpop.f32.mrb[0].mxu0
    %v1219 = vadd.f32 0.0, %v1218
    %v1220 = vpop.f32.mrb[0].mxu0
    %1221 = vdwg.mxu0
    %v1223 = vsel %vm173, %v1151, 0
    %1225 = vmatprep.subr.mxu0 0.0
    %1226 = vmatpush1.msra.mxu0 %v80
    %1227 = vmatprep.subr.mxu0 0.0
    %1228 = vmatpush1.msra.mxu0 %v81
    %1229 = vmatprep.subr.mxu0 0.0
    %1230 = vmatpush1.msra.mxu0 %v82
    %1231 = vmatprep.subr.mxu0 0.0
    %1232 = vmatpush1.msra.mxu0 %v83
    %1233 = vmatprep.subr.mxu0 0.0
    %1234 = vmatpush1.msra.mxu0 0.0
    %1235 = vmatprep.subr.mxu0 0.0
    %1236 = vmatpush1.msra.mxu0 0.0
    %1237 = vmatprep.subr.mxu0 0.0
    %1238 = vmatpush1.msra.mxu0 0.0
    %1239 = vmatprep.subr.mxu0 0.0
    %1240 = vmatpush1.msra.mxu0 0.0
    %1241 = vmatprep.subr.mxu0 0.0
    %1242 = vmatpush1.msra.mxu0 0.0
    %1243 = vmatprep.subr.mxu0 0.0
    %1244 = vmatpush1.msra.mxu0 0.0
    %1245 = vmatprep.subr.mxu0 0.0
    %1246 = vmatpush1.msra.mxu0 0.0
    %1247 = vmatprep.subr.mxu0 0.0
    %1248 = vmatpush1.msra.mxu0 0.0
    %1249 = vmatprep.subr.mxu0 0.0
    %1250 = vmatpush1.msra.mxu0 0.0
    %1251 = vmatprep.subr.mxu0 0.0
    %1252 = vmatpush1.msra.mxu0 0.0
    %1253 = vmatprep.subr.mxu0 0.0
    %1254 = vmatpush1.msra.mxu0 0.0
    %1255 = vmatprep.subr.mxu0 0.0
    %1256 = vmatpush1.msra.mxu0 0.0
    %1257 = vmatprep.subr.mxu0 0.0
    %1258 = vmatpush1.msra.mxu0 0.0
    %1259 = vmatprep.subr.mxu0 0.0
    %1260 = vmatpush1.msra.mxu0 0.0
    %1261 = vmatprep.subr.mxu0 0.0
    %1262 = vmatpush1.msra.mxu0 0.0
    %1263 = vmatprep.subr.mxu0 0.0
    %1264 = vmatpush1.msra.mxu0 0.0
    %1265 = vmatprep.subr.mxu0 0.0
    %1266 = vmatpush1.msra.mxu0 0.0
    %1267 = vmatprep.subr.mxu0 0.0
    %1268 = vmatpush1.msra.mxu0 0.0
    %1269 = vmatprep.subr.mxu0 0.0
    %1270 = vmatpush1.msra.mxu0 0.0
    %1271 = vmatprep.subr.mxu0 0.0
    %1272 = vmatpush1.msra.mxu0 0.0
    %1273 = vmatprep.subr.mxu0 0.0
    %1274 = vmatpush1.msra.mxu0 0.0
    %1275 = vmatprep.subr.mxu0 0.0
    %1276 = vmatpush1.msra.mxu0 0.0
    %1277 = vmatprep.subr.mxu0 0.0
    %1278 = vmatpush1.msra.mxu0 0.0
    %1279 = vmatprep.subr.mxu0 0.0
    %1280 = vmatpush1.msra.mxu0 0.0
    %1281 = vmatprep.subr.mxu0 0.0
    %1282 = vmatpush1.msra.mxu0 0.0
    %1283 = vmatprep.subr.mxu0 0.0
    %1284 = vmatpush1.msra.mxu0 0.0
    %1285 = vmatprep.subr.mxu0 0.0
    %1286 = vmatpush1.msra.mxu0 0.0
    %1287 = vmatprep.subr.mxu0 0.0
    %1288 = vmatpush1.msra.mxu0 0.0
    %1289 = vmatprep.mubr.f32.mxu0 0.0
    %1290 = vmatmul.mubr.f32.gmra.mrb[0].mxu0 %v1223
    %v1291 = vpop.f32.mrb[0].mxu0
    %v1292 = vadd.f32 %v1219, %v1291
    %v1293 = vpop.f32.mrb[0].mxu0
    %1294 = vdwg.mxu0
    %v1295 = vadd.f32 %v1292, %v251
    %v1296 = vtanh.pop %v1295
    %s1297 = scalar_lea.vmem [#allocation11], 56
    %1298 = vst [vmem:[%s1297] sm:$0xff] %v1296
    %1299 = vst [vmem:[#allocation2] sm:$0xff] %v1296
    // Predicated region
    $region42: #{_sernn_seq_impl.1} parent=1 // pred_check
      _
    $region43: #{_sernn_seq_impl.1} parent=1 // pred_check_branch
      %1301 = sbr.rel (0) target = $region45
    $region44: #{_sernn_seq_impl.1} parent=1 // pred_region
      %s1303 = ssub.s32 1024, 1024
      %1304 = vsyncadd [#allocation5], %s1303
      %s1305 = sshll.u32 [#allocation11], 4
      %s1306 = int_to_ptr.vmem [resolvable:$true] %s1305
      %1311 = dma.vmem_to_hbm [thread:$0]  %s1306, 1024, %s5, [#allocation5], 128, 128, 8
    $region45: #{_sernn_seq_impl.1} parent=1 // pred_fallthru
      _
    // Predicated region
    $region46: #{_sernn_seq_impl.1} parent=1 // pred_check
      _
    $region47: #{_sernn_seq_impl.1} parent=1 // pred_check_branch
      %1313 = sbr.rel (0) target = $region49
    $region48: #{_sernn_seq_impl.1} parent=1 // pred_region
      %1314 = dma.done [#allocation5], 1024
    $region49: #{_sernn_seq_impl.1} parent=1 // pred_fallthru
      _
    %1315 = vsyncpa [#allocation4], 1
    %1316 = vsyncpa [#allocation7], 1
    %1317 = vsyncpa [#allocation10], 1
    %1318 = vsyncpa [#allocation5], 1

</llo_original>
